<compile_context>
chip_gen: v5e
topology: v5e:2x2
jax: 0.10.0
libtpu: 0.0.40
codegen_flags: <defaults>
</compile_context>

<pallas_src>
import functools

import jax
import jax.numpy as jnp
import numpy as np
from jax import lax
from jax.experimental import pallas as pl
from jax.experimental.pallas import tpu as pltpu

N_NODES = 16
NODE_FEATURES = 4
HIDDEN = 32
K = 4                                  # Chebyshev filter order: GConvLSTM(F, H, 4)
KF1 = K * NODE_FEATURES + 1            # 16 basis features + ones column (bias fold)
GATE_LANES = 4 * HIDDEN                # 128 lanes, gate order [i | f | c | o]
TILE_ROWS = 512                        # multiple of 128 (v5e) and 256 (v6e/v7x)


# --------------------------------------------------------------------------------------
# Kernel
# --------------------------------------------------------------------------------------
def fused_cell_kernel(txo_ref, w_ref, c_ref, out_ref):
    """One MXU pass for all gate pre-activations + gate math + fused Linear(hidden, 1).

    txo_ref : (TILE_ROWS, KF1)  [Chebyshev basis of X | ones] for a tile of node-rows
    w_ref   : (KF1, 128)        packed ChebConv-on-X weights + folded bias row
    c_ref   : (1, 128)          [w_co (32) | lin_w (32) | lin_b (1) | zero pad]
    out_ref : (1, TILE_ROWS)    per-row prediction, rows mapped to lanes (lane-dense)
    """
    # Fused gate matmul; bias comes in through the ones column of txo / last row of w.
    z = jnp.dot(txo_ref[...], w_ref[...],
                preferred_element_type=jnp.float32)          # (TILE_ROWS, 128)

    # Static gate slices (gate order i, f, c, o); the forget gate is mathematically dead
    # because C0 == 0, so its slab is never read.
    zi = z[:, 0 * HIDDEN:1 * HIDDEN]
    zc = z[:, 2 * HIDDEN:3 * HIDDEN]
    zo = z[:, 3 * HIDDEN:4 * HIDDEN]

    wco = c_ref[:, 0 * HIDDEN:1 * HIDDEN]                    # (1, 32)
    lw = c_ref[:, 1 * HIDDEN:2 * HIDDEN]                     # (1, 32)
    lb = c_ref[:, 2 * HIDDEN:2 * HIDDEN + 1]                 # (1, 1)

    i_gate = jax.nn.sigmoid(zi)
    t_cand = jnp.tanh(zc)
    c_new = i_gate * t_cand                                  # C = F*C0 + I*T, C0 == 0
    o_gate = jax.nn.sigmoid(zo + wco * c_new)                # peephole w_co * C
    h_new = o_gate * jnp.tanh(c_new)                         # (TILE_ROWS, 32)

    # nn.Dropout(0.25): identity in inference mode.
    # TODO(synk): training-mode dropout RNG (pltpu.prng_seed/prng_random_bits) not implemented.

    # Linear(hidden, 1) as a contraction over H that also maps rows -> lanes, producing an
    # unmasked, lane-dense (1, TILE_ROWS) store (q@k^T-style dot_general on the MXU).
    out_ref[...] = jnp.einsum("gh,rh->gr", lw, h_new,
                              preferred_element_type=jnp.float32) + lb


# --------------------------------------------------------------------------------------
# One-time (cacheable) graph / model preparation — hoisted out of the hot path.
# --------------------------------------------------------------------------------------
def build_scaled_laplacian(edge_index, edge_weight, n):
    """Dense L_hat = 2/lambda_max * (I - D^-1/2 A D^-1/2) - I = -D^-1/2 A D^-1/2
    (sym normalization, lambda_max = 2.0 — the GConvLSTM/ChebConv default)."""
    A = jnp.zeros((n, n), jnp.float32).at[edge_index[0], edge_index[1]].add(edge_weight)
    deg = A.sum(axis=1)
    dinv = jnp.where(deg > 0, lax.rsqrt(deg), 0.0)
    return -(dinv[:, None] * A * dinv[None, :])


def cheb_operators(L):
    """Stacked Chebyshev operator matrices [T0(L), ..., T_{K-1}(L)] of shape (K, N, N)."""
    eye = jnp.eye(L.shape[0], dtype=L.dtype)
    t = [eye, L]
    for _ in range(2, K):
        t.append(2.0 * (L @ t[-1]) - t[-2])
    return jnp.stack(t[:K], axis=0)


def pack_params(params):
    """Host-side packing: fused weight+bias matrix and the (1,128) constants row."""
    # wx: (4, K, F, H) -> (K*F, 4*H): row = k*F + f, col = g*H + h.
    w_pack = jnp.transpose(params["wx"], (1, 2, 0, 3)).reshape(
        K * NODE_FEATURES, GATE_LANES)
    # With H0 = 0, ChebConv_h*(H0) contributes only its bias -> fold Bx + Bh + Bg, then
    # append it as the row multiplied by the ones column of the input.
    b_fold = (params["bx"] + params["bh"] + params["bg"]).reshape(1, GATE_LANES)
    w_aug = jnp.concatenate([w_pack, b_fold], axis=0)          # (KF1, 128)

    consts = jnp.zeros((1, GATE_LANES), jnp.float32)
    consts = consts.at[0, 0:HIDDEN].set(params["wc"][3])       # only o-gate peephole survives
    consts = consts.at[0, HIDDEN:2 * HIDDEN].set(params["lin_w"][:, 0])
    consts = consts.at[0, 2 * HIDDEN].set(params["lin_b"][0, 0])
    return w_aug, consts


def precompute(edge_index, edge_weight, n, params):
    """Everything that depends only on the graph structure / model weights."""
    L = build_scaled_laplacian(edge_index, edge_weight, n)
    t_stack = cheb_operators(L)                                # (K, N, N)
    w_aug, consts = pack_params(params)
    return t_stack, w_aug, consts


# --------------------------------------------------------------------------------------
# Batched forward (hot path): one einsum for the Chebyshev basis + one gridded pallas_call.
# --------------------------------------------------------------------------------------
@jax.jit
def our_lstm_forward_batched(x_batch, t_stack, w_aug, consts):
    """x_batch: (B, N, F) stacked graph snapshots / timesteps -> (B, N, 1) predictions."""
    b, n, f = x_batch.shape
    rows = b * n

    # Chebyshev basis of X for the whole batch in one XLA op: (B, N, K, F) -> (rows, K*F).
    tx = jnp.einsum("knm,bmf->bnkf", t_stack, x_batch).reshape(rows, K * NODE_FEATURES)
    txo = jnp.concatenate([tx, jnp.ones((rows, 1), tx.dtype)], axis=1)   # ones col = bias

    rows_pad = ((rows + TILE_ROWS - 1) // TILE_ROWS) * TILE_ROWS
    if rows_pad != rows:
        txo = jnp.pad(txo, ((0, rows_pad - rows), (0, 0)))

    out_row = pl.pallas_call(
        fused_cell_kernel,
        out_shape=jax.ShapeDtypeStruct((1, rows_pad), jnp.float32),
        grid=(rows_pad // TILE_ROWS,),
        in_specs=[
            pl.BlockSpec((TILE_ROWS, KF1), lambda i: (i, 0)),
            pl.BlockSpec((KF1, GATE_LANES), lambda i: (0, 0)),
            pl.BlockSpec((1, GATE_LANES), lambda i: (0, 0)),
        ],
        out_specs=pl.BlockSpec((1, TILE_ROWS), lambda i: (0, i)),
        compiler_params=pltpu.CompilerParams(dimension_semantics=("parallel",)),
    )(txo, w_aug, consts)

    return out_row[0, :rows].reshape(b, n, 1)


# --------------------------------------------------------------------------------------
# Pure-JAX reference of the FULL forward (including the Wh/zero-state path) to verify the
# dead-path elimination and all packing is exact.
# --------------------------------------------------------------------------------------
def _reference_single(x, L, params):
    H0 = jnp.zeros((x.shape[0], HIDDEN), jnp.float32)
    C0 = jnp.zeros_like(H0)

    def basis(Z):
        out = [Z, L @ Z]
        for _ in range(2, K):
            out.append(2.0 * (L @ out[-1]) - out[-2])
        return out

    Tx, Th = basis(x), basis(H0)

    def conv(b, W, bias):
        return sum(b[k] @ W[k] for k in range(K)) + bias[None, :]

    zx = [conv(Tx, params["wx"][g], params["bx"][g]) for g in range(4)]
    zh = [conv(Th, params["wh"][g], params["bh"][g]) for g in range(4)]
    Wc, Bg = params["wc"], params["bg"]
    I = jax.nn.sigmoid(zx[0] + zh[0] + Wc[0][None] * C0 + Bg[0][None])
    F = jax.nn.sigmoid(zx[1] + zh[1] + Wc[1][None] * C0 + Bg[1][None])
    T = jnp.tanh(zx[2] + zh[2] + Bg[2][None])
    C = F * C0 + I * T
    O = jax.nn.sigmoid(zx[3] + zh[3] + Wc[3][None] * C + Bg[3][None])
    Hn = O * jnp.tanh(C)
    return Hn @ params["lin_w"] + params["lin_b"]


def reference_batched(x_batch, edge_index, edge_weight, params):
    L = build_scaled_laplacian(edge_index, edge_weight, x_batch.shape[1])
    return jax.vmap(lambda xb: _reference_single(xb, L, params))(x_batch)


# --------------------------------------------------------------------------------------
# Params
# --------------------------------------------------------------------------------------
def init_params(key):
    ks = jax.random.split(key, 8)

    def glorot(k, shape, fan_in, fan_out):
        lim = (6.0 / (fan_in + fan_out)) ** 0.5
        return jax.random.uniform(k, shape, jnp.float32, -lim, lim)

    def small(k, shape):
        return jax.random.uniform(k, shape, jnp.float32, -0.1, 0.1)

    wc = glorot(ks[2], (4, HIDDEN), 1, HIDDEN).at[2].set(0.0)  # c-gate has no peephole
    return {
        "wx": glorot(ks[0], (4, K, NODE_FEATURES, HIDDEN), K * NODE_FEATURES, HIDDEN),
        "bx": small(ks[3], (4, HIDDEN)),
        "wh": glorot(ks[1], (4, K, HIDDEN, HIDDEN), K * HIDDEN, HIDDEN),
        "bh": small(ks[4], (4, HIDDEN)),
        "wc": wc,
        "bg": small(ks[5], (4, HIDDEN)),
        "lin_w": glorot(ks[6], (HIDDEN, 1), HIDDEN, 1),
        "lin_b": small(ks[7], (1, 1)),
    }


if __name__ == "__main__":
    key = jax.random.PRNGKey(0)
    k_x, k_p = jax.random.split(key)

    # Batched node features: B stacked snapshots of the same 16-node graph.
    B = 128
    x = jax.random.normal(k_x, (B, N_NODES, NODE_FEATURES), jnp.float32)

    # Simple undirected ring graph: edges (i, i+1 mod N) in both directions.
    src = np.arange(N_NODES, dtype=np.int32)
    dst = (src + 1) % N_NODES
    edge_index = jnp.asarray(
        np.stack([np.concatenate([src, dst]), np.concatenate([dst, src])]), jnp.int32)
    edge_weight = jnp.ones((edge_index.shape[1],), jnp.float32)

    params = init_params(k_p)

    # One-time, cacheable per-graph / per-model preparation (hoisted off the hot path).
    t_stack, w_aug, consts = precompute(edge_index, edge_weight, N_NODES, params)

    out = our_lstm_forward_batched(x, t_stack, w_aug, consts)
    out = jax.block_until_ready(out)
    assert out.shape == (B, N_NODES, 1)

    ref = reference_batched(x, edge_index, edge_weight, params)
    np.testing.assert_allclose(np.asarray(out), np.asarray(ref), rtol=1e-5, atol=1e-5)

    print("KERNEL_OK")
</pallas_src>

<mosaic_0001>
module attributes {stable_mosaic.version = 11 : i64} {
  func.func @fused_cell_kernel(%arg0: i32, %arg1: memref<512x17xf32, #tpu.memory_space<vmem>>, %arg2: memref<17x128xf32, #tpu.memory_space<vmem>>, %arg3: memref<1x128xf32, #tpu.memory_space<vmem>>, %arg4: memref<1x512xf32, #tpu.memory_space<vmem>>) attributes {dimension_semantics = [#tpu.dimension_semantics<parallel>], iteration_bounds = array<i64: 4>, scalar_prefetch = 0 : i64, scratch_operands = 0 : i64, tpu.core_type = #tpu.core_type<tc>, window_params = [{transform_indices = @transform_0, window_bounds = array<i64: 512, 17>}, {pipeline_mode = #tpu.pipeline_mode<synchronous>, transform_indices = @transform_1, window_bounds = array<i64: 17, 128>}, {pipeline_mode = #tpu.pipeline_mode<synchronous>, transform_indices = @transform_2, window_bounds = array<i64: 1, 128>}, {transform_indices = @transform_3, window_bounds = array<i64: 1, 512>}]} {
    %c0 = arith.constant 0 : index
    %c0_0 = arith.constant 0 : index
    %0 = vector.load %arg1[%c0, %c0_0] : memref<512x17xf32, #tpu.memory_space<vmem>>, vector<512x17xf32>
    %c0_1 = arith.constant 0 : index
    %c0_2 = arith.constant 0 : index
    %1 = vector.load %arg2[%c0_1, %c0_2] : memref<17x128xf32, #tpu.memory_space<vmem>>, vector<17x128xf32>
    %cst = arith.constant dense<0.000000e+00> : vector<512x128xf32>
    %2 = tpu.matmul %0, %1, %cst {dimension_numbers = #tpu.dot_dimension_numbers<[1], [0], [0], [1], [0, 0, 1, 1], [], []>} : vector<512x17xf32>, vector<17x128xf32>, vector<512x128xf32> -> vector<512x128xf32>
    %3 = vector.extract_strided_slice %2 {offsets = [0, 0], sizes = [512, 32], strides = [1, 1]} : vector<512x128xf32> to vector<512x32xf32>
    %4 = vector.extract_strided_slice %2 {offsets = [0, 64], sizes = [512, 32], strides = [1, 1]} : vector<512x128xf32> to vector<512x32xf32>
    %5 = vector.extract_strided_slice %2 {offsets = [0, 96], sizes = [512, 32], strides = [1, 1]} : vector<512x128xf32> to vector<512x32xf32>
    %c0_3 = arith.constant 0 : index
    %c0_4 = arith.constant 0 : index
    %6 = vector.load %arg3[%c0_3, %c0_4] : memref<1x128xf32, #tpu.memory_space<vmem>>, vector<1x32xf32>
    %c0_5 = arith.constant 0 : index
    %c32 = arith.constant 32 : index
    %7 = vector.load %arg3[%c0_5, %c32] : memref<1x128xf32, #tpu.memory_space<vmem>>, vector<1x32xf32>
    %c0_6 = arith.constant 0 : index
    %c64 = arith.constant 64 : index
    %8 = vector.load %arg3[%c0_6, %c64] : memref<1x128xf32, #tpu.memory_space<vmem>>, vector<1x1xf32>
    %9 = arith.negf %3 : vector<512x32xf32>
    %10 = math.exp %9 : vector<512x32xf32>
    %cst_7 = arith.constant 1.000000e+00 : f32
    %11 = vector.broadcast %cst_7 : f32 to vector<512x32xf32>
    %12 = arith.addf %11, %10 : vector<512x32xf32>
    %13 = arith.divf %11, %12 : vector<512x32xf32>
    %14 = math.tanh %4 : vector<512x32xf32>
    %15 = arith.mulf %13, %14 : vector<512x32xf32>
    %16 = vector.broadcast %6 : vector<1x32xf32> to vector<512x32xf32>
    %17 = arith.mulf %16, %15 : vector<512x32xf32>
    %18 = arith.addf %5, %17 : vector<512x32xf32>
    %19 = arith.negf %18 : vector<512x32xf32>
    %20 = math.exp %19 : vector<512x32xf32>
    %cst_8 = arith.constant 1.000000e+00 : f32
    %21 = vector.broadcast %cst_8 : f32 to vector<512x32xf32>
    %22 = arith.addf %21, %20 : vector<512x32xf32>
    %23 = arith.divf %21, %22 : vector<512x32xf32>
    %24 = math.tanh %15 : vector<512x32xf32>
    %25 = arith.mulf %23, %24 : vector<512x32xf32>
    "tpu.trace_start"() <{level = 10 : i32, message = "gh,rh->gr"}> : () -> ()
    %cst_9 = arith.constant dense<0.000000e+00> : vector<1x512xf32>
    %26 = tpu.matmul %7, %25, %cst_9 {dimension_numbers = #tpu.dot_dimension_numbers<[1], [1], [0], [0], [0, 0, 1, 0], [], []>} : vector<1x32xf32>, vector<512x32xf32>, vector<1x512xf32> -> vector<1x512xf32>
    "tpu.trace_stop"() : () -> ()
    %27 = vector.broadcast %8 : vector<1x1xf32> to vector<1x512xf32>
    %28 = arith.addf %26, %27 : vector<1x512xf32>
    %c0_10 = arith.constant 0 : index
    %c0_11 = arith.constant 0 : index
    %29 = vector.load %arg4[%c0_10, %c0_11] : memref<1x512xf32, #tpu.memory_space<vmem>>, vector<1x512xf32>
    tpu.vector_store %arg4[%c0_10, %c0_11], %28 {strides = array<i32>} : memref<1x512xf32, #tpu.memory_space<vmem>>, vector<1x512xf32>,
    return
  }
  func.func @transform_0(%arg0: i32) -> (i32, i32) {
    %c0_i32 = arith.constant 0 : i32
    %c0_i32_0 = arith.constant 0 : i32
    return %arg0, %c0_i32 : i32, i32
  }
  func.func @transform_1(%arg0: i32) -> (i32, i32) {
    %c0_i32 = arith.constant 0 : i32
    %c0_i32_0 = arith.constant 0 : i32
    %c0_i32_1 = arith.constant 0 : i32
    return %c0_i32, %c0_i32_0 : i32, i32
  }
  func.func @transform_2(%arg0: i32) -> (i32, i32) {
    %c0_i32 = arith.constant 0 : i32
    %c0_i32_0 = arith.constant 0 : i32
    %c0_i32_1 = arith.constant 0 : i32
    return %c0_i32, %c0_i32_0 : i32, i32
  }
  func.func @transform_3(%arg0: i32) -> (i32, i32) {
    %c0_i32 = arith.constant 0 : i32
    %c0_i32_0 = arith.constant 0 : i32
    return %c0_i32, %arg0 : i32, i32
  }
}

</mosaic_0001>

<llo_original>
// kernel: squeeze.1
$region0: #{squeeze.1}
  %s0 = inlined_call_operand.vmem [shape: f32[2048], index: 0, kind: input, shape index: {}]
  %s1 = inlined_call_operand.vmem [shape: f32[128,16,1], index: 1, kind: output, shape index: {}]
  %v2 = vld [vmem:[%s0] sm:$0xff]
  %vm3 = vcmask 130048
  %4 = vst.msk [vmem:[%s1] ss:$8 sm:$0xf] %vm3, %v2
  %5 = vst.msk [vmem:[%s1] ss:$8 sm:$0xf0] %vm3, %v2
  %s6 = scalar_lea.vmem %s0, 8
  %v7 = vld [vmem:[%s6] sm:$0xff]
  %vm8 = vcmask 130048
  %s9 = scalar_lea.vmem %s1, 64
  %10 = vst.msk [vmem:[%s9] ss:$8 sm:$0xf] %vm8, %v7
  %s11 = scalar_lea.vmem %s1, 64
  %12 = vst.msk [vmem:[%s11] ss:$8 sm:$0xf0] %vm8, %v7
  %v13 = vld [vmem:[%s0] sm:$0xff]
  %14 = vrot.lane.b32.xlu0 %v13, 112
  %v15 = vpop.permute.xlu0 %14
  %vm16 = vcmask 130048
  %s17 = scalar_lea.vmem %s1, 1
  %18 = vst.msk [vmem:[%s17] ss:$8 sm:$0xf] %vm16, %v15
  %s19 = scalar_lea.vmem %s1, 1
  %20 = vst.msk [vmem:[%s19] ss:$8 sm:$0xf0] %vm16, %v15
  %s21 = scalar_lea.vmem %s0, 8
  %v22 = vld [vmem:[%s21] sm:$0xff]
  %23 = vrot.lane.b32.xlu0 %v22, 112
  %v24 = vpop.permute.xlu0 %23
  %vm25 = vcmask 130048
  %s26 = scalar_lea.vmem %s1, 65
  %27 = vst.msk [vmem:[%s26] ss:$8 sm:$0xf] %vm25, %v24
  %s28 = scalar_lea.vmem %s1, 65
  %29 = vst.msk [vmem:[%s28] ss:$8 sm:$0xf0] %vm25, %v24
  %v30 = vld [vmem:[%s0] sm:$0xff]
  %31 = vrot.lane.b32.xlu0 %v30, 96
  %v32 = vpop.permute.xlu0 %31
  %vm33 = vcmask 130048
  %s34 = scalar_lea.vmem %s1, 2
  %35 = vst.msk [vmem:[%s34] ss:$8 sm:$0xf] %vm33, %v32
  %s36 = scalar_lea.vmem %s1, 2
  %37 = vst.msk [vmem:[%s36] ss:$8 sm:$0xf0] %vm33, %v32
  %s38 = scalar_lea.vmem %s0, 8
  %v39 = vld [vmem:[%s38] sm:$0xff]
  %40 = vrot.lane.b32.xlu0 %v39, 96
  %v41 = vpop.permute.xlu0 %40
  %vm42 = vcmask 130048
  %s43 = scalar_lea.vmem %s1, 66
  %44 = vst.msk [vmem:[%s43] ss:$8 sm:$0xf] %vm42, %v41
  %s45 = scalar_lea.vmem %s1, 66
  %46 = vst.msk [vmem:[%s45] ss:$8 sm:$0xf0] %vm42, %v41
  %v47 = vld [vmem:[%s0] sm:$0xff]
  %48 = vrot.lane.b32.xlu0 %v47, 80
  %v49 = vpop.permute.xlu0 %48
  %vm50 = vcmask 130048
  %s51 = scalar_lea.vmem %s1, 3
  %52 = vst.msk [vmem:[%s51] ss:$8 sm:$0xf] %vm50, %v49
  %s53 = scalar_lea.vmem %s1, 3
  %54 = vst.msk [vmem:[%s53] ss:$8 sm:$0xf0] %vm50, %v49
  %s55 = scalar_lea.vmem %s0, 8
  %v56 = vld [vmem:[%s55] sm:$0xff]
  %57 = vrot.lane.b32.xlu0 %v56, 80
  %v58 = vpop.permute.xlu0 %57
  %vm59 = vcmask 130048
  %s60 = scalar_lea.vmem %s1, 67
  %61 = vst.msk [vmem:[%s60] ss:$8 sm:$0xf] %vm59, %v58
  %s62 = scalar_lea.vmem %s1, 67
  %63 = vst.msk [vmem:[%s62] ss:$8 sm:$0xf0] %vm59, %v58
  %v64 = vld [vmem:[%s0] sm:$0xff]
  %65 = vrot.lane.b32.xlu0 %v64, 64
  %v66 = vpop.permute.xlu0 %65
  %vm67 = vcmask 130048
  %s68 = scalar_lea.vmem %s1, 4
  %69 = vst.msk [vmem:[%s68] ss:$8 sm:$0xf] %vm67, %v66
  %s70 = scalar_lea.vmem %s1, 4
  %71 = vst.msk [vmem:[%s70] ss:$8 sm:$0xf0] %vm67, %v66
  %s72 = scalar_lea.vmem %s0, 8
  %v73 = vld [vmem:[%s72] sm:$0xff]
  %74 = vrot.lane.b32.xlu0 %v73, 64
  %v75 = vpop.permute.xlu0 %74
  %vm76 = vcmask 130048
  %s77 = scalar_lea.vmem %s1, 68
  %78 = vst.msk [vmem:[%s77] ss:$8 sm:$0xf] %vm76, %v75
  %s79 = scalar_lea.vmem %s1, 68
  %80 = vst.msk [vmem:[%s79] ss:$8 sm:$0xf0] %vm76, %v75
  %v81 = vld [vmem:[%s0] sm:$0xff]
  %82 = vrot.lane.b32.xlu0 %v81, 48
  %v83 = vpop.permute.xlu0 %82
  %vm84 = vcmask 130048
  %s85 = scalar_lea.vmem %s1, 5
  %86 = vst.msk [vmem:[%s85] ss:$8 sm:$0xf] %vm84, %v83
  %s87 = scalar_lea.vmem %s1, 5
  %88 = vst.msk [vmem:[%s87] ss:$8 sm:$0xf0] %vm84, %v83
  %s89 = scalar_lea.vmem %s0, 8
  %v90 = vld [vmem:[%s89] sm:$0xff]
  %91 = vrot.lane.b32.xlu0 %v90, 48
  %v92 = vpop.permute.xlu0 %91
  %vm93 = vcmask 130048
  %s94 = scalar_lea.vmem %s1, 69
  %95 = vst.msk [vmem:[%s94] ss:$8 sm:$0xf] %vm93, %v92
  %s96 = scalar_lea.vmem %s1, 69
  %97 = vst.msk [vmem:[%s96] ss:$8 sm:$0xf0] %vm93, %v92
  %v98 = vld [vmem:[%s0] sm:$0xff]
  %99 = vrot.lane.b32.xlu0 %v98, 32
  %v100 = vpop.permute.xlu0 %99
  %vm101 = vcmask 130048
  %s102 = scalar_lea.vmem %s1, 6
  %103 = vst.msk [vmem:[%s102] ss:$8 sm:$0xf] %vm101, %v100
  %s104 = scalar_lea.vmem %s1, 6
  %105 = vst.msk [vmem:[%s104] ss:$8 sm:$0xf0] %vm101, %v100
  %s106 = scalar_lea.vmem %s0, 8
  %v107 = vld [vmem:[%s106] sm:$0xff]
  %108 = vrot.lane.b32.xlu0 %v107, 32
  %v109 = vpop.permute.xlu0 %108
  %vm110 = vcmask 130048
  %s111 = scalar_lea.vmem %s1, 70
  %112 = vst.msk [vmem:[%s111] ss:$8 sm:$0xf] %vm110, %v109
  %s113 = scalar_lea.vmem %s1, 70
  %114 = vst.msk [vmem:[%s113] ss:$8 sm:$0xf0] %vm110, %v109
  %v115 = vld [vmem:[%s0] sm:$0xff]
  %116 = vrot.lane.b32.xlu0 %v115, 16
  %v117 = vpop.permute.xlu0 %116
  %vm118 = vcmask 130048
  %s119 = scalar_lea.vmem %s1, 7
  %120 = vst.msk [vmem:[%s119] ss:$8 sm:$0xf] %vm118, %v117
  %s121 = scalar_lea.vmem %s1, 7
  %122 = vst.msk [vmem:[%s121] ss:$8 sm:$0xf0] %vm118, %v117
  %s123 = scalar_lea.vmem %s0, 8
  %v124 = vld [vmem:[%s123] sm:$0xff]
  %125 = vrot.lane.b32.xlu0 %v124, 16
  %v126 = vpop.permute.xlu0 %125
  %vm127 = vcmask 130048
  %s128 = scalar_lea.vmem %s1, 71
  %129 = vst.msk [vmem:[%s128] ss:$8 sm:$0xf] %vm127, %v126
  %s130 = scalar_lea.vmem %s1, 71
  %131 = vst.msk [vmem:[%s130] ss:$8 sm:$0xf0] %vm127, %v126

// kernel: our_lstm_forward_batched.1
$region0: #{our_lstm_forward_batched.1}
  #allocation0 [shape = 'u32[]', space=smem, size = 0x4, offset = 0x4, fixed_abs, tag = 'smem constant byte address 0x4 - core index']
  #allocation1 [shape = 'u32[72,128]{1,0:T(1,128)}', space=vmem, size = 0x9000, scoped, tag = 'internal scratch']
  %s0 = inlined_call_operand.vmem [shape: f32[2048,17], index: 0, kind: input, shape index: {}]
  %s1 = inlined_call_operand.vmem [shape: f32[17,128], index: 1, kind: input, shape index: {}]
  %s2 = inlined_call_operand.vmem [shape: f32[1,128], index: 2, kind: input, shape index: {}]
  %s3 = inlined_call_operand.vmem [shape: f32[1,2048], index: 3, kind: output, shape index: {}]
  %s4 = sld [smem:[#allocation0]]
  $region45: #{our_lstm_forward_batched.1} parent=0
    _
  %s6 = ssub.s32 1, %s4
  %s7 = scalar_select 0, %s6, %s4
  loop: start=0, step=1, limit=6
  $region2: #{our_lstm_forward_batched.1} parent=0 // loop_pre_header
    _
  $region3: #{our_lstm_forward_batched.1} parent=0 // loop_header
    %s9 = sphi 0, %s13
    %p10 = scmp.ge.s32.totalorder %s9, 6
    %s19 = sphi 0, %s21
    %s22 = sphi 0, %s19
    %s23 = sphi 0, %s22
    %s39 = sphi 0, %s23
    %s43 = sphi 0, %s43
    %s45 = sphi 0, %s43
    %s46 = sphi 0, %s45
    %s60 = sphi 0, %s46
    %s64 = sphi 0, %s64
    %s66 = sphi 0, %s64
    %s67 = sphi 0, %s66
    %s81 = sphi 0, %s67
    %s87 = sphi 0, %s89
    %s90 = sphi 0, %s87
    %s91 = sphi 0, %s90
    %s107 = sphi 0, %s91
  $region4: #{our_lstm_forward_batched.1} parent=0 // loop_header_branch
    %12 = sbr.rel (%p10) target = $region8
  $region5: #{our_lstm_forward_batched.1} parent=0 // loop_body
    %s14 = ssub.s32 %s9, 1
    %s15 = ssub.s32 %s9, 2
    %s16 = sadd.s32 %s9, 1
    %s17 = ssub.s32 %s9, %s16
    %p18 = scmp.eq.s32.totalorder %s17, 0
    %s20 = sadd.s32 %s19, 1
    %s21 = scalar_select %p18, %s19, %s20
    %p24 = pneg %p18
    %p25 = scmp.eq.s32.totalorder %s9, 3
    %p26 = por %p24, %p25
    %p27 = scmp.ne.s32.totalorder %s19, %s22
    %p28 = scmp.eq.s32.totalorder %s9, 0
    %p29 = por %p27, %p28
    %p30 = scmp.ne.s32.totalorder %s19, %s22
    %p31 = scmp.eq.s32.totalorder %s14, 3
    %p32 = por %p30, %p31
    %p33 = scmp.ne.s32.totalorder %s22, %s23
    %p34 = scmp.eq.s32.totalorder %s14, 0
    %p35 = por %p33, %p34
    %p36 = scmp.ne.s32.totalorder %s22, %s23
    %p37 = scmp.eq.s32.totalorder %s15, 3
    %p38 = por %p36, %p37
    %p40 = scmp.ne.s32.totalorder %s23, %s39
    %p41 = scmp.eq.s32.totalorder %s15, 0
    %p42 = por %p40, %p41
    %s44 = sadd.s32 %s43, 1
    %p47 = scmp.eq.s32.totalorder %s9, 3
    %p48 = scmp.ne.s32.totalorder %s43, %s45
    %p49 = scmp.eq.s32.totalorder %s9, 0
    %p50 = por %p48, %p49
    %p51 = scmp.ne.s32.totalorder %s43, %s45
    %p52 = scmp.eq.s32.totalorder %s14, 3
    %p53 = por %p51, %p52
    %p54 = scmp.ne.s32.totalorder %s45, %s46
    %p55 = scmp.eq.s32.totalorder %s14, 0
    %p56 = por %p54, %p55
    %p57 = scmp.ne.s32.totalorder %s45, %s46
    %p58 = scmp.eq.s32.totalorder %s15, 3
    %p59 = por %p57, %p58
    %p61 = scmp.ne.s32.totalorder %s46, %s60
    %p62 = scmp.eq.s32.totalorder %s15, 0
    %p63 = por %p61, %p62
    %s65 = sadd.s32 %s64, 1
    %p68 = scmp.eq.s32.totalorder %s9, 3
    %p69 = scmp.ne.s32.totalorder %s64, %s66
    %p70 = scmp.eq.s32.totalorder %s9, 0
    %p71 = por %p69, %p70
    %p72 = scmp.ne.s32.totalorder %s64, %s66
    %p73 = scmp.eq.s32.totalorder %s14, 3
    %p74 = por %p72, %p73
    %p75 = scmp.ne.s32.totalorder %s66, %s67
    %p76 = scmp.eq.s32.totalorder %s14, 0
    %p77 = por %p75, %p76
    %p78 = scmp.ne.s32.totalorder %s66, %s67
    %p79 = scmp.eq.s32.totalorder %s15, 3
    %p80 = por %p78, %p79
    %p82 = scmp.ne.s32.totalorder %s67, %s81
    %p83 = scmp.eq.s32.totalorder %s15, 0
    %p84 = por %p82, %p83
    %s85 = ssub.s32 %s9, %s16
    %p86 = scmp.eq.s32.totalorder %s85, 0
    %s88 = sadd.s32 %s87, 1
    %s89 = scalar_select %p86, %s87, %s88
    %p92 = pneg %p86
    %p93 = scmp.eq.s32.totalorder %s9, 3
    %p94 = por %p92, %p93
    %p95 = scmp.ne.s32.totalorder %s87, %s90
    %p96 = scmp.eq.s32.totalorder %s9, 0
    %p97 = por %p95, %p96
    %p98 = scmp.ne.s32.totalorder %s87, %s90
    %p99 = scmp.eq.s32.totalorder %s14, 3
    %p100 = por %p98, %p99
    %p101 = scmp.ne.s32.totalorder %s90, %s91
    %p102 = scmp.eq.s32.totalorder %s14, 0
    %p103 = por %p101, %p102
    %p104 = scmp.ne.s32.totalorder %s90, %s91
    %p105 = scmp.eq.s32.totalorder %s15, 3
    %p106 = por %p104, %p105
    %p108 = scmp.ne.s32.totalorder %s91, %s107
    %p109 = scmp.eq.s32.totalorder %s15, 0
    %p110 = por %p108, %p109
    %p111 = scmp.le.s32.totalorder 1, %s9
    %p112 = scmp.lt.s32.totalorder %s9, 5
    %p113 = pnand %p111, %p112
    %p114 = pneg %p113
    // Predicated region
    $region9: #{our_lstm_forward_batched.1} parent=5 // pred_check
      _
    $region10: #{our_lstm_forward_batched.1} parent=5 // pred_check_branch
      %116 = sbr.rel (%p113) target = $region12
    $region11: #{our_lstm_forward_batched.1} parent=5 // pred_region
      %s117 = ssub.s32 %s9, 1
      // Predicated region
      $region13: #{our_lstm_forward_batched.1} parent=11 // pred_check
        %p118 = pneg %p56
      $region14: #{our_lstm_forward_batched.1} parent=11 // pred_check_branch
        %120 = sbr.rel (%p118) target = $region16
      $region15: #{our_lstm_forward_batched.1} parent=11 // pred_region
        _
      $region16: #{our_lstm_forward_batched.1} parent=11 // pred_fallthru
        _
      // Predicated region
      $region17: #{our_lstm_forward_batched.1} parent=11 // pred_check
        %p121 = pneg %p77
      $region18: #{our_lstm_forward_batched.1} parent=11 // pred_check_branch
        %123 = sbr.rel (%p121) target = $region20
      $region19: #{our_lstm_forward_batched.1} parent=11 // pred_region
        _
      $region20: #{our_lstm_forward_batched.1} parent=11 // pred_fallthru
        _
    $region12: #{our_lstm_forward_batched.1} parent=5 // pred_fallthru
      _
    %p124 = scmp.lt.s32.totalorder %s9, 4
    // Predicated region
    $region21: #{our_lstm_forward_batched.1} parent=5 // pred_check
      %p125 = pneg %p124
    $region22: #{our_lstm_forward_batched.1} parent=5 // pred_check_branch
      %127 = sbr.rel (%p125) target = $region24
    $region23: #{our_lstm_forward_batched.1} parent=5 // pred_region
      // Predicated region
      $region25: #{our_lstm_forward_batched.1} parent=23 // pred_check
        %p128 = pneg %p29
      $region26: #{our_lstm_forward_batched.1} parent=23 // pred_check_branch
        %130 = sbr.rel (%p128) target = $region28
      $region27: #{our_lstm_forward_batched.1} parent=23 // pred_region
        %s131 = smul.u32 64, %s9
        %p132 = scmp.lt.s32.totalorder %s131, 255
        %s133 = scalar_select %p132, %s131, 255
        %s134 = smul.addr %s133, 8
        %s135 = scalar_lea.vmem %s0, %s134
        %s136 = smul.u32 64, %s9
      $region28: #{our_lstm_forward_batched.1} parent=23 // pred_fallthru
        _
    $region24: #{our_lstm_forward_batched.1} parent=5 // pred_fallthru
      _
    %p137 = scmp.le.s32.totalorder 1, %s9
    %p138 = scmp.lt.s32.totalorder %s9, 5
    %p139 = pnand %p137, %p138
    %p140 = pneg %p139
    // Predicated region
    $region29: #{our_lstm_forward_batched.1} parent=5 // pred_check
      _
    $region30: #{our_lstm_forward_batched.1} parent=5 // pred_check_branch
      %142 = sbr.rel (%p139) target = $region32
    $region31: #{our_lstm_forward_batched.1} parent=5 // pred_region
      %s143 = ssub.s32 %s9, 1
      %s144 = smul.u32 64, %s14
      %p145 = scmp.lt.s32.totalorder %s144, 255
      %s146 = scalar_select %p145, %s144, 255
      %s147 = smul.addr %s146, 8
      %s148 = scalar_lea.vmem %s0, %s147
      %p149 = pneg %p35
      %p150 = pneg %p32
      %p151 = pneg %p56
      %p152 = pneg %p53
      %p153 = pneg %p77
      %p154 = pneg %p74
      %p155 = pneg %p103
      %p156 = pneg %p100
      %s157 = smul.u32 4, %s14
      %p158 = scmp.lt.s32.totalorder %s157, 15
      %s159 = scalar_select %p158, %s157, 15
      %s160 = scalar_lea.vmem %s3, %s159
      %s161 = smul.u32 64, %s14
      %p162 = scmp.lt.s32.totalorder %s161, 255
      %s163 = scalar_select %p162, %s161, 255
      %s164 = smul.addr %s163, 8
      %s165 = scalar_lea.vmem %s0, %s164
      %s166 = smul.u32 64, %s14
      %s167 = smul.u32 4, %s14
      %p168 = scmp.lt.s32.totalorder %s167, 15
      %s169 = scalar_select %p168, %s167, 15
      %s170 = scalar_lea.vmem %s3, %s169
      %s171 = smul.u32 4, %s14
      %v172 = vld [vmem:[%s165] sm:$0xff]
      %v173 = vld [vmem:[%s165 + $0x8] sm:$0xff]
      %v174 = vld [vmem:[%s165 + $0x10] sm:$0xff]
      %v175 = vld [vmem:[%s165 + $0x18] sm:$0xff]
      %v176 = vld [vmem:[%s165 + $0x20] sm:$0xff]
      %v177 = vld [vmem:[%s165 + $0x28] sm:$0xff]
      %v178 = vld [vmem:[%s165 + $0x30] sm:$0xff]
      %v179 = vld [vmem:[%s165 + $0x38] sm:$0xff]
      %v180 = vld [vmem:[%s165 + $0x40] sm:$0xff]
      %v181 = vld [vmem:[%s165 + $0x48] sm:$0xff]
      %v182 = vld [vmem:[%s165 + $0x50] sm:$0xff]
      %v183 = vld [vmem:[%s165 + $0x58] sm:$0xff]
      %v184 = vld [vmem:[%s165 + $0x60] sm:$0xff]
      %v185 = vld [vmem:[%s165 + $0x68] sm:$0xff]
      %v186 = vld [vmem:[%s165 + $0x70] sm:$0xff]
      %v187 = vld [vmem:[%s165 + $0x78] sm:$0xff]
      %v188 = vld [vmem:[%s165 + $0x80] sm:$0xff]
      %v189 = vld [vmem:[%s165 + $0x88] sm:$0xff]
      %v190 = vld [vmem:[%s165 + $0x90] sm:$0xff]
      %v191 = vld [vmem:[%s165 + $0x98] sm:$0xff]
      %v192 = vld [vmem:[%s165 + $0xa0] sm:$0xff]
      %v193 = vld [vmem:[%s165 + $0xa8] sm:$0xff]
      %v194 = vld [vmem:[%s165 + $0xb0] sm:$0xff]
      %v195 = vld [vmem:[%s165 + $0xb8] sm:$0xff]
      %v196 = vld [vmem:[%s165 + $0xc0] sm:$0xff]
      %v197 = vld [vmem:[%s165 + $0xc8] sm:$0xff]
      %v198 = vld [vmem:[%s165 + $0xd0] sm:$0xff]
      %v199 = vld [vmem:[%s165 + $0xd8] sm:$0xff]
      %v200 = vld [vmem:[%s165 + $0xe0] sm:$0xff]
      %v201 = vld [vmem:[%s165 + $0xe8] sm:$0xff]
      %v202 = vld [vmem:[%s165 + $0xf0] sm:$0xff]
      %v203 = vld [vmem:[%s165 + $0xf8] sm:$0xff]
      %v204 = vld [vmem:[%s165 + $0x100] sm:$0xff]
      %v205 = vld [vmem:[%s165 + $0x108] sm:$0xff]
      %v206 = vld [vmem:[%s165 + $0x110] sm:$0xff]
      %v207 = vld [vmem:[%s165 + $0x118] sm:$0xff]
      %v208 = vld [vmem:[%s165 + $0x120] sm:$0xff]
      %v209 = vld [vmem:[%s165 + $0x128] sm:$0xff]
      %v210 = vld [vmem:[%s165 + $0x130] sm:$0xff]
      %v211 = vld [vmem:[%s165 + $0x138] sm:$0xff]
      %v212 = vld [vmem:[%s165 + $0x140] sm:$0xff]
      %v213 = vld [vmem:[%s165 + $0x148] sm:$0xff]
      %v214 = vld [vmem:[%s165 + $0x150] sm:$0xff]
      %v215 = vld [vmem:[%s165 + $0x158] sm:$0xff]
      %v216 = vld [vmem:[%s165 + $0x160] sm:$0xff]
      %v217 = vld [vmem:[%s165 + $0x168] sm:$0xff]
      %v218 = vld [vmem:[%s165 + $0x170] sm:$0xff]
      %v219 = vld [vmem:[%s165 + $0x178] sm:$0xff]
      %v220 = vld [vmem:[%s165 + $0x180] sm:$0xff]
      %v221 = vld [vmem:[%s165 + $0x188] sm:$0xff]
      %v222 = vld [vmem:[%s165 + $0x190] sm:$0xff]
      %v223 = vld [vmem:[%s165 + $0x198] sm:$0xff]
      %v224 = vld [vmem:[%s165 + $0x1a0] sm:$0xff]
      %v225 = vld [vmem:[%s165 + $0x1a8] sm:$0xff]
      %v226 = vld [vmem:[%s165 + $0x1b0] sm:$0xff]
      %v227 = vld [vmem:[%s165 + $0x1b8] sm:$0xff]
      %v228 = vld [vmem:[%s165 + $0x1c0] sm:$0xff]
      %v229 = vld [vmem:[%s165 + $0x1c8] sm:$0xff]
      %v230 = vld [vmem:[%s165 + $0x1d0] sm:$0xff]
      %v231 = vld [vmem:[%s165 + $0x1d8] sm:$0xff]
      %v232 = vld [vmem:[%s165 + $0x1e0] sm:$0xff]
      %v233 = vld [vmem:[%s165 + $0x1e8] sm:$0xff]
      %v234 = vld [vmem:[%s165 + $0x1f0] sm:$0xff]
      %v235 = vld [vmem:[%s165 + $0x1f8] sm:$0xff]
      %v236 = vld [vmem:[%s1] sm:$0xff]
      %v237 = vld [vmem:[%s1 + $0x8] sm:$0xff]
      %v238 = vld [vmem:[%s1 + $0x10] sm:$0x1]
      %vm239 = vcmask 138240
      %v241 = vsel %vm239, %v172, 0
      %v244 = vsel %vm239, %v173, 0
      %v247 = vsel %vm239, %v174, 0
      %v250 = vsel %vm239, %v175, 0
      %v253 = vsel %vm239, %v176, 0
      %v256 = vsel %vm239, %v177, 0
      %v259 = vsel %vm239, %v178, 0
      %v262 = vsel %vm239, %v179, 0
      %v265 = vsel %vm239, %v180, 0
      %v268 = vsel %vm239, %v181, 0
      %v271 = vsel %vm239, %v182, 0
      %v274 = vsel %vm239, %v183, 0
      %v277 = vsel %vm239, %v184, 0
      %v280 = vsel %vm239, %v185, 0
      %v283 = vsel %vm239, %v186, 0
      %v286 = vsel %vm239, %v187, 0
      %v289 = vsel %vm239, %v188, 0
      %v292 = vsel %vm239, %v189, 0
      %v295 = vsel %vm239, %v190, 0
      %v298 = vsel %vm239, %v191, 0
      %v301 = vsel %vm239, %v192, 0
      %v304 = vsel %vm239, %v193, 0
      %v307 = vsel %vm239, %v194, 0
      %v310 = vsel %vm239, %v195, 0
      %v313 = vsel %vm239, %v196, 0
      %v316 = vsel %vm239, %v197, 0
      %v319 = vsel %vm239, %v198, 0
      %v322 = vsel %vm239, %v199, 0
      %v325 = vsel %vm239, %v200, 0
      %v328 = vsel %vm239, %v201, 0
      %v331 = vsel %vm239, %v202, 0
      %v334 = vsel %vm239, %v203, 0
      %v337 = vsel %vm239, %v204, 0
      %v340 = vsel %vm239, %v205, 0
      %v343 = vsel %vm239, %v206, 0
      %v346 = vsel %vm239, %v207, 0
      %v349 = vsel %vm239, %v208, 0
      %v352 = vsel %vm239, %v209, 0
      %v355 = vsel %vm239, %v210, 0
      %v358 = vsel %vm239, %v211, 0
      %v361 = vsel %vm239, %v212, 0
      %v364 = vsel %vm239, %v213, 0
      %v367 = vsel %vm239, %v214, 0
      %v370 = vsel %vm239, %v215, 0
      %v373 = vsel %vm239, %v216, 0
      %v376 = vsel %vm239, %v217, 0
      %v379 = vsel %vm239, %v218, 0
      %v382 = vsel %vm239, %v219, 0
      %v385 = vsel %vm239, %v220, 0
      %v388 = vsel %vm239, %v221, 0
      %v391 = vsel %vm239, %v222, 0
      %v394 = vsel %vm239, %v223, 0
      %v397 = vsel %vm239, %v224, 0
      %v400 = vsel %vm239, %v225, 0
      %v403 = vsel %vm239, %v226, 0
      %v406 = vsel %vm239, %v227, 0
      %v409 = vsel %vm239, %v228, 0
      %v412 = vsel %vm239, %v229, 0
      %v415 = vsel %vm239, %v230, 0
      %v418 = vsel %vm239, %v231, 0
      %v421 = vsel %vm239, %v232, 0
      %v424 = vsel %vm239, %v233, 0
      %v427 = vsel %vm239, %v234, 0
      %v430 = vsel %vm239, %v235, 0
      %vm432 = vcmask 1040384
      %v434 = vsel %vm432, %v238, 0
      %436 = vmatpush.msra.mxu0 0.0
      %437 = vmatpush.msra.mxu0 0.0
      %438 = vmatpush.msra.mxu0 0.0
      %439 = vmatpush.msra.mxu0 0.0
      %440 = vmatpush.msra.mxu0 0.0
      %441 = vmatpush.msra.mxu0 0.0
      %442 = vmatpush.msra.mxu0 0.0
      %443 = vmatpush.msra.mxu0 0.0
      %444 = vmatpush.msra.mxu0 0.0
      %445 = vmatpush.msra.mxu0 0.0
      %446 = vmatpush.msra.mxu0 0.0
      %447 = vmatpush.msra.mxu0 0.0
      %448 = vmatpush.msra.mxu0 0.0
      %449 = vmatpush.msra.mxu0 %v434
      %450 = vmatpush.msra.mxu0 %v237
      %451 = vmatpush.msra.mxu0 %v236
      %452 = vmatmul.f32.gmra.mxu0 %v241
      %v453 = vpop.f32.mrf.mxu0
      %v454 = vadd.f32 0.0, %v453
      %455 = vmatmul.f32.gmra.mxu0 %v244
      %v456 = vpop.f32.mrf.mxu0
      %v457 = vadd.f32 0.0, %v456
      %458 = vmatmul.f32.gmra.mxu0 %v247
      %v459 = vpop.f32.mrf.mxu0
      %v460 = vadd.f32 0.0, %v459
      %461 = vmatmul.f32.gmra.mxu0 %v250
      %v462 = vpop.f32.mrf.mxu0
      %v463 = vadd.f32 0.0, %v462
      %464 = vmatmul.f32.gmra.mxu0 %v253
      %v465 = vpop.f32.mrf.mxu0
      %v466 = vadd.f32 0.0, %v465
      %467 = vmatmul.f32.gmra.mxu0 %v256
      %v468 = vpop.f32.mrf.mxu0
      %v469 = vadd.f32 0.0, %v468
      %470 = vmatmul.f32.gmra.mxu0 %v259
      %v471 = vpop.f32.mrf.mxu0
      %v472 = vadd.f32 0.0, %v471
      %473 = vmatmul.f32.gmra.mxu0 %v262
      %v474 = vpop.f32.mrf.mxu0
      %v475 = vadd.f32 0.0, %v474
      %476 = vmatmul.f32.gmra.mxu0 %v265
      %v477 = vpop.f32.mrf.mxu0
      %v478 = vadd.f32 0.0, %v477
      %479 = vmatmul.f32.gmra.mxu0 %v268
      %v480 = vpop.f32.mrf.mxu0
      %v481 = vadd.f32 0.0, %v480
      %482 = vmatmul.f32.gmra.mxu0 %v271
      %v483 = vpop.f32.mrf.mxu0
      %v484 = vadd.f32 0.0, %v483
      %485 = vmatmul.f32.gmra.mxu0 %v274
      %v486 = vpop.f32.mrf.mxu0
      %v487 = vadd.f32 0.0, %v486
      %488 = vmatmul.f32.gmra.mxu0 %v277
      %v489 = vpop.f32.mrf.mxu0
      %v490 = vadd.f32 0.0, %v489
      %491 = vmatmul.f32.gmra.mxu0 %v280
      %v492 = vpop.f32.mrf.mxu0
      %v493 = vadd.f32 0.0, %v492
      %494 = vmatmul.f32.gmra.mxu0 %v283
      %v495 = vpop.f32.mrf.mxu0
      %v496 = vadd.f32 0.0, %v495
      %497 = vmatmul.f32.gmra.mxu0 %v286
      %v498 = vpop.f32.mrf.mxu0
      %v499 = vadd.f32 0.0, %v498
      %500 = vmatmul.f32.gmra.mxu0 %v289
      %v501 = vpop.f32.mrf.mxu0
      %v502 = vadd.f32 0.0, %v501
      %503 = vmatmul.f32.gmra.mxu0 %v292
      %v504 = vpop.f32.mrf.mxu0
      %v505 = vadd.f32 0.0, %v504
      %506 = vmatmul.f32.gmra.mxu0 %v295
      %v507 = vpop.f32.mrf.mxu0
      %v508 = vadd.f32 0.0, %v507
      %509 = vmatmul.f32.gmra.mxu0 %v298
      %v510 = vpop.f32.mrf.mxu0
      %v511 = vadd.f32 0.0, %v510
      %512 = vmatmul.f32.gmra.mxu0 %v301
      %v513 = vpop.f32.mrf.mxu0
      %v514 = vadd.f32 0.0, %v513
      %515 = vmatmul.f32.gmra.mxu0 %v304
      %v516 = vpop.f32.mrf.mxu0
      %v517 = vadd.f32 0.0, %v516
      %518 = vmatmul.f32.gmra.mxu0 %v307
      %v519 = vpop.f32.mrf.mxu0
      %v520 = vadd.f32 0.0, %v519
      %521 = vmatmul.f32.gmra.mxu0 %v310
      %v522 = vpop.f32.mrf.mxu0
      %v523 = vadd.f32 0.0, %v522
      %524 = vmatmul.f32.gmra.mxu0 %v313
      %v525 = vpop.f32.mrf.mxu0
      %v526 = vadd.f32 0.0, %v525
      %527 = vmatmul.f32.gmra.mxu0 %v316
      %v528 = vpop.f32.mrf.mxu0
      %v529 = vadd.f32 0.0, %v528
      %530 = vmatmul.f32.gmra.mxu0 %v319
      %v531 = vpop.f32.mrf.mxu0
      %v532 = vadd.f32 0.0, %v531
      %533 = vmatmul.f32.gmra.mxu0 %v322
      %v534 = vpop.f32.mrf.mxu0
      %v535 = vadd.f32 0.0, %v534
      %536 = vmatmul.f32.gmra.mxu0 %v325
      %v537 = vpop.f32.mrf.mxu0
      %v538 = vadd.f32 0.0, %v537
      %539 = vmatmul.f32.gmra.mxu0 %v328
      %v540 = vpop.f32.mrf.mxu0
      %v541 = vadd.f32 0.0, %v540
      %542 = vmatmul.f32.gmra.mxu0 %v331
      %v543 = vpop.f32.mrf.mxu0
      %v544 = vadd.f32 0.0, %v543
      %545 = vmatmul.f32.gmra.mxu0 %v334
      %v546 = vpop.f32.mrf.mxu0
      %v547 = vadd.f32 0.0, %v546
      %548 = vmatmul.f32.gmra.mxu0 %v337
      %v549 = vpop.f32.mrf.mxu0
      %v550 = vadd.f32 0.0, %v549
      %551 = vmatmul.f32.gmra.mxu0 %v340
      %v552 = vpop.f32.mrf.mxu0
      %v553 = vadd.f32 0.0, %v552
      %554 = vmatmul.f32.gmra.mxu0 %v343
      %v555 = vpop.f32.mrf.mxu0
      %v556 = vadd.f32 0.0, %v555
      %557 = vmatmul.f32.gmra.mxu0 %v346
      %v558 = vpop.f32.mrf.mxu0
      %v559 = vadd.f32 0.0, %v558
      %560 = vmatmul.f32.gmra.mxu0 %v349
      %v561 = vpop.f32.mrf.mxu0
      %v562 = vadd.f32 0.0, %v561
      %563 = vmatmul.f32.gmra.mxu0 %v352
      %v564 = vpop.f32.mrf.mxu0
      %v565 = vadd.f32 0.0, %v564
      %566 = vmatmul.f32.gmra.mxu0 %v355
      %v567 = vpop.f32.mrf.mxu0
      %v568 = vadd.f32 0.0, %v567
      %569 = vmatmul.f32.gmra.mxu0 %v358
      %v570 = vpop.f32.mrf.mxu0
      %v571 = vadd.f32 0.0, %v570
      %572 = vmatmul.f32.gmra.mxu0 %v361
      %v573 = vpop.f32.mrf.mxu0
      %v574 = vadd.f32 0.0, %v573
      %575 = vmatmul.f32.gmra.mxu0 %v364
      %v576 = vpop.f32.mrf.mxu0
      %v577 = vadd.f32 0.0, %v576
      %578 = vmatmul.f32.gmra.mxu0 %v367
      %v579 = vpop.f32.mrf.mxu0
      %v580 = vadd.f32 0.0, %v579
      %581 = vmatmul.f32.gmra.mxu0 %v370
      %v582 = vpop.f32.mrf.mxu0
      %v583 = vadd.f32 0.0, %v582
      %584 = vmatmul.f32.gmra.mxu0 %v373
      %v585 = vpop.f32.mrf.mxu0
      %v586 = vadd.f32 0.0, %v585
      %587 = vmatmul.f32.gmra.mxu0 %v376
      %v588 = vpop.f32.mrf.mxu0
      %v589 = vadd.f32 0.0, %v588
      %590 = vmatmul.f32.gmra.mxu0 %v379
      %v591 = vpop.f32.mrf.mxu0
      %v592 = vadd.f32 0.0, %v591
      %593 = vmatmul.f32.gmra.mxu0 %v382
      %v594 = vpop.f32.mrf.mxu0
      %v595 = vadd.f32 0.0, %v594
      %596 = vmatmul.f32.gmra.mxu0 %v385
      %v597 = vpop.f32.mrf.mxu0
      %v598 = vadd.f32 0.0, %v597
      %599 = vmatmul.f32.gmra.mxu0 %v388
      %v600 = vpop.f32.mrf.mxu0
      %v601 = vadd.f32 0.0, %v600
      %602 = vmatmul.f32.gmra.mxu0 %v391
      %v603 = vpop.f32.mrf.mxu0
      %v604 = vadd.f32 0.0, %v603
      %605 = vmatmul.f32.gmra.mxu0 %v394
      %v606 = vpop.f32.mrf.mxu0
      %v607 = vadd.f32 0.0, %v606
      %608 = vmatmul.f32.gmra.mxu0 %v397
      %v609 = vpop.f32.mrf.mxu0
      %v610 = vadd.f32 0.0, %v609
      %611 = vmatmul.f32.gmra.mxu0 %v400
      %v612 = vpop.f32.mrf.mxu0
      %v613 = vadd.f32 0.0, %v612
      %614 = vmatmul.f32.gmra.mxu0 %v403
      %v615 = vpop.f32.mrf.mxu0
      %v616 = vadd.f32 0.0, %v615
      %617 = vmatmul.f32.gmra.mxu0 %v406
      %v618 = vpop.f32.mrf.mxu0
      %v619 = vadd.f32 0.0, %v618
      %620 = vmatmul.f32.gmra.mxu0 %v409
      %v621 = vpop.f32.mrf.mxu0
      %v622 = vadd.f32 0.0, %v621
      %623 = vmatmul.f32.gmra.mxu0 %v412
      %v624 = vpop.f32.mrf.mxu0
      %v625 = vadd.f32 0.0, %v624
      %626 = vmatmul.f32.gmra.mxu0 %v415
      %v627 = vpop.f32.mrf.mxu0
      %v628 = vadd.f32 0.0, %v627
      %629 = vmatmul.f32.gmra.mxu0 %v418
      %v630 = vpop.f32.mrf.mxu0
      %v631 = vadd.f32 0.0, %v630
      %632 = vmatmul.f32.gmra.mxu0 %v421
      %v633 = vpop.f32.mrf.mxu0
      %v634 = vadd.f32 0.0, %v633
      %635 = vmatmul.f32.gmra.mxu0 %v424
      %v636 = vpop.f32.mrf.mxu0
      %v637 = vadd.f32 0.0, %v636
      %638 = vmatmul.f32.gmra.mxu0 %v427
      %v639 = vpop.f32.mrf.mxu0
      %v640 = vadd.f32 0.0, %v639
      %641 = vmatmul.f32.gmra.mxu0 %v430
      %v642 = vpop.f32.mrf.mxu0
      %v643 = vadd.f32 0.0, %v642
      %644 = vdwg.mxu0
      %v645 = vld [vmem:[%s2] sm:$0x1]
      %v646 = vxor.u32 %v454, 2147483648
      %v647 = vxor.u32 %v457, 2147483648
      %v648 = vxor.u32 %v460, 2147483648
      %v649 = vxor.u32 %v463, 2147483648
      %v650 = vxor.u32 %v466, 2147483648
      %v651 = vxor.u32 %v469, 2147483648
      %v652 = vxor.u32 %v472, 2147483648
      %v653 = vxor.u32 %v475, 2147483648
      %v654 = vxor.u32 %v478, 2147483648
      %v655 = vxor.u32 %v481, 2147483648
      %v656 = vxor.u32 %v484, 2147483648
      %v657 = vxor.u32 %v487, 2147483648
      %v658 = vxor.u32 %v490, 2147483648
      %v659 = vxor.u32 %v493, 2147483648
      %v660 = vxor.u32 %v496, 2147483648
      %v661 = vxor.u32 %v499, 2147483648
      %v662 = vxor.u32 %v502, 2147483648
      %v663 = vxor.u32 %v505, 2147483648
      %v664 = vxor.u32 %v508, 2147483648
      %v665 = vxor.u32 %v511, 2147483648
      %v666 = vxor.u32 %v514, 2147483648
      %v667 = vxor.u32 %v517, 2147483648
      %v668 = vxor.u32 %v520, 2147483648
      %v669 = vxor.u32 %v523, 2147483648
      %v670 = vxor.u32 %v526, 2147483648
      %v671 = vxor.u32 %v529, 2147483648
      %v672 = vxor.u32 %v532, 2147483648
      %v673 = vxor.u32 %v535, 2147483648
      %v674 = vxor.u32 %v538, 2147483648
      %v675 = vxor.u32 %v541, 2147483648
      %v676 = vxor.u32 %v544, 2147483648
      %v677 = vxor.u32 %v547, 2147483648
      %v678 = vxor.u32 %v550, 2147483648
      %v679 = vxor.u32 %v553, 2147483648
      %v680 = vxor.u32 %v556, 2147483648
      %v681 = vxor.u32 %v559, 2147483648
      %v682 = vxor.u32 %v562, 2147483648
      %v683 = vxor.u32 %v565, 2147483648
      %v684 = vxor.u32 %v568, 2147483648
      %v685 = vxor.u32 %v571, 2147483648
      %v686 = vxor.u32 %v574, 2147483648
      %v687 = vxor.u32 %v577, 2147483648
      %v688 = vxor.u32 %v580, 2147483648
      %v689 = vxor.u32 %v583, 2147483648
      %v690 = vxor.u32 %v586, 2147483648
      %v691 = vxor.u32 %v589, 2147483648
      %v692 = vxor.u32 %v592, 2147483648
      %v693 = vxor.u32 %v595, 2147483648
      %v694 = vxor.u32 %v598, 2147483648
      %v695 = vxor.u32 %v601, 2147483648
      %v696 = vxor.u32 %v604, 2147483648
      %v697 = vxor.u32 %v607, 2147483648
      %v698 = vxor.u32 %v610, 2147483648
      %v699 = vxor.u32 %v613, 2147483648
      %v700 = vxor.u32 %v616, 2147483648
      %v701 = vxor.u32 %v619, 2147483648
      %v702 = vxor.u32 %v622, 2147483648
      %v703 = vxor.u32 %v625, 2147483648
      %v704 = vxor.u32 %v628, 2147483648
      %v705 = vxor.u32 %v631, 2147483648
      %v706 = vxor.u32 %v634, 2147483648
      %v707 = vxor.u32 %v637, 2147483648
      %v708 = vxor.u32 %v640, 2147483648
      %v709 = vxor.u32 %v643, 2147483648
      %v710 = vmul.f32 %v646, 1.442695
      %v711 = vpow.pop %v710
      %v712 = vmul.f32 %v647, 1.442695
      %v713 = vpow.pop %v712
      %v714 = vmul.f32 %v648, 1.442695
      %v715 = vpow.pop %v714
      %v716 = vmul.f32 %v649, 1.442695
      %v717 = vpow.pop %v716
      %v718 = vmul.f32 %v650, 1.442695
      %v719 = vpow.pop %v718
      %v720 = vmul.f32 %v651, 1.442695
      %v721 = vpow.pop %v720
      %v722 = vmul.f32 %v652, 1.442695
      %v723 = vpow.pop %v722
      %v724 = vmul.f32 %v653, 1.442695
      %v725 = vpow.pop %v724
      %v726 = vmul.f32 %v654, 1.442695
      %v727 = vpow.pop %v726
      %v728 = vmul.f32 %v655, 1.442695
      %v729 = vpow.pop %v728
      %v730 = vmul.f32 %v656, 1.442695
      %v731 = vpow.pop %v730
      %v732 = vmul.f32 %v657, 1.442695
      %v733 = vpow.pop %v732
      %v734 = vmul.f32 %v658, 1.442695
      %v735 = vpow.pop %v734
      %v736 = vmul.f32 %v659, 1.442695
      %v737 = vpow.pop %v736
      %v738 = vmul.f32 %v660, 1.442695
      %v739 = vpow.pop %v738
      %v740 = vmul.f32 %v661, 1.442695
      %v741 = vpow.pop %v740
      %v742 = vmul.f32 %v662, 1.442695
      %v743 = vpow.pop %v742
      %v744 = vmul.f32 %v663, 1.442695
      %v745 = vpow.pop %v744
      %v746 = vmul.f32 %v664, 1.442695
      %v747 = vpow.pop %v746
      %v748 = vmul.f32 %v665, 1.442695
      %v749 = vpow.pop %v748
      %v750 = vmul.f32 %v666, 1.442695
      %v751 = vpow.pop %v750
      %v752 = vmul.f32 %v667, 1.442695
      %v753 = vpow.pop %v752
      %v754 = vmul.f32 %v668, 1.442695
      %v755 = vpow.pop %v754
      %v756 = vmul.f32 %v669, 1.442695
      %v757 = vpow.pop %v756
      %v758 = vmul.f32 %v670, 1.442695
      %v759 = vpow.pop %v758
      %v760 = vmul.f32 %v671, 1.442695
      %v761 = vpow.pop %v760
      %v762 = vmul.f32 %v672, 1.442695
      %v763 = vpow.pop %v762
      %v764 = vmul.f32 %v673, 1.442695
      %v765 = vpow.pop %v764
      %v766 = vmul.f32 %v674, 1.442695
      %v767 = vpow.pop %v766
      %v768 = vmul.f32 %v675, 1.442695
      %v769 = vpow.pop %v768
      %v770 = vmul.f32 %v676, 1.442695
      %v771 = vpow.pop %v770
      %v772 = vmul.f32 %v677, 1.442695
      %v773 = vpow.pop %v772
      %v774 = vmul.f32 %v678, 1.442695
      %v775 = vpow.pop %v774
      %v776 = vmul.f32 %v679, 1.442695
      %v777 = vpow.pop %v776
      %v778 = vmul.f32 %v680, 1.442695
      %v779 = vpow.pop %v778
      %v780 = vmul.f32 %v681, 1.442695
      %v781 = vpow.pop %v780
      %v782 = vmul.f32 %v682, 1.442695
      %v783 = vpow.pop %v782
      %v784 = vmul.f32 %v683, 1.442695
      %v785 = vpow.pop %v784
      %v786 = vmul.f32 %v684, 1.442695
      %v787 = vpow.pop %v786
      %v788 = vmul.f32 %v685, 1.442695
      %v789 = vpow.pop %v788
      %v790 = vmul.f32 %v686, 1.442695
      %v791 = vpow.pop %v790
      %v792 = vmul.f32 %v687, 1.442695
      %v793 = vpow.pop %v792
      %v794 = vmul.f32 %v688, 1.442695
      %v795 = vpow.pop %v794
      %v796 = vmul.f32 %v689, 1.442695
      %v797 = vpow.pop %v796
      %v798 = vmul.f32 %v690, 1.442695
      %v799 = vpow.pop %v798
      %v800 = vmul.f32 %v691, 1.442695
      %v801 = vpow.pop %v800
      %v802 = vmul.f32 %v692, 1.442695
      %v803 = vpow.pop %v802
      %v804 = vmul.f32 %v693, 1.442695
      %v805 = vpow.pop %v804
      %v806 = vmul.f32 %v694, 1.442695
      %v807 = vpow.pop %v806
      %v808 = vmul.f32 %v695, 1.442695
      %v809 = vpow.pop %v808
      %v810 = vmul.f32 %v696, 1.442695
      %v811 = vpow.pop %v810
      %v812 = vmul.f32 %v697, 1.442695
      %v813 = vpow.pop %v812
      %v814 = vmul.f32 %v698, 1.442695
      %v815 = vpow.pop %v814
      %v816 = vmul.f32 %v699, 1.442695
      %v817 = vpow.pop %v816
      %v818 = vmul.f32 %v700, 1.442695
      %v819 = vpow.pop %v818
      %v820 = vmul.f32 %v701, 1.442695
      %v821 = vpow.pop %v820
      %v822 = vmul.f32 %v702, 1.442695
      %v823 = vpow.pop %v822
      %v824 = vmul.f32 %v703, 1.442695
      %v825 = vpow.pop %v824
      %v826 = vmul.f32 %v704, 1.442695
      %v827 = vpow.pop %v826
      %v828 = vmul.f32 %v705, 1.442695
      %v829 = vpow.pop %v828
      %v830 = vmul.f32 %v706, 1.442695
      %v831 = vpow.pop %v830
      %v832 = vmul.f32 %v707, 1.442695
      %v833 = vpow.pop %v832
      %v834 = vmul.f32 %v708, 1.442695
      %v835 = vpow.pop %v834
      %v836 = vmul.f32 %v709, 1.442695
      %v837 = vpow.pop %v836
      %v838 = vadd.f32 %v711, 1.0
      %v839 = vadd.f32 %v713, 1.0
      %v840 = vadd.f32 %v715, 1.0
      %v841 = vadd.f32 %v717, 1.0
      %v842 = vadd.f32 %v719, 1.0
      %v843 = vadd.f32 %v721, 1.0
      %v844 = vadd.f32 %v723, 1.0
      %v845 = vadd.f32 %v725, 1.0
      %v846 = vadd.f32 %v727, 1.0
      %v847 = vadd.f32 %v729, 1.0
      %v848 = vadd.f32 %v731, 1.0
      %v849 = vadd.f32 %v733, 1.0
      %v850 = vadd.f32 %v735, 1.0
      %v851 = vadd.f32 %v737, 1.0
      %v852 = vadd.f32 %v739, 1.0
      %v853 = vadd.f32 %v741, 1.0
      %v854 = vadd.f32 %v743, 1.0
      %v855 = vadd.f32 %v745, 1.0
      %v856 = vadd.f32 %v747, 1.0
      %v857 = vadd.f32 %v749, 1.0
      %v858 = vadd.f32 %v751, 1.0
      %v859 = vadd.f32 %v753, 1.0
      %v860 = vadd.f32 %v755, 1.0
      %v861 = vadd.f32 %v757, 1.0
      %v862 = vadd.f32 %v759, 1.0
      %v863 = vadd.f32 %v761, 1.0
      %v864 = vadd.f32 %v763, 1.0
      %v865 = vadd.f32 %v765, 1.0
      %v866 = vadd.f32 %v767, 1.0
      %v867 = vadd.f32 %v769, 1.0
      %v868 = vadd.f32 %v771, 1.0
      %v869 = vadd.f32 %v773, 1.0
      %v870 = vadd.f32 %v775, 1.0
      %v871 = vadd.f32 %v777, 1.0
      %v872 = vadd.f32 %v779, 1.0
      %v873 = vadd.f32 %v781, 1.0
      %v874 = vadd.f32 %v783, 1.0
      %v875 = vadd.f32 %v785, 1.0
      %v876 = vadd.f32 %v787, 1.0
      %v877 = vadd.f32 %v789, 1.0
      %v878 = vadd.f32 %v791, 1.0
      %v879 = vadd.f32 %v793, 1.0
      %v880 = vadd.f32 %v795, 1.0
      %v881 = vadd.f32 %v797, 1.0
      %v882 = vadd.f32 %v799, 1.0
      %v883 = vadd.f32 %v801, 1.0
      %v884 = vadd.f32 %v803, 1.0
      %v885 = vadd.f32 %v805, 1.0
      %v886 = vadd.f32 %v807, 1.0
      %v887 = vadd.f32 %v809, 1.0
      %v888 = vadd.f32 %v811, 1.0
      %v889 = vadd.f32 %v813, 1.0
      %v890 = vadd.f32 %v815, 1.0
      %v891 = vadd.f32 %v817, 1.0
      %v892 = vadd.f32 %v819, 1.0
      %v893 = vadd.f32 %v821, 1.0
      %v894 = vadd.f32 %v823, 1.0
      %v895 = vadd.f32 %v825, 1.0
      %v896 = vadd.f32 %v827, 1.0
      %v897 = vadd.f32 %v829, 1.0
      %v898 = vadd.f32 %v831, 1.0
      %v899 = vadd.f32 %v833, 1.0
      %v900 = vadd.f32 %v835, 1.0
      %v901 = vadd.f32 %v837, 1.0
      %v902 = vrcp.pop %v838
      %v903 = vmul.f32 %v838, %v902
      %v904 = vsub.f32 1.0, %v903
      %v905 = vmul.f32 %v902, %v904
      %v906 = vadd.f32 %v902, %v905
      %vm907 = vweird.f32 %v838
      %vm908 = vweird.f32 %v902
      %vm909 = vmor %vm907, %vm908
      %v910 = vsel %vm909, %v902, %v906
      %v911 = vand.u32 2147483647, %v838
      %vm912 = vcmp.eq.f32.partialorder %v911, 8.507059e+37
      %v913 = vand.u32 %v838, 2147483648
      %v914 = vor.u32 1.1754944e-38, %v913
      %v915 = vsel %vm912, %v914, %v910
      %v916 = vmul.f32 1.0, %v915
      %v917 = vrcp.pop %v839
      %v918 = vmul.f32 %v839, %v917
      %v919 = vsub.f32 1.0, %v918
      %v920 = vmul.f32 %v917, %v919
      %v921 = vadd.f32 %v917, %v920
      %vm922 = vweird.f32 %v839
      %vm923 = vweird.f32 %v917
      %vm924 = vmor %vm922, %vm923
      %v925 = vsel %vm924, %v917, %v921
      %v926 = vand.u32 2147483647, %v839
      %vm927 = vcmp.eq.f32.partialorder %v926, 8.507059e+37
      %v928 = vand.u32 %v839, 2147483648
      %v929 = vor.u32 1.1754944e-38, %v928
      %v930 = vsel %vm927, %v929, %v925
      %v931 = vmul.f32 1.0, %v930
      %v932 = vrcp.pop %v840
      %v933 = vmul.f32 %v840, %v932
      %v934 = vsub.f32 1.0, %v933
      %v935 = vmul.f32 %v932, %v934
      %v936 = vadd.f32 %v932, %v935
      %vm937 = vweird.f32 %v840
      %vm938 = vweird.f32 %v932
      %vm939 = vmor %vm937, %vm938
      %v940 = vsel %vm939, %v932, %v936
      %v941 = vand.u32 2147483647, %v840
      %vm942 = vcmp.eq.f32.partialorder %v941, 8.507059e+37
      %v943 = vand.u32 %v840, 2147483648
      %v944 = vor.u32 1.1754944e-38, %v943
      %v945 = vsel %vm942, %v944, %v940
      %v946 = vmul.f32 1.0, %v945
      %v947 = vrcp.pop %v841
      %v948 = vmul.f32 %v841, %v947
      %v949 = vsub.f32 1.0, %v948
      %v950 = vmul.f32 %v947, %v949
      %v951 = vadd.f32 %v947, %v950
      %vm952 = vweird.f32 %v841
      %vm953 = vweird.f32 %v947
      %vm954 = vmor %vm952, %vm953
      %v955 = vsel %vm954, %v947, %v951
      %v956 = vand.u32 2147483647, %v841
      %vm957 = vcmp.eq.f32.partialorder %v956, 8.507059e+37
      %v958 = vand.u32 %v841, 2147483648
      %v959 = vor.u32 1.1754944e-38, %v958
      %v960 = vsel %vm957, %v959, %v955
      %v961 = vmul.f32 1.0, %v960
      %v962 = vrcp.pop %v842
      %v963 = vmul.f32 %v842, %v962
      %v964 = vsub.f32 1.0, %v963
      %v965 = vmul.f32 %v962, %v964
      %v966 = vadd.f32 %v962, %v965
      %vm967 = vweird.f32 %v842
      %vm968 = vweird.f32 %v962
      %vm969 = vmor %vm967, %vm968
      %v970 = vsel %vm969, %v962, %v966
      %v971 = vand.u32 2147483647, %v842
      %vm972 = vcmp.eq.f32.partialorder %v971, 8.507059e+37
      %v973 = vand.u32 %v842, 2147483648
      %v974 = vor.u32 1.1754944e-38, %v973
      %v975 = vsel %vm972, %v974, %v970
      %v976 = vmul.f32 1.0, %v975
      %v977 = vrcp.pop %v843
      %v978 = vmul.f32 %v843, %v977
      %v979 = vsub.f32 1.0, %v978
      %v980 = vmul.f32 %v977, %v979
      %v981 = vadd.f32 %v977, %v980
      %vm982 = vweird.f32 %v843
      %vm983 = vweird.f32 %v977
      %vm984 = vmor %vm982, %vm983
      %v985 = vsel %vm984, %v977, %v981
      %v986 = vand.u32 2147483647, %v843
      %vm987 = vcmp.eq.f32.partialorder %v986, 8.507059e+37
      %v988 = vand.u32 %v843, 2147483648
      %v989 = vor.u32 1.1754944e-38, %v988
      %v990 = vsel %vm987, %v989, %v985
      %v991 = vmul.f32 1.0, %v990
      %v992 = vrcp.pop %v844
      %v993 = vmul.f32 %v844, %v992
      %v994 = vsub.f32 1.0, %v993
      %v995 = vmul.f32 %v992, %v994
      %v996 = vadd.f32 %v992, %v995
      %vm997 = vweird.f32 %v844
      %vm998 = vweird.f32 %v992
      %vm999 = vmor %vm997, %vm998
      %v1000 = vsel %vm999, %v992, %v996
      %v1001 = vand.u32 2147483647, %v844
      %vm1002 = vcmp.eq.f32.partialorder %v1001, 8.507059e+37
      %v1003 = vand.u32 %v844, 2147483648
      %v1004 = vor.u32 1.1754944e-38, %v1003
      %v1005 = vsel %vm1002, %v1004, %v1000
      %v1006 = vmul.f32 1.0, %v1005
      %v1007 = vrcp.pop %v845
      %v1008 = vmul.f32 %v845, %v1007
      %v1009 = vsub.f32 1.0, %v1008
      %v1010 = vmul.f32 %v1007, %v1009
      %v1011 = vadd.f32 %v1007, %v1010
      %vm1012 = vweird.f32 %v845
      %vm1013 = vweird.f32 %v1007
      %vm1014 = vmor %vm1012, %vm1013
      %v1015 = vsel %vm1014, %v1007, %v1011
      %v1016 = vand.u32 2147483647, %v845
      %vm1017 = vcmp.eq.f32.partialorder %v1016, 8.507059e+37
      %v1018 = vand.u32 %v845, 2147483648
      %v1019 = vor.u32 1.1754944e-38, %v1018
      %v1020 = vsel %vm1017, %v1019, %v1015
      %v1021 = vmul.f32 1.0, %v1020
      %v1022 = vrcp.pop %v846
      %v1023 = vmul.f32 %v846, %v1022
      %v1024 = vsub.f32 1.0, %v1023
      %v1025 = vmul.f32 %v1022, %v1024
      %v1026 = vadd.f32 %v1022, %v1025
      %vm1027 = vweird.f32 %v846
      %vm1028 = vweird.f32 %v1022
      %vm1029 = vmor %vm1027, %vm1028
      %v1030 = vsel %vm1029, %v1022, %v1026
      %v1031 = vand.u32 2147483647, %v846
      %vm1032 = vcmp.eq.f32.partialorder %v1031, 8.507059e+37
      %v1033 = vand.u32 %v846, 2147483648
      %v1034 = vor.u32 1.1754944e-38, %v1033
      %v1035 = vsel %vm1032, %v1034, %v1030
      %v1036 = vmul.f32 1.0, %v1035
      %v1037 = vrcp.pop %v847
      %v1038 = vmul.f32 %v847, %v1037
      %v1039 = vsub.f32 1.0, %v1038
      %v1040 = vmul.f32 %v1037, %v1039
      %v1041 = vadd.f32 %v1037, %v1040
      %vm1042 = vweird.f32 %v847
      %vm1043 = vweird.f32 %v1037
      %vm1044 = vmor %vm1042, %vm1043
      %v1045 = vsel %vm1044, %v1037, %v1041
      %v1046 = vand.u32 2147483647, %v847
      %vm1047 = vcmp.eq.f32.partialorder %v1046, 8.507059e+37
      %v1048 = vand.u32 %v847, 2147483648
      %v1049 = vor.u32 1.1754944e-38, %v1048
      %v1050 = vsel %vm1047, %v1049, %v1045
      %v1051 = vmul.f32 1.0, %v1050
      %v1052 = vrcp.pop %v848
      %v1053 = vmul.f32 %v848, %v1052
      %v1054 = vsub.f32 1.0, %v1053
      %v1055 = vmul.f32 %v1052, %v1054
      %v1056 = vadd.f32 %v1052, %v1055
      %vm1057 = vweird.f32 %v848
      %vm1058 = vweird.f32 %v1052
      %vm1059 = vmor %vm1057, %vm1058
      %v1060 = vsel %vm1059, %v1052, %v1056
      %v1061 = vand.u32 2147483647, %v848
      %vm1062 = vcmp.eq.f32.partialorder %v1061, 8.507059e+37
      %v1063 = vand.u32 %v848, 2147483648
      %v1064 = vor.u32 1.1754944e-38, %v1063
      %v1065 = vsel %vm1062, %v1064, %v1060
      %v1066 = vmul.f32 1.0, %v1065
      %v1067 = vrcp.pop %v849
      %v1068 = vmul.f32 %v849, %v1067
      %v1069 = vsub.f32 1.0, %v1068
      %v1070 = vmul.f32 %v1067, %v1069
      %v1071 = vadd.f32 %v1067, %v1070
      %vm1072 = vweird.f32 %v849
      %vm1073 = vweird.f32 %v1067
      %vm1074 = vmor %vm1072, %vm1073
      %v1075 = vsel %vm1074, %v1067, %v1071
      %v1076 = vand.u32 2147483647, %v849
      %vm1077 = vcmp.eq.f32.partialorder %v1076, 8.507059e+37
      %v1078 = vand.u32 %v849, 2147483648
      %v1079 = vor.u32 1.1754944e-38, %v1078
      %v1080 = vsel %vm1077, %v1079, %v1075
      %v1081 = vmul.f32 1.0, %v1080
      %v1082 = vrcp.pop %v850
      %v1083 = vmul.f32 %v850, %v1082
      %v1084 = vsub.f32 1.0, %v1083
      %v1085 = vmul.f32 %v1082, %v1084
      %v1086 = vadd.f32 %v1082, %v1085
      %vm1087 = vweird.f32 %v850
      %vm1088 = vweird.f32 %v1082
      %vm1089 = vmor %vm1087, %vm1088
      %v1090 = vsel %vm1089, %v1082, %v1086
      %v1091 = vand.u32 2147483647, %v850
      %vm1092 = vcmp.eq.f32.partialorder %v1091, 8.507059e+37
      %v1093 = vand.u32 %v850, 2147483648
      %v1094 = vor.u32 1.1754944e-38, %v1093
      %v1095 = vsel %vm1092, %v1094, %v1090
      %v1096 = vmul.f32 1.0, %v1095
      %v1097 = vrcp.pop %v851
      %v1098 = vmul.f32 %v851, %v1097
      %v1099 = vsub.f32 1.0, %v1098
      %v1100 = vmul.f32 %v1097, %v1099
      %v1101 = vadd.f32 %v1097, %v1100
      %vm1102 = vweird.f32 %v851
      %vm1103 = vweird.f32 %v1097
      %vm1104 = vmor %vm1102, %vm1103
      %v1105 = vsel %vm1104, %v1097, %v1101
      %v1106 = vand.u32 2147483647, %v851
      %vm1107 = vcmp.eq.f32.partialorder %v1106, 8.507059e+37
      %v1108 = vand.u32 %v851, 2147483648
      %v1109 = vor.u32 1.1754944e-38, %v1108
      %v1110 = vsel %vm1107, %v1109, %v1105
      %v1111 = vmul.f32 1.0, %v1110
      %v1112 = vrcp.pop %v852
      %v1113 = vmul.f32 %v852, %v1112
      %v1114 = vsub.f32 1.0, %v1113
      %v1115 = vmul.f32 %v1112, %v1114
      %v1116 = vadd.f32 %v1112, %v1115
      %vm1117 = vweird.f32 %v852
      %vm1118 = vweird.f32 %v1112
      %vm1119 = vmor %vm1117, %vm1118
      %v1120 = vsel %vm1119, %v1112, %v1116
      %v1121 = vand.u32 2147483647, %v852
      %vm1122 = vcmp.eq.f32.partialorder %v1121, 8.507059e+37
      %v1123 = vand.u32 %v852, 2147483648
      %v1124 = vor.u32 1.1754944e-38, %v1123
      %v1125 = vsel %vm1122, %v1124, %v1120
      %v1126 = vmul.f32 1.0, %v1125
      %v1127 = vrcp.pop %v853
      %v1128 = vmul.f32 %v853, %v1127
      %v1129 = vsub.f32 1.0, %v1128
      %v1130 = vmul.f32 %v1127, %v1129
      %v1131 = vadd.f32 %v1127, %v1130
      %vm1132 = vweird.f32 %v853
      %vm1133 = vweird.f32 %v1127
      %vm1134 = vmor %vm1132, %vm1133
      %v1135 = vsel %vm1134, %v1127, %v1131
      %v1136 = vand.u32 2147483647, %v853
      %vm1137 = vcmp.eq.f32.partialorder %v1136, 8.507059e+37
      %v1138 = vand.u32 %v853, 2147483648
      %v1139 = vor.u32 1.1754944e-38, %v1138
      %v1140 = vsel %vm1137, %v1139, %v1135
      %v1141 = vmul.f32 1.0, %v1140
      %v1142 = vrcp.pop %v854
      %v1143 = vmul.f32 %v854, %v1142
      %v1144 = vsub.f32 1.0, %v1143
      %v1145 = vmul.f32 %v1142, %v1144
      %v1146 = vadd.f32 %v1142, %v1145
      %vm1147 = vweird.f32 %v854
      %vm1148 = vweird.f32 %v1142
      %vm1149 = vmor %vm1147, %vm1148
      %v1150 = vsel %vm1149, %v1142, %v1146
      %v1151 = vand.u32 2147483647, %v854
      %vm1152 = vcmp.eq.f32.partialorder %v1151, 8.507059e+37
      %v1153 = vand.u32 %v854, 2147483648
      %v1154 = vor.u32 1.1754944e-38, %v1153
      %v1155 = vsel %vm1152, %v1154, %v1150
      %v1156 = vmul.f32 1.0, %v1155
      %v1157 = vrcp.pop %v855
      %v1158 = vmul.f32 %v855, %v1157
      %v1159 = vsub.f32 1.0, %v1158
      %v1160 = vmul.f32 %v1157, %v1159
      %v1161 = vadd.f32 %v1157, %v1160
      %vm1162 = vweird.f32 %v855
      %vm1163 = vweird.f32 %v1157
      %vm1164 = vmor %vm1162, %vm1163
      %v1165 = vsel %vm1164, %v1157, %v1161
      %v1166 = vand.u32 2147483647, %v855
      %vm1167 = vcmp.eq.f32.partialorder %v1166, 8.507059e+37
      %v1168 = vand.u32 %v855, 2147483648
      %v1169 = vor.u32 1.1754944e-38, %v1168
      %v1170 = vsel %vm1167, %v1169, %v1165
      %v1171 = vmul.f32 1.0, %v1170
      %v1172 = vrcp.pop %v856
      %v1173 = vmul.f32 %v856, %v1172
      %v1174 = vsub.f32 1.0, %v1173
      %v1175 = vmul.f32 %v1172, %v1174
      %v1176 = vadd.f32 %v1172, %v1175
      %vm1177 = vweird.f32 %v856
      %vm1178 = vweird.f32 %v1172
      %vm1179 = vmor %vm1177, %vm1178
      %v1180 = vsel %vm1179, %v1172, %v1176
      %v1181 = vand.u32 2147483647, %v856
      %vm1182 = vcmp.eq.f32.partialorder %v1181, 8.507059e+37
      %v1183 = vand.u32 %v856, 2147483648
      %v1184 = vor.u32 1.1754944e-38, %v1183
      %v1185 = vsel %vm1182, %v1184, %v1180
      %v1186 = vmul.f32 1.0, %v1185
      %v1187 = vrcp.pop %v857
      %v1188 = vmul.f32 %v857, %v1187
      %v1189 = vsub.f32 1.0, %v1188
      %v1190 = vmul.f32 %v1187, %v1189
      %v1191 = vadd.f32 %v1187, %v1190
      %vm1192 = vweird.f32 %v857
      %vm1193 = vweird.f32 %v1187
      %vm1194 = vmor %vm1192, %vm1193
      %v1195 = vsel %vm1194, %v1187, %v1191
      %v1196 = vand.u32 2147483647, %v857
      %vm1197 = vcmp.eq.f32.partialorder %v1196, 8.507059e+37
      %v1198 = vand.u32 %v857, 2147483648
      %v1199 = vor.u32 1.1754944e-38, %v1198
      %v1200 = vsel %vm1197, %v1199, %v1195
      %v1201 = vmul.f32 1.0, %v1200
      %v1202 = vrcp.pop %v858
      %v1203 = vmul.f32 %v858, %v1202
      %v1204 = vsub.f32 1.0, %v1203
      %v1205 = vmul.f32 %v1202, %v1204
      %v1206 = vadd.f32 %v1202, %v1205
      %vm1207 = vweird.f32 %v858
      %vm1208 = vweird.f32 %v1202
      %vm1209 = vmor %vm1207, %vm1208
      %v1210 = vsel %vm1209, %v1202, %v1206
      %v1211 = vand.u32 2147483647, %v858
      %vm1212 = vcmp.eq.f32.partialorder %v1211, 8.507059e+37
      %v1213 = vand.u32 %v858, 2147483648
      %v1214 = vor.u32 1.1754944e-38, %v1213
      %v1215 = vsel %vm1212, %v1214, %v1210
      %v1216 = vmul.f32 1.0, %v1215
      %v1217 = vrcp.pop %v859
      %v1218 = vmul.f32 %v859, %v1217
      %v1219 = vsub.f32 1.0, %v1218
      %v1220 = vmul.f32 %v1217, %v1219
      %v1221 = vadd.f32 %v1217, %v1220
      %vm1222 = vweird.f32 %v859
      %vm1223 = vweird.f32 %v1217
      %vm1224 = vmor %vm1222, %vm1223
      %v1225 = vsel %vm1224, %v1217, %v1221
      %v1226 = vand.u32 2147483647, %v859
      %vm1227 = vcmp.eq.f32.partialorder %v1226, 8.507059e+37
      %v1228 = vand.u32 %v859, 2147483648
      %v1229 = vor.u32 1.1754944e-38, %v1228
      %v1230 = vsel %vm1227, %v1229, %v1225
      %v1231 = vmul.f32 1.0, %v1230
      %v1232 = vrcp.pop %v860
      %v1233 = vmul.f32 %v860, %v1232
      %v1234 = vsub.f32 1.0, %v1233
      %v1235 = vmul.f32 %v1232, %v1234
      %v1236 = vadd.f32 %v1232, %v1235
      %vm1237 = vweird.f32 %v860
      %vm1238 = vweird.f32 %v1232
      %vm1239 = vmor %vm1237, %vm1238
      %v1240 = vsel %vm1239, %v1232, %v1236
      %v1241 = vand.u32 2147483647, %v860
      %vm1242 = vcmp.eq.f32.partialorder %v1241, 8.507059e+37
      %v1243 = vand.u32 %v860, 2147483648
      %v1244 = vor.u32 1.1754944e-38, %v1243
      %v1245 = vsel %vm1242, %v1244, %v1240
      %v1246 = vmul.f32 1.0, %v1245
      %v1247 = vrcp.pop %v861
      %v1248 = vmul.f32 %v861, %v1247
      %v1249 = vsub.f32 1.0, %v1248
      %v1250 = vmul.f32 %v1247, %v1249
      %v1251 = vadd.f32 %v1247, %v1250
      %vm1252 = vweird.f32 %v861
      %vm1253 = vweird.f32 %v1247
      %vm1254 = vmor %vm1252, %vm1253
      %v1255 = vsel %vm1254, %v1247, %v1251
      %v1256 = vand.u32 2147483647, %v861
      %vm1257 = vcmp.eq.f32.partialorder %v1256, 8.507059e+37
      %v1258 = vand.u32 %v861, 2147483648
      %v1259 = vor.u32 1.1754944e-38, %v1258
      %v1260 = vsel %vm1257, %v1259, %v1255
      %v1261 = vmul.f32 1.0, %v1260
      %v1262 = vrcp.pop %v862
      %v1263 = vmul.f32 %v862, %v1262
      %v1264 = vsub.f32 1.0, %v1263
      %v1265 = vmul.f32 %v1262, %v1264
      %v1266 = vadd.f32 %v1262, %v1265
      %vm1267 = vweird.f32 %v862
      %vm1268 = vweird.f32 %v1262
      %vm1269 = vmor %vm1267, %vm1268
      %v1270 = vsel %vm1269, %v1262, %v1266
      %v1271 = vand.u32 2147483647, %v862
      %vm1272 = vcmp.eq.f32.partialorder %v1271, 8.507059e+37
      %v1273 = vand.u32 %v862, 2147483648
      %v1274 = vor.u32 1.1754944e-38, %v1273
      %v1275 = vsel %vm1272, %v1274, %v1270
      %v1276 = vmul.f32 1.0, %v1275
      %v1277 = vrcp.pop %v863
      %v1278 = vmul.f32 %v863, %v1277
      %v1279 = vsub.f32 1.0, %v1278
      %v1280 = vmul.f32 %v1277, %v1279
      %v1281 = vadd.f32 %v1277, %v1280
      %vm1282 = vweird.f32 %v863
      %vm1283 = vweird.f32 %v1277
      %vm1284 = vmor %vm1282, %vm1283
      %v1285 = vsel %vm1284, %v1277, %v1281
      %v1286 = vand.u32 2147483647, %v863
      %vm1287 = vcmp.eq.f32.partialorder %v1286, 8.507059e+37
      %v1288 = vand.u32 %v863, 2147483648
      %v1289 = vor.u32 1.1754944e-38, %v1288
      %v1290 = vsel %vm1287, %v1289, %v1285
      %v1291 = vmul.f32 1.0, %v1290
      %v1292 = vrcp.pop %v864
      %v1293 = vmul.f32 %v864, %v1292
      %v1294 = vsub.f32 1.0, %v1293
      %v1295 = vmul.f32 %v1292, %v1294
      %v1296 = vadd.f32 %v1292, %v1295
      %vm1297 = vweird.f32 %v864
      %vm1298 = vweird.f32 %v1292
      %vm1299 = vmor %vm1297, %vm1298
      %v1300 = vsel %vm1299, %v1292, %v1296
      %v1301 = vand.u32 2147483647, %v864
      %vm1302 = vcmp.eq.f32.partialorder %v1301, 8.507059e+37
      %v1303 = vand.u32 %v864, 2147483648
      %v1304 = vor.u32 1.1754944e-38, %v1303
      %v1305 = vsel %vm1302, %v1304, %v1300
      %v1306 = vmul.f32 1.0, %v1305
      %v1307 = vrcp.pop %v865
      %v1308 = vmul.f32 %v865, %v1307
      %v1309 = vsub.f32 1.0, %v1308
      %v1310 = vmul.f32 %v1307, %v1309
      %v1311 = vadd.f32 %v1307, %v1310
      %vm1312 = vweird.f32 %v865
      %vm1313 = vweird.f32 %v1307
      %vm1314 = vmor %vm1312, %vm1313
      %v1315 = vsel %vm1314, %v1307, %v1311
      %v1316 = vand.u32 2147483647, %v865
      %vm1317 = vcmp.eq.f32.partialorder %v1316, 8.507059e+37
      %v1318 = vand.u32 %v865, 2147483648
      %v1319 = vor.u32 1.1754944e-38, %v1318
      %v1320 = vsel %vm1317, %v1319, %v1315
      %v1321 = vmul.f32 1.0, %v1320
      %v1322 = vrcp.pop %v866
      %v1323 = vmul.f32 %v866, %v1322
      %v1324 = vsub.f32 1.0, %v1323
      %v1325 = vmul.f32 %v1322, %v1324
      %v1326 = vadd.f32 %v1322, %v1325
      %vm1327 = vweird.f32 %v866
      %vm1328 = vweird.f32 %v1322
      %vm1329 = vmor %vm1327, %vm1328
      %v1330 = vsel %vm1329, %v1322, %v1326
      %v1331 = vand.u32 2147483647, %v866
      %vm1332 = vcmp.eq.f32.partialorder %v1331, 8.507059e+37
      %v1333 = vand.u32 %v866, 2147483648
      %v1334 = vor.u32 1.1754944e-38, %v1333
      %v1335 = vsel %vm1332, %v1334, %v1330
      %v1336 = vmul.f32 1.0, %v1335
      %v1337 = vrcp.pop %v867
      %v1338 = vmul.f32 %v867, %v1337
      %v1339 = vsub.f32 1.0, %v1338
      %v1340 = vmul.f32 %v1337, %v1339
      %v1341 = vadd.f32 %v1337, %v1340
      %vm1342 = vweird.f32 %v867
      %vm1343 = vweird.f32 %v1337
      %vm1344 = vmor %vm1342, %vm1343
      %v1345 = vsel %vm1344, %v1337, %v1341
      %v1346 = vand.u32 2147483647, %v867
      %vm1347 = vcmp.eq.f32.partialorder %v1346, 8.507059e+37
      %v1348 = vand.u32 %v867, 2147483648
      %v1349 = vor.u32 1.1754944e-38, %v1348
      %v1350 = vsel %vm1347, %v1349, %v1345
      %v1351 = vmul.f32 1.0, %v1350
      %v1352 = vrcp.pop %v868
      %v1353 = vmul.f32 %v868, %v1352
      %v1354 = vsub.f32 1.0, %v1353
      %v1355 = vmul.f32 %v1352, %v1354
      %v1356 = vadd.f32 %v1352, %v1355
      %vm1357 = vweird.f32 %v868
      %vm1358 = vweird.f32 %v1352
      %vm1359 = vmor %vm1357, %vm1358
      %v1360 = vsel %vm1359, %v1352, %v1356
      %v1361 = vand.u32 2147483647, %v868
      %vm1362 = vcmp.eq.f32.partialorder %v1361, 8.507059e+37
      %v1363 = vand.u32 %v868, 2147483648
      %v1364 = vor.u32 1.1754944e-38, %v1363
      %v1365 = vsel %vm1362, %v1364, %v1360
      %v1366 = vmul.f32 1.0, %v1365
      %v1367 = vrcp.pop %v869
      %v1368 = vmul.f32 %v869, %v1367
      %v1369 = vsub.f32 1.0, %v1368
      %v1370 = vmul.f32 %v1367, %v1369
      %v1371 = vadd.f32 %v1367, %v1370
      %vm1372 = vweird.f32 %v869
      %vm1373 = vweird.f32 %v1367
      %vm1374 = vmor %vm1372, %vm1373
      %v1375 = vsel %vm1374, %v1367, %v1371
      %v1376 = vand.u32 2147483647, %v869
      %vm1377 = vcmp.eq.f32.partialorder %v1376, 8.507059e+37
      %v1378 = vand.u32 %v869, 2147483648
      %v1379 = vor.u32 1.1754944e-38, %v1378
      %v1380 = vsel %vm1377, %v1379, %v1375
      %v1381 = vmul.f32 1.0, %v1380
      %v1382 = vrcp.pop %v870
      %v1383 = vmul.f32 %v870, %v1382
      %v1384 = vsub.f32 1.0, %v1383
      %v1385 = vmul.f32 %v1382, %v1384
      %v1386 = vadd.f32 %v1382, %v1385
      %vm1387 = vweird.f32 %v870
      %vm1388 = vweird.f32 %v1382
      %vm1389 = vmor %vm1387, %vm1388
      %v1390 = vsel %vm1389, %v1382, %v1386
      %v1391 = vand.u32 2147483647, %v870
      %vm1392 = vcmp.eq.f32.partialorder %v1391, 8.507059e+37
      %v1393 = vand.u32 %v870, 2147483648
      %v1394 = vor.u32 1.1754944e-38, %v1393
      %v1395 = vsel %vm1392, %v1394, %v1390
      %v1396 = vmul.f32 1.0, %v1395
      %v1397 = vrcp.pop %v871
      %v1398 = vmul.f32 %v871, %v1397
      %v1399 = vsub.f32 1.0, %v1398
      %v1400 = vmul.f32 %v1397, %v1399
      %v1401 = vadd.f32 %v1397, %v1400
      %vm1402 = vweird.f32 %v871
      %vm1403 = vweird.f32 %v1397
      %vm1404 = vmor %vm1402, %vm1403
      %v1405 = vsel %vm1404, %v1397, %v1401
      %v1406 = vand.u32 2147483647, %v871
      %vm1407 = vcmp.eq.f32.partialorder %v1406, 8.507059e+37
      %v1408 = vand.u32 %v871, 2147483648
      %v1409 = vor.u32 1.1754944e-38, %v1408
      %v1410 = vsel %vm1407, %v1409, %v1405
      %v1411 = vmul.f32 1.0, %v1410
      %v1412 = vrcp.pop %v872
      %v1413 = vmul.f32 %v872, %v1412
      %v1414 = vsub.f32 1.0, %v1413
      %v1415 = vmul.f32 %v1412, %v1414
      %v1416 = vadd.f32 %v1412, %v1415
      %vm1417 = vweird.f32 %v872
      %vm1418 = vweird.f32 %v1412
      %vm1419 = vmor %vm1417, %vm1418
      %v1420 = vsel %vm1419, %v1412, %v1416
      %v1421 = vand.u32 2147483647, %v872
      %vm1422 = vcmp.eq.f32.partialorder %v1421, 8.507059e+37
      %v1423 = vand.u32 %v872, 2147483648
      %v1424 = vor.u32 1.1754944e-38, %v1423
      %v1425 = vsel %vm1422, %v1424, %v1420
      %v1426 = vmul.f32 1.0, %v1425
      %v1427 = vrcp.pop %v873
      %v1428 = vmul.f32 %v873, %v1427
      %v1429 = vsub.f32 1.0, %v1428
      %v1430 = vmul.f32 %v1427, %v1429
      %v1431 = vadd.f32 %v1427, %v1430
      %vm1432 = vweird.f32 %v873
      %vm1433 = vweird.f32 %v1427
      %vm1434 = vmor %vm1432, %vm1433
      %v1435 = vsel %vm1434, %v1427, %v1431
      %v1436 = vand.u32 2147483647, %v873
      %vm1437 = vcmp.eq.f32.partialorder %v1436, 8.507059e+37
      %v1438 = vand.u32 %v873, 2147483648
      %v1439 = vor.u32 1.1754944e-38, %v1438
      %v1440 = vsel %vm1437, %v1439, %v1435
      %v1441 = vmul.f32 1.0, %v1440
      %v1442 = vrcp.pop %v874
      %v1443 = vmul.f32 %v874, %v1442
      %v1444 = vsub.f32 1.0, %v1443
      %v1445 = vmul.f32 %v1442, %v1444
      %v1446 = vadd.f32 %v1442, %v1445
      %vm1447 = vweird.f32 %v874
      %vm1448 = vweird.f32 %v1442
      %vm1449 = vmor %vm1447, %vm1448
      %v1450 = vsel %vm1449, %v1442, %v1446
      %v1451 = vand.u32 2147483647, %v874
      %vm1452 = vcmp.eq.f32.partialorder %v1451, 8.507059e+37
      %v1453 = vand.u32 %v874, 2147483648
      %v1454 = vor.u32 1.1754944e-38, %v1453
      %v1455 = vsel %vm1452, %v1454, %v1450
      %v1456 = vmul.f32 1.0, %v1455
      %v1457 = vrcp.pop %v875
      %v1458 = vmul.f32 %v875, %v1457
      %v1459 = vsub.f32 1.0, %v1458
      %v1460 = vmul.f32 %v1457, %v1459
      %v1461 = vadd.f32 %v1457, %v1460
      %vm1462 = vweird.f32 %v875
      %vm1463 = vweird.f32 %v1457
      %vm1464 = vmor %vm1462, %vm1463
      %v1465 = vsel %vm1464, %v1457, %v1461
      %v1466 = vand.u32 2147483647, %v875
      %vm1467 = vcmp.eq.f32.partialorder %v1466, 8.507059e+37
      %v1468 = vand.u32 %v875, 2147483648
      %v1469 = vor.u32 1.1754944e-38, %v1468
      %v1470 = vsel %vm1467, %v1469, %v1465
      %v1471 = vmul.f32 1.0, %v1470
      %v1472 = vrcp.pop %v876
      %v1473 = vmul.f32 %v876, %v1472
      %v1474 = vsub.f32 1.0, %v1473
      %v1475 = vmul.f32 %v1472, %v1474
      %v1476 = vadd.f32 %v1472, %v1475
      %vm1477 = vweird.f32 %v876
      %vm1478 = vweird.f32 %v1472
      %vm1479 = vmor %vm1477, %vm1478
      %v1480 = vsel %vm1479, %v1472, %v1476
      %v1481 = vand.u32 2147483647, %v876
      %vm1482 = vcmp.eq.f32.partialorder %v1481, 8.507059e+37
      %v1483 = vand.u32 %v876, 2147483648
      %v1484 = vor.u32 1.1754944e-38, %v1483
      %v1485 = vsel %vm1482, %v1484, %v1480
      %v1486 = vmul.f32 1.0, %v1485
      %v1487 = vrcp.pop %v877
      %v1488 = vmul.f32 %v877, %v1487
      %v1489 = vsub.f32 1.0, %v1488
      %v1490 = vmul.f32 %v1487, %v1489
      %v1491 = vadd.f32 %v1487, %v1490
      %vm1492 = vweird.f32 %v877
      %vm1493 = vweird.f32 %v1487
      %vm1494 = vmor %vm1492, %vm1493
      %v1495 = vsel %vm1494, %v1487, %v1491
      %v1496 = vand.u32 2147483647, %v877
      %vm1497 = vcmp.eq.f32.partialorder %v1496, 8.507059e+37
      %v1498 = vand.u32 %v877, 2147483648
      %v1499 = vor.u32 1.1754944e-38, %v1498
      %v1500 = vsel %vm1497, %v1499, %v1495
      %v1501 = vmul.f32 1.0, %v1500
      %v1502 = vrcp.pop %v878
      %v1503 = vmul.f32 %v878, %v1502
      %v1504 = vsub.f32 1.0, %v1503
      %v1505 = vmul.f32 %v1502, %v1504
      %v1506 = vadd.f32 %v1502, %v1505
      %vm1507 = vweird.f32 %v878
      %vm1508 = vweird.f32 %v1502
      %vm1509 = vmor %vm1507, %vm1508
      %v1510 = vsel %vm1509, %v1502, %v1506
      %v1511 = vand.u32 2147483647, %v878
      %vm1512 = vcmp.eq.f32.partialorder %v1511, 8.507059e+37
      %v1513 = vand.u32 %v878, 2147483648
      %v1514 = vor.u32 1.1754944e-38, %v1513
      %v1515 = vsel %vm1512, %v1514, %v1510
      %v1516 = vmul.f32 1.0, %v1515
      %v1517 = vrcp.pop %v879
      %v1518 = vmul.f32 %v879, %v1517
      %v1519 = vsub.f32 1.0, %v1518
      %v1520 = vmul.f32 %v1517, %v1519
      %v1521 = vadd.f32 %v1517, %v1520
      %vm1522 = vweird.f32 %v879
      %vm1523 = vweird.f32 %v1517
      %vm1524 = vmor %vm1522, %vm1523
      %v1525 = vsel %vm1524, %v1517, %v1521
      %v1526 = vand.u32 2147483647, %v879
      %vm1527 = vcmp.eq.f32.partialorder %v1526, 8.507059e+37
      %v1528 = vand.u32 %v879, 2147483648
      %v1529 = vor.u32 1.1754944e-38, %v1528
      %v1530 = vsel %vm1527, %v1529, %v1525
      %v1531 = vmul.f32 1.0, %v1530
      %v1532 = vrcp.pop %v880
      %v1533 = vmul.f32 %v880, %v1532
      %v1534 = vsub.f32 1.0, %v1533
      %v1535 = vmul.f32 %v1532, %v1534
      %v1536 = vadd.f32 %v1532, %v1535
      %vm1537 = vweird.f32 %v880
      %vm1538 = vweird.f32 %v1532
      %vm1539 = vmor %vm1537, %vm1538
      %v1540 = vsel %vm1539, %v1532, %v1536
      %v1541 = vand.u32 2147483647, %v880
      %vm1542 = vcmp.eq.f32.partialorder %v1541, 8.507059e+37
      %v1543 = vand.u32 %v880, 2147483648
      %v1544 = vor.u32 1.1754944e-38, %v1543
      %v1545 = vsel %vm1542, %v1544, %v1540
      %v1546 = vmul.f32 1.0, %v1545
      %v1547 = vrcp.pop %v881
      %v1548 = vmul.f32 %v881, %v1547
      %v1549 = vsub.f32 1.0, %v1548
      %v1550 = vmul.f32 %v1547, %v1549
      %v1551 = vadd.f32 %v1547, %v1550
      %vm1552 = vweird.f32 %v881
      %vm1553 = vweird.f32 %v1547
      %vm1554 = vmor %vm1552, %vm1553
      %v1555 = vsel %vm1554, %v1547, %v1551
      %v1556 = vand.u32 2147483647, %v881
      %vm1557 = vcmp.eq.f32.partialorder %v1556, 8.507059e+37
      %v1558 = vand.u32 %v881, 2147483648
      %v1559 = vor.u32 1.1754944e-38, %v1558
      %v1560 = vsel %vm1557, %v1559, %v1555
      %v1561 = vmul.f32 1.0, %v1560
      %v1562 = vrcp.pop %v882
      %v1563 = vmul.f32 %v882, %v1562
      %v1564 = vsub.f32 1.0, %v1563
      %v1565 = vmul.f32 %v1562, %v1564
      %v1566 = vadd.f32 %v1562, %v1565
      %vm1567 = vweird.f32 %v882
      %vm1568 = vweird.f32 %v1562
      %vm1569 = vmor %vm1567, %vm1568
      %v1570 = vsel %vm1569, %v1562, %v1566
      %v1571 = vand.u32 2147483647, %v882
      %vm1572 = vcmp.eq.f32.partialorder %v1571, 8.507059e+37
      %v1573 = vand.u32 %v882, 2147483648
      %v1574 = vor.u32 1.1754944e-38, %v1573
      %v1575 = vsel %vm1572, %v1574, %v1570
      %v1576 = vmul.f32 1.0, %v1575
      %v1577 = vrcp.pop %v883
      %v1578 = vmul.f32 %v883, %v1577
      %v1579 = vsub.f32 1.0, %v1578
      %v1580 = vmul.f32 %v1577, %v1579
      %v1581 = vadd.f32 %v1577, %v1580
      %vm1582 = vweird.f32 %v883
      %vm1583 = vweird.f32 %v1577
      %vm1584 = vmor %vm1582, %vm1583
      %v1585 = vsel %vm1584, %v1577, %v1581
      %v1586 = vand.u32 2147483647, %v883
      %vm1587 = vcmp.eq.f32.partialorder %v1586, 8.507059e+37
      %v1588 = vand.u32 %v883, 2147483648
      %v1589 = vor.u32 1.1754944e-38, %v1588
      %v1590 = vsel %vm1587, %v1589, %v1585
      %v1591 = vmul.f32 1.0, %v1590
      %v1592 = vrcp.pop %v884
      %v1593 = vmul.f32 %v884, %v1592
      %v1594 = vsub.f32 1.0, %v1593
      %v1595 = vmul.f32 %v1592, %v1594
      %v1596 = vadd.f32 %v1592, %v1595
      %vm1597 = vweird.f32 %v884
      %vm1598 = vweird.f32 %v1592
      %vm1599 = vmor %vm1597, %vm1598
      %v1600 = vsel %vm1599, %v1592, %v1596
      %v1601 = vand.u32 2147483647, %v884
      %vm1602 = vcmp.eq.f32.partialorder %v1601, 8.507059e+37
      %v1603 = vand.u32 %v884, 2147483648
      %v1604 = vor.u32 1.1754944e-38, %v1603
      %v1605 = vsel %vm1602, %v1604, %v1600
      %v1606 = vmul.f32 1.0, %v1605
      %v1607 = vrcp.pop %v885
      %v1608 = vmul.f32 %v885, %v1607
      %v1609 = vsub.f32 1.0, %v1608
      %v1610 = vmul.f32 %v1607, %v1609
      %v1611 = vadd.f32 %v1607, %v1610
      %vm1612 = vweird.f32 %v885
      %vm1613 = vweird.f32 %v1607
      %vm1614 = vmor %vm1612, %vm1613
      %v1615 = vsel %vm1614, %v1607, %v1611
      %v1616 = vand.u32 2147483647, %v885
      %vm1617 = vcmp.eq.f32.partialorder %v1616, 8.507059e+37
      %v1618 = vand.u32 %v885, 2147483648
      %v1619 = vor.u32 1.1754944e-38, %v1618
      %v1620 = vsel %vm1617, %v1619, %v1615
      %v1621 = vmul.f32 1.0, %v1620
      %v1622 = vrcp.pop %v886
      %v1623 = vmul.f32 %v886, %v1622
      %v1624 = vsub.f32 1.0, %v1623
      %v1625 = vmul.f32 %v1622, %v1624
      %v1626 = vadd.f32 %v1622, %v1625
      %vm1627 = vweird.f32 %v886
      %vm1628 = vweird.f32 %v1622
      %vm1629 = vmor %vm1627, %vm1628
      %v1630 = vsel %vm1629, %v1622, %v1626
      %v1631 = vand.u32 2147483647, %v886
      %vm1632 = vcmp.eq.f32.partialorder %v1631, 8.507059e+37
      %v1633 = vand.u32 %v886, 2147483648
      %v1634 = vor.u32 1.1754944e-38, %v1633
      %v1635 = vsel %vm1632, %v1634, %v1630
      %v1636 = vmul.f32 1.0, %v1635
      %v1637 = vrcp.pop %v887
      %v1638 = vmul.f32 %v887, %v1637
      %v1639 = vsub.f32 1.0, %v1638
      %v1640 = vmul.f32 %v1637, %v1639
      %v1641 = vadd.f32 %v1637, %v1640
      %vm1642 = vweird.f32 %v887
      %vm1643 = vweird.f32 %v1637
      %vm1644 = vmor %vm1642, %vm1643
      %v1645 = vsel %vm1644, %v1637, %v1641
      %v1646 = vand.u32 2147483647, %v887
      %vm1647 = vcmp.eq.f32.partialorder %v1646, 8.507059e+37
      %v1648 = vand.u32 %v887, 2147483648
      %v1649 = vor.u32 1.1754944e-38, %v1648
      %v1650 = vsel %vm1647, %v1649, %v1645
      %v1651 = vmul.f32 1.0, %v1650
      %v1652 = vrcp.pop %v888
      %v1653 = vmul.f32 %v888, %v1652
      %v1654 = vsub.f32 1.0, %v1653
      %v1655 = vmul.f32 %v1652, %v1654
      %v1656 = vadd.f32 %v1652, %v1655
      %vm1657 = vweird.f32 %v888
      %vm1658 = vweird.f32 %v1652
      %vm1659 = vmor %vm1657, %vm1658
      %v1660 = vsel %vm1659, %v1652, %v1656
      %v1661 = vand.u32 2147483647, %v888
      %vm1662 = vcmp.eq.f32.partialorder %v1661, 8.507059e+37
      %v1663 = vand.u32 %v888, 2147483648
      %v1664 = vor.u32 1.1754944e-38, %v1663
      %v1665 = vsel %vm1662, %v1664, %v1660
      %v1666 = vmul.f32 1.0, %v1665
      %v1667 = vrcp.pop %v889
      %v1668 = vmul.f32 %v889, %v1667
      %v1669 = vsub.f32 1.0, %v1668
      %v1670 = vmul.f32 %v1667, %v1669
      %v1671 = vadd.f32 %v1667, %v1670
      %vm1672 = vweird.f32 %v889
      %vm1673 = vweird.f32 %v1667
      %vm1674 = vmor %vm1672, %vm1673
      %v1675 = vsel %vm1674, %v1667, %v1671
      %v1676 = vand.u32 2147483647, %v889
      %vm1677 = vcmp.eq.f32.partialorder %v1676, 8.507059e+37
      %v1678 = vand.u32 %v889, 2147483648
      %v1679 = vor.u32 1.1754944e-38, %v1678
      %v1680 = vsel %vm1677, %v1679, %v1675
      %v1681 = vmul.f32 1.0, %v1680
      %v1682 = vrcp.pop %v890
      %v1683 = vmul.f32 %v890, %v1682
      %v1684 = vsub.f32 1.0, %v1683
      %v1685 = vmul.f32 %v1682, %v1684
      %v1686 = vadd.f32 %v1682, %v1685
      %vm1687 = vweird.f32 %v890
      %vm1688 = vweird.f32 %v1682
      %vm1689 = vmor %vm1687, %vm1688
      %v1690 = vsel %vm1689, %v1682, %v1686
      %v1691 = vand.u32 2147483647, %v890
      %vm1692 = vcmp.eq.f32.partialorder %v1691, 8.507059e+37
      %v1693 = vand.u32 %v890, 2147483648
      %v1694 = vor.u32 1.1754944e-38, %v1693
      %v1695 = vsel %vm1692, %v1694, %v1690
      %v1696 = vmul.f32 1.0, %v1695
      %v1697 = vrcp.pop %v891
      %v1698 = vmul.f32 %v891, %v1697
      %v1699 = vsub.f32 1.0, %v1698
      %v1700 = vmul.f32 %v1697, %v1699
      %v1701 = vadd.f32 %v1697, %v1700
      %vm1702 = vweird.f32 %v891
      %vm1703 = vweird.f32 %v1697
      %vm1704 = vmor %vm1702, %vm1703
      %v1705 = vsel %vm1704, %v1697, %v1701
      %v1706 = vand.u32 2147483647, %v891
      %vm1707 = vcmp.eq.f32.partialorder %v1706, 8.507059e+37
      %v1708 = vand.u32 %v891, 2147483648
      %v1709 = vor.u32 1.1754944e-38, %v1708
      %v1710 = vsel %vm1707, %v1709, %v1705
      %v1711 = vmul.f32 1.0, %v1710
      %v1712 = vrcp.pop %v892
      %v1713 = vmul.f32 %v892, %v1712
      %v1714 = vsub.f32 1.0, %v1713
      %v1715 = vmul.f32 %v1712, %v1714
      %v1716 = vadd.f32 %v1712, %v1715
      %vm1717 = vweird.f32 %v892
      %vm1718 = vweird.f32 %v1712
      %vm1719 = vmor %vm1717, %vm1718
      %v1720 = vsel %vm1719, %v1712, %v1716
      %v1721 = vand.u32 2147483647, %v892
      %vm1722 = vcmp.eq.f32.partialorder %v1721, 8.507059e+37
      %v1723 = vand.u32 %v892, 2147483648
      %v1724 = vor.u32 1.1754944e-38, %v1723
      %v1725 = vsel %vm1722, %v1724, %v1720
      %v1726 = vmul.f32 1.0, %v1725
      %v1727 = vrcp.pop %v893
      %v1728 = vmul.f32 %v893, %v1727
      %v1729 = vsub.f32 1.0, %v1728
      %v1730 = vmul.f32 %v1727, %v1729
      %v1731 = vadd.f32 %v1727, %v1730
      %vm1732 = vweird.f32 %v893
      %vm1733 = vweird.f32 %v1727
      %vm1734 = vmor %vm1732, %vm1733
      %v1735 = vsel %vm1734, %v1727, %v1731
      %v1736 = vand.u32 2147483647, %v893
      %vm1737 = vcmp.eq.f32.partialorder %v1736, 8.507059e+37
      %v1738 = vand.u32 %v893, 2147483648
      %v1739 = vor.u32 1.1754944e-38, %v1738
      %v1740 = vsel %vm1737, %v1739, %v1735
      %v1741 = vmul.f32 1.0, %v1740
      %v1742 = vrcp.pop %v894
      %v1743 = vmul.f32 %v894, %v1742
      %v1744 = vsub.f32 1.0, %v1743
      %v1745 = vmul.f32 %v1742, %v1744
      %v1746 = vadd.f32 %v1742, %v1745
      %vm1747 = vweird.f32 %v894
      %vm1748 = vweird.f32 %v1742
      %vm1749 = vmor %vm1747, %vm1748
      %v1750 = vsel %vm1749, %v1742, %v1746
      %v1751 = vand.u32 2147483647, %v894
      %vm1752 = vcmp.eq.f32.partialorder %v1751, 8.507059e+37
      %v1753 = vand.u32 %v894, 2147483648
      %v1754 = vor.u32 1.1754944e-38, %v1753
      %v1755 = vsel %vm1752, %v1754, %v1750
      %v1756 = vmul.f32 1.0, %v1755
      %v1757 = vrcp.pop %v895
      %v1758 = vmul.f32 %v895, %v1757
      %v1759 = vsub.f32 1.0, %v1758
      %v1760 = vmul.f32 %v1757, %v1759
      %v1761 = vadd.f32 %v1757, %v1760
      %vm1762 = vweird.f32 %v895
      %vm1763 = vweird.f32 %v1757
      %vm1764 = vmor %vm1762, %vm1763
      %v1765 = vsel %vm1764, %v1757, %v1761
      %v1766 = vand.u32 2147483647, %v895
      %vm1767 = vcmp.eq.f32.partialorder %v1766, 8.507059e+37
      %v1768 = vand.u32 %v895, 2147483648
      %v1769 = vor.u32 1.1754944e-38, %v1768
      %v1770 = vsel %vm1767, %v1769, %v1765
      %v1771 = vmul.f32 1.0, %v1770
      %v1772 = vrcp.pop %v896
      %v1773 = vmul.f32 %v896, %v1772
      %v1774 = vsub.f32 1.0, %v1773
      %v1775 = vmul.f32 %v1772, %v1774
      %v1776 = vadd.f32 %v1772, %v1775
      %vm1777 = vweird.f32 %v896
      %vm1778 = vweird.f32 %v1772
      %vm1779 = vmor %vm1777, %vm1778
      %v1780 = vsel %vm1779, %v1772, %v1776
      %v1781 = vand.u32 2147483647, %v896
      %vm1782 = vcmp.eq.f32.partialorder %v1781, 8.507059e+37
      %v1783 = vand.u32 %v896, 2147483648
      %v1784 = vor.u32 1.1754944e-38, %v1783
      %v1785 = vsel %vm1782, %v1784, %v1780
      %v1786 = vmul.f32 1.0, %v1785
      %v1787 = vrcp.pop %v897
      %v1788 = vmul.f32 %v897, %v1787
      %v1789 = vsub.f32 1.0, %v1788
      %v1790 = vmul.f32 %v1787, %v1789
      %v1791 = vadd.f32 %v1787, %v1790
      %vm1792 = vweird.f32 %v897
      %vm1793 = vweird.f32 %v1787
      %vm1794 = vmor %vm1792, %vm1793
      %v1795 = vsel %vm1794, %v1787, %v1791
      %v1796 = vand.u32 2147483647, %v897
      %vm1797 = vcmp.eq.f32.partialorder %v1796, 8.507059e+37
      %v1798 = vand.u32 %v897, 2147483648
      %v1799 = vor.u32 1.1754944e-38, %v1798
      %v1800 = vsel %vm1797, %v1799, %v1795
      %v1801 = vmul.f32 1.0, %v1800
      %v1802 = vrcp.pop %v898
      %v1803 = vmul.f32 %v898, %v1802
      %v1804 = vsub.f32 1.0, %v1803
      %v1805 = vmul.f32 %v1802, %v1804
      %v1806 = vadd.f32 %v1802, %v1805
      %vm1807 = vweird.f32 %v898
      %vm1808 = vweird.f32 %v1802
      %vm1809 = vmor %vm1807, %vm1808
      %v1810 = vsel %vm1809, %v1802, %v1806
      %v1811 = vand.u32 2147483647, %v898
      %vm1812 = vcmp.eq.f32.partialorder %v1811, 8.507059e+37
      %v1813 = vand.u32 %v898, 2147483648
      %v1814 = vor.u32 1.1754944e-38, %v1813
      %v1815 = vsel %vm1812, %v1814, %v1810
      %v1816 = vmul.f32 1.0, %v1815
      %v1817 = vrcp.pop %v899
      %v1818 = vmul.f32 %v899, %v1817
      %v1819 = vsub.f32 1.0, %v1818
      %v1820 = vmul.f32 %v1817, %v1819
      %v1821 = vadd.f32 %v1817, %v1820
      %vm1822 = vweird.f32 %v899
      %vm1823 = vweird.f32 %v1817
      %vm1824 = vmor %vm1822, %vm1823
      %v1825 = vsel %vm1824, %v1817, %v1821
      %v1826 = vand.u32 2147483647, %v899
      %vm1827 = vcmp.eq.f32.partialorder %v1826, 8.507059e+37
      %v1828 = vand.u32 %v899, 2147483648
      %v1829 = vor.u32 1.1754944e-38, %v1828
      %v1830 = vsel %vm1827, %v1829, %v1825
      %v1831 = vmul.f32 1.0, %v1830
      %v1832 = vrcp.pop %v900
      %v1833 = vmul.f32 %v900, %v1832
      %v1834 = vsub.f32 1.0, %v1833
      %v1835 = vmul.f32 %v1832, %v1834
      %v1836 = vadd.f32 %v1832, %v1835
      %vm1837 = vweird.f32 %v900
      %vm1838 = vweird.f32 %v1832
      %vm1839 = vmor %vm1837, %vm1838
      %v1840 = vsel %vm1839, %v1832, %v1836
      %v1841 = vand.u32 2147483647, %v900
      %vm1842 = vcmp.eq.f32.partialorder %v1841, 8.507059e+37
      %v1843 = vand.u32 %v900, 2147483648
      %v1844 = vor.u32 1.1754944e-38, %v1843
      %v1845 = vsel %vm1842, %v1844, %v1840
      %v1846 = vmul.f32 1.0, %v1845
      %v1847 = vrcp.pop %v901
      %v1848 = vmul.f32 %v901, %v1847
      %v1849 = vsub.f32 1.0, %v1848
      %v1850 = vmul.f32 %v1847, %v1849
      %v1851 = vadd.f32 %v1847, %v1850
      %vm1852 = vweird.f32 %v901
      %vm1853 = vweird.f32 %v1847
      %vm1854 = vmor %vm1852, %vm1853
      %v1855 = vsel %vm1854, %v1847, %v1851
      %v1856 = vand.u32 2147483647, %v901
      %vm1857 = vcmp.eq.f32.partialorder %v1856, 8.507059e+37
      %v1858 = vand.u32 %v901, 2147483648
      %v1859 = vor.u32 1.1754944e-38, %v1858
      %v1860 = vsel %vm1857, %v1859, %v1855
      %v1861 = vmul.f32 1.0, %v1860
      %v1862 = vtanh.pop %v454
      %v1863 = vtanh.pop %v457
      %v1864 = vtanh.pop %v460
      %v1865 = vtanh.pop %v463
      %v1866 = vtanh.pop %v466
      %v1867 = vtanh.pop %v469
      %v1868 = vtanh.pop %v472
      %v1869 = vtanh.pop %v475
      %v1870 = vtanh.pop %v478
      %v1871 = vtanh.pop %v481
      %v1872 = vtanh.pop %v484
      %v1873 = vtanh.pop %v487
      %v1874 = vtanh.pop %v490
      %v1875 = vtanh.pop %v493
      %v1876 = vtanh.pop %v496
      %v1877 = vtanh.pop %v499
      %v1878 = vtanh.pop %v502
      %v1879 = vtanh.pop %v505
      %v1880 = vtanh.pop %v508
      %v1881 = vtanh.pop %v511
      %v1882 = vtanh.pop %v514
      %v1883 = vtanh.pop %v517
      %v1884 = vtanh.pop %v520
      %v1885 = vtanh.pop %v523
      %v1886 = vtanh.pop %v526
      %v1887 = vtanh.pop %v529
      %v1888 = vtanh.pop %v532
      %v1889 = vtanh.pop %v535
      %v1890 = vtanh.pop %v538
      %v1891 = vtanh.pop %v541
      %v1892 = vtanh.pop %v544
      %v1893 = vtanh.pop %v547
      %v1894 = vtanh.pop %v550
      %v1895 = vtanh.pop %v553
      %v1896 = vtanh.pop %v556
      %v1897 = vtanh.pop %v559
      %v1898 = vtanh.pop %v562
      %v1899 = vtanh.pop %v565
      %v1900 = vtanh.pop %v568
      %v1901 = vtanh.pop %v571
      %v1902 = vtanh.pop %v574
      %v1903 = vtanh.pop %v577
      %v1904 = vtanh.pop %v580
      %v1905 = vtanh.pop %v583
      %v1906 = vtanh.pop %v586
      %v1907 = vtanh.pop %v589
      %v1908 = vtanh.pop %v592
      %v1909 = vtanh.pop %v595
      %v1910 = vtanh.pop %v598
      %v1911 = vtanh.pop %v601
      %v1912 = vtanh.pop %v604
      %v1913 = vtanh.pop %v607
      %v1914 = vtanh.pop %v610
      %v1915 = vtanh.pop %v613
      %v1916 = vtanh.pop %v616
      %v1917 = vtanh.pop %v619
      %v1918 = vtanh.pop %v622
      %v1919 = vtanh.pop %v625
      %v1920 = vtanh.pop %v628
      %v1921 = vtanh.pop %v631
      %v1922 = vtanh.pop %v634
      %v1923 = vtanh.pop %v637
      %v1924 = vtanh.pop %v640
      %v1925 = vtanh.pop %v643
      %1990 = vrot.lane.b32.xlu0 %v1862, 64
      %v1991 = vpop.permute.xlu0 %1990
      %1992 = vrot.lane.b32.xlu0 %v1863, 64
      %v1993 = vpop.permute.xlu0 %1992
      %1994 = vrot.lane.b32.xlu0 %v1864, 64
      %v1995 = vpop.permute.xlu0 %1994
      %1996 = vrot.lane.b32.xlu0 %v1865, 64
      %v1997 = vpop.permute.xlu0 %1996
      %1998 = vrot.lane.b32.xlu0 %v1866, 64
      %v1999 = vpop.permute.xlu0 %1998
      %2000 = vrot.lane.b32.xlu0 %v1867, 64
      %v2001 = vpop.permute.xlu0 %2000
      %2002 = vrot.lane.b32.xlu0 %v1868, 64
      %v2003 = vpop.permute.xlu0 %2002
      %2004 = vrot.lane.b32.xlu0 %v1869, 64
      %v2005 = vpop.permute.xlu0 %2004
      %2006 = vrot.lane.b32.xlu0 %v1870, 64
      %v2007 = vpop.permute.xlu0 %2006
      %2008 = vrot.lane.b32.xlu0 %v1871, 64
      %v2009 = vpop.permute.xlu0 %2008
      %2010 = vrot.lane.b32.xlu0 %v1872, 64
      %v2011 = vpop.permute.xlu0 %2010
      %2012 = vrot.lane.b32.xlu0 %v1873, 64
      %v2013 = vpop.permute.xlu0 %2012
      %2014 = vrot.lane.b32.xlu0 %v1874, 64
      %v2015 = vpop.permute.xlu0 %2014
      %2016 = vrot.lane.b32.xlu0 %v1875, 64
      %v2017 = vpop.permute.xlu0 %2016
      %2018 = vrot.lane.b32.xlu0 %v1876, 64
      %v2019 = vpop.permute.xlu0 %2018
      %2020 = vrot.lane.b32.xlu0 %v1877, 64
      %v2021 = vpop.permute.xlu0 %2020
      %2022 = vrot.lane.b32.xlu0 %v1878, 64
      %v2023 = vpop.permute.xlu0 %2022
      %2024 = vrot.lane.b32.xlu0 %v1879, 64
      %v2025 = vpop.permute.xlu0 %2024
      %2026 = vrot.lane.b32.xlu0 %v1880, 64
      %v2027 = vpop.permute.xlu0 %2026
      %2028 = vrot.lane.b32.xlu0 %v1881, 64
      %v2029 = vpop.permute.xlu0 %2028
      %2030 = vrot.lane.b32.xlu0 %v1882, 64
      %v2031 = vpop.permute.xlu0 %2030
      %2032 = vrot.lane.b32.xlu0 %v1883, 64
      %v2033 = vpop.permute.xlu0 %2032
      %2034 = vrot.lane.b32.xlu0 %v1884, 64
      %v2035 = vpop.permute.xlu0 %2034
      %2036 = vrot.lane.b32.xlu0 %v1885, 64
      %v2037 = vpop.permute.xlu0 %2036
      %2038 = vrot.lane.b32.xlu0 %v1886, 64
      %v2039 = vpop.permute.xlu0 %2038
      %2040 = vrot.lane.b32.xlu0 %v1887, 64
      %v2041 = vpop.permute.xlu0 %2040
      %2042 = vrot.lane.b32.xlu0 %v1888, 64
      %v2043 = vpop.permute.xlu0 %2042
      %2044 = vrot.lane.b32.xlu0 %v1889, 64
      %v2045 = vpop.permute.xlu0 %2044
      %2046 = vrot.lane.b32.xlu0 %v1890, 64
      %v2047 = vpop.permute.xlu0 %2046
      %2048 = vrot.lane.b32.xlu0 %v1891, 64
      %v2049 = vpop.permute.xlu0 %2048
      %2050 = vrot.lane.b32.xlu0 %v1892, 64
      %v2051 = vpop.permute.xlu0 %2050
      %2052 = vrot.lane.b32.xlu0 %v1893, 64
      %v2053 = vpop.permute.xlu0 %2052
      %2054 = vrot.lane.b32.xlu0 %v1894, 64
      %v2055 = vpop.permute.xlu0 %2054
      %2056 = vrot.lane.b32.xlu0 %v1895, 64
      %v2057 = vpop.permute.xlu0 %2056
      %2058 = vrot.lane.b32.xlu0 %v1896, 64
      %v2059 = vpop.permute.xlu0 %2058
      %2060 = vrot.lane.b32.xlu0 %v1897, 64
      %v2061 = vpop.permute.xlu0 %2060
      %2062 = vrot.lane.b32.xlu0 %v1898, 64
      %v2063 = vpop.permute.xlu0 %2062
      %2064 = vrot.lane.b32.xlu0 %v1899, 64
      %v2065 = vpop.permute.xlu0 %2064
      %2066 = vrot.lane.b32.xlu0 %v1900, 64
      %v2067 = vpop.permute.xlu0 %2066
      %2068 = vrot.lane.b32.xlu0 %v1901, 64
      %v2069 = vpop.permute.xlu0 %2068
      %2070 = vrot.lane.b32.xlu0 %v1902, 64
      %v2071 = vpop.permute.xlu0 %2070
      %2072 = vrot.lane.b32.xlu0 %v1903, 64
      %v2073 = vpop.permute.xlu0 %2072
      %2074 = vrot.lane.b32.xlu0 %v1904, 64
      %v2075 = vpop.permute.xlu0 %2074
      %2076 = vrot.lane.b32.xlu0 %v1905, 64
      %v2077 = vpop.permute.xlu0 %2076
      %2078 = vrot.lane.b32.xlu0 %v1906, 64
      %v2079 = vpop.permute.xlu0 %2078
      %2080 = vrot.lane.b32.xlu0 %v1907, 64
      %v2081 = vpop.permute.xlu0 %2080
      %2082 = vrot.lane.b32.xlu0 %v1908, 64
      %v2083 = vpop.permute.xlu0 %2082
      %2084 = vrot.lane.b32.xlu0 %v1909, 64
      %v2085 = vpop.permute.xlu0 %2084
      %2086 = vrot.lane.b32.xlu0 %v1910, 64
      %v2087 = vpop.permute.xlu0 %2086
      %2088 = vrot.lane.b32.xlu0 %v1911, 64
      %v2089 = vpop.permute.xlu0 %2088
      %2090 = vrot.lane.b32.xlu0 %v1912, 64
      %v2091 = vpop.permute.xlu0 %2090
      %2092 = vrot.lane.b32.xlu0 %v1913, 64
      %v2093 = vpop.permute.xlu0 %2092
      %2094 = vrot.lane.b32.xlu0 %v1914, 64
      %v2095 = vpop.permute.xlu0 %2094
      %2096 = vrot.lane.b32.xlu0 %v1915, 64
      %v2097 = vpop.permute.xlu0 %2096
      %2098 = vrot.lane.b32.xlu0 %v1916, 64
      %v2099 = vpop.permute.xlu0 %2098
      %2100 = vrot.lane.b32.xlu0 %v1917, 64
      %v2101 = vpop.permute.xlu0 %2100
      %2102 = vrot.lane.b32.xlu0 %v1918, 64
      %v2103 = vpop.permute.xlu0 %2102
      %2104 = vrot.lane.b32.xlu0 %v1919, 64
      %v2105 = vpop.permute.xlu0 %2104
      %2106 = vrot.lane.b32.xlu0 %v1920, 64
      %v2107 = vpop.permute.xlu0 %2106
      %2108 = vrot.lane.b32.xlu0 %v1921, 64
      %v2109 = vpop.permute.xlu0 %2108
      %2110 = vrot.lane.b32.xlu0 %v1922, 64
      %v2111 = vpop.permute.xlu0 %2110
      %2112 = vrot.lane.b32.xlu0 %v1923, 64
      %v2113 = vpop.permute.xlu0 %2112
      %2114 = vrot.lane.b32.xlu0 %v1924, 64
      %v2115 = vpop.permute.xlu0 %2114
      %2116 = vrot.lane.b32.xlu0 %v1925, 64
      %v2117 = vpop.permute.xlu0 %2116
      %v2182 = vmul.f32 %v916, %v1991
      %v2183 = vmul.f32 %v931, %v1993
      %v2184 = vmul.f32 %v946, %v1995
      %v2185 = vmul.f32 %v961, %v1997
      %v2186 = vmul.f32 %v976, %v1999
      %v2187 = vmul.f32 %v991, %v2001
      %v2188 = vmul.f32 %v1006, %v2003
      %v2189 = vmul.f32 %v1021, %v2005
      %v2190 = vmul.f32 %v1036, %v2007
      %v2191 = vmul.f32 %v1051, %v2009
      %v2192 = vmul.f32 %v1066, %v2011
      %v2193 = vmul.f32 %v1081, %v2013
      %v2194 = vmul.f32 %v1096, %v2015
      %v2195 = vmul.f32 %v1111, %v2017
      %v2196 = vmul.f32 %v1126, %v2019
      %v2197 = vmul.f32 %v1141, %v2021
      %v2198 = vmul.f32 %v1156, %v2023
      %v2199 = vmul.f32 %v1171, %v2025
      %v2200 = vmul.f32 %v1186, %v2027
      %v2201 = vmul.f32 %v1201, %v2029
      %v2202 = vmul.f32 %v1216, %v2031
      %v2203 = vmul.f32 %v1231, %v2033
      %v2204 = vmul.f32 %v1246, %v2035
      %v2205 = vmul.f32 %v1261, %v2037
      %v2206 = vmul.f32 %v1276, %v2039
      %v2207 = vmul.f32 %v1291, %v2041
      %v2208 = vmul.f32 %v1306, %v2043
      %v2209 = vmul.f32 %v1321, %v2045
      %v2210 = vmul.f32 %v1336, %v2047
      %v2211 = vmul.f32 %v1351, %v2049
      %v2212 = vmul.f32 %v1366, %v2051
      %v2213 = vmul.f32 %v1381, %v2053
      %v2214 = vmul.f32 %v1396, %v2055
      %v2215 = vmul.f32 %v1411, %v2057
      %v2216 = vmul.f32 %v1426, %v2059
      %v2217 = vmul.f32 %v1441, %v2061
      %v2218 = vmul.f32 %v1456, %v2063
      %v2219 = vmul.f32 %v1471, %v2065
      %v2220 = vmul.f32 %v1486, %v2067
      %v2221 = vmul.f32 %v1501, %v2069
      %v2222 = vmul.f32 %v1516, %v2071
      %v2223 = vmul.f32 %v1531, %v2073
      %v2224 = vmul.f32 %v1546, %v2075
      %v2225 = vmul.f32 %v1561, %v2077
      %v2226 = vmul.f32 %v1576, %v2079
      %v2227 = vmul.f32 %v1591, %v2081
      %v2228 = vmul.f32 %v1606, %v2083
      %v2229 = vmul.f32 %v1621, %v2085
      %v2230 = vmul.f32 %v1636, %v2087
      %v2231 = vmul.f32 %v1651, %v2089
      %v2232 = vmul.f32 %v1666, %v2091
      %v2233 = vmul.f32 %v1681, %v2093
      %v2234 = vmul.f32 %v1696, %v2095
      %v2235 = vmul.f32 %v1711, %v2097
      %v2236 = vmul.f32 %v1726, %v2099
      %v2237 = vmul.f32 %v1741, %v2101
      %v2238 = vmul.f32 %v1756, %v2103
      %v2239 = vmul.f32 %v1771, %v2105
      %v2240 = vmul.f32 %v1786, %v2107
      %v2241 = vmul.f32 %v1801, %v2109
      %v2242 = vmul.f32 %v1816, %v2111
      %v2243 = vmul.f32 %v1831, %v2113
      %v2244 = vmul.f32 %v1846, %v2115
      %v2245 = vmul.f32 %v1861, %v2117
      %v2247 = vperm.slane %v645, 0
      %v2249 = vmul.f32 %v2247, %v2182
      %v2250 = vmul.f32 %v2247, %v2183
      %v2251 = vmul.f32 %v2247, %v2184
      %v2252 = vmul.f32 %v2247, %v2185
      %v2253 = vmul.f32 %v2247, %v2186
      %v2254 = vmul.f32 %v2247, %v2187
      %v2255 = vmul.f32 %v2247, %v2188
      %v2256 = vmul.f32 %v2247, %v2189
      %v2257 = vmul.f32 %v2247, %v2190
      %v2258 = vmul.f32 %v2247, %v2191
      %v2259 = vmul.f32 %v2247, %v2192
      %v2260 = vmul.f32 %v2247, %v2193
      %v2261 = vmul.f32 %v2247, %v2194
      %v2262 = vmul.f32 %v2247, %v2195
      %v2263 = vmul.f32 %v2247, %v2196
      %v2264 = vmul.f32 %v2247, %v2197
      %v2265 = vmul.f32 %v2247, %v2198
      %v2266 = vmul.f32 %v2247, %v2199
      %v2267 = vmul.f32 %v2247, %v2200
      %v2268 = vmul.f32 %v2247, %v2201
      %v2269 = vmul.f32 %v2247, %v2202
      %v2270 = vmul.f32 %v2247, %v2203
      %v2271 = vmul.f32 %v2247, %v2204
      %v2272 = vmul.f32 %v2247, %v2205
      %v2273 = vmul.f32 %v2247, %v2206
      %v2274 = vmul.f32 %v2247, %v2207
      %v2275 = vmul.f32 %v2247, %v2208
      %v2276 = vmul.f32 %v2247, %v2209
      %v2277 = vmul.f32 %v2247, %v2210
      %v2278 = vmul.f32 %v2247, %v2211
      %v2279 = vmul.f32 %v2247, %v2212
      %v2280 = vmul.f32 %v2247, %v2213
      %v2281 = vmul.f32 %v2247, %v2214
      %v2282 = vmul.f32 %v2247, %v2215
      %v2283 = vmul.f32 %v2247, %v2216
      %v2284 = vmul.f32 %v2247, %v2217
      %v2285 = vmul.f32 %v2247, %v2218
      %v2286 = vmul.f32 %v2247, %v2219
      %v2287 = vmul.f32 %v2247, %v2220
      %v2288 = vmul.f32 %v2247, %v2221
      %v2289 = vmul.f32 %v2247, %v2222
      %v2290 = vmul.f32 %v2247, %v2223
      %v2291 = vmul.f32 %v2247, %v2224
      %v2292 = vmul.f32 %v2247, %v2225
      %v2293 = vmul.f32 %v2247, %v2226
      %v2294 = vmul.f32 %v2247, %v2227
      %v2295 = vmul.f32 %v2247, %v2228
      %v2296 = vmul.f32 %v2247, %v2229
      %v2297 = vmul.f32 %v2247, %v2230
      %v2298 = vmul.f32 %v2247, %v2231
      %v2299 = vmul.f32 %v2247, %v2232
      %v2300 = vmul.f32 %v2247, %v2233
      %v2301 = vmul.f32 %v2247, %v2234
      %v2302 = vmul.f32 %v2247, %v2235
      %v2303 = vmul.f32 %v2247, %v2236
      %v2304 = vmul.f32 %v2247, %v2237
      %v2305 = vmul.f32 %v2247, %v2238
      %v2306 = vmul.f32 %v2247, %v2239
      %v2307 = vmul.f32 %v2247, %v2240
      %v2308 = vmul.f32 %v2247, %v2241
      %v2309 = vmul.f32 %v2247, %v2242
      %v2310 = vmul.f32 %v2247, %v2243
      %v2311 = vmul.f32 %v2247, %v2244
      %v2312 = vmul.f32 %v2247, %v2245
      %2377 = vrot.lane.b32.xlu0 %v2249, 96
      %v2378 = vpop.permute.xlu0 %2377
      %2379 = vrot.lane.b32.xlu0 %v2250, 96
      %v2380 = vpop.permute.xlu0 %2379
      %2381 = vrot.lane.b32.xlu0 %v2251, 96
      %v2382 = vpop.permute.xlu0 %2381
      %2383 = vrot.lane.b32.xlu0 %v2252, 96
      %v2384 = vpop.permute.xlu0 %2383
      %2385 = vrot.lane.b32.xlu0 %v2253, 96
      %v2386 = vpop.permute.xlu0 %2385
      %2387 = vrot.lane.b32.xlu0 %v2254, 96
      %v2388 = vpop.permute.xlu0 %2387
      %2389 = vrot.lane.b32.xlu0 %v2255, 96
      %v2390 = vpop.permute.xlu0 %2389
      %2391 = vrot.lane.b32.xlu0 %v2256, 96
      %v2392 = vpop.permute.xlu0 %2391
      %2393 = vrot.lane.b32.xlu0 %v2257, 96
      %v2394 = vpop.permute.xlu0 %2393
      %2395 = vrot.lane.b32.xlu0 %v2258, 96
      %v2396 = vpop.permute.xlu0 %2395
      %2397 = vrot.lane.b32.xlu0 %v2259, 96
      %v2398 = vpop.permute.xlu0 %2397
      %2399 = vrot.lane.b32.xlu0 %v2260, 96
      %v2400 = vpop.permute.xlu0 %2399
      %2401 = vrot.lane.b32.xlu0 %v2261, 96
      %v2402 = vpop.permute.xlu0 %2401
      %2403 = vrot.lane.b32.xlu0 %v2262, 96
      %v2404 = vpop.permute.xlu0 %2403
      %2405 = vrot.lane.b32.xlu0 %v2263, 96
      %v2406 = vpop.permute.xlu0 %2405
      %2407 = vrot.lane.b32.xlu0 %v2264, 96
      %v2408 = vpop.permute.xlu0 %2407
      %2409 = vrot.lane.b32.xlu0 %v2265, 96
      %v2410 = vpop.permute.xlu0 %2409
      %2411 = vrot.lane.b32.xlu0 %v2266, 96
      %v2412 = vpop.permute.xlu0 %2411
      %2413 = vrot.lane.b32.xlu0 %v2267, 96
      %v2414 = vpop.permute.xlu0 %2413
      %2415 = vrot.lane.b32.xlu0 %v2268, 96
      %v2416 = vpop.permute.xlu0 %2415
      %2417 = vrot.lane.b32.xlu0 %v2269, 96
      %v2418 = vpop.permute.xlu0 %2417
      %2419 = vrot.lane.b32.xlu0 %v2270, 96
      %v2420 = vpop.permute.xlu0 %2419
      %2421 = vrot.lane.b32.xlu0 %v2271, 96
      %v2422 = vpop.permute.xlu0 %2421
      %2423 = vrot.lane.b32.xlu0 %v2272, 96
      %v2424 = vpop.permute.xlu0 %2423
      %2425 = vrot.lane.b32.xlu0 %v2273, 96
      %v2426 = vpop.permute.xlu0 %2425
      %2427 = vrot.lane.b32.xlu0 %v2274, 96
      %v2428 = vpop.permute.xlu0 %2427
      %2429 = vrot.lane.b32.xlu0 %v2275, 96
      %v2430 = vpop.permute.xlu0 %2429
      %2431 = vrot.lane.b32.xlu0 %v2276, 96
      %v2432 = vpop.permute.xlu0 %2431
      %2433 = vrot.lane.b32.xlu0 %v2277, 96
      %v2434 = vpop.permute.xlu0 %2433
      %2435 = vrot.lane.b32.xlu0 %v2278, 96
      %v2436 = vpop.permute.xlu0 %2435
      %2437 = vrot.lane.b32.xlu0 %v2279, 96
      %v2438 = vpop.permute.xlu0 %2437
      %2439 = vrot.lane.b32.xlu0 %v2280, 96
      %v2440 = vpop.permute.xlu0 %2439
      %2441 = vrot.lane.b32.xlu0 %v2281, 96
      %v2442 = vpop.permute.xlu0 %2441
      %2443 = vrot.lane.b32.xlu0 %v2282, 96
      %v2444 = vpop.permute.xlu0 %2443
      %2445 = vrot.lane.b32.xlu0 %v2283, 96
      %v2446 = vpop.permute.xlu0 %2445
      %2447 = vrot.lane.b32.xlu0 %v2284, 96
      %v2448 = vpop.permute.xlu0 %2447
      %2449 = vrot.lane.b32.xlu0 %v2285, 96
      %v2450 = vpop.permute.xlu0 %2449
      %2451 = vrot.lane.b32.xlu0 %v2286, 96
      %v2452 = vpop.permute.xlu0 %2451
      %2453 = vrot.lane.b32.xlu0 %v2287, 96
      %v2454 = vpop.permute.xlu0 %2453
      %2455 = vrot.lane.b32.xlu0 %v2288, 96
      %v2456 = vpop.permute.xlu0 %2455
      %2457 = vrot.lane.b32.xlu0 %v2289, 96
      %v2458 = vpop.permute.xlu0 %2457
      %2459 = vrot.lane.b32.xlu0 %v2290, 96
      %v2460 = vpop.permute.xlu0 %2459
      %2461 = vrot.lane.b32.xlu0 %v2291, 96
      %v2462 = vpop.permute.xlu0 %2461
      %2463 = vrot.lane.b32.xlu0 %v2292, 96
      %v2464 = vpop.permute.xlu0 %2463
      %2465 = vrot.lane.b32.xlu0 %v2293, 96
      %v2466 = vpop.permute.xlu0 %2465
      %2467 = vrot.lane.b32.xlu0 %v2294, 96
      %v2468 = vpop.permute.xlu0 %2467
      %2469 = vrot.lane.b32.xlu0 %v2295, 96
      %v2470 = vpop.permute.xlu0 %2469
      %2471 = vrot.lane.b32.xlu0 %v2296, 96
      %v2472 = vpop.permute.xlu0 %2471
      %2473 = vrot.lane.b32.xlu0 %v2297, 96
      %v2474 = vpop.permute.xlu0 %2473
      %2475 = vrot.lane.b32.xlu0 %v2298, 96
      %v2476 = vpop.permute.xlu0 %2475
      %2477 = vrot.lane.b32.xlu0 %v2299, 96
      %v2478 = vpop.permute.xlu0 %2477
      %2479 = vrot.lane.b32.xlu0 %v2300, 96
      %v2480 = vpop.permute.xlu0 %2479
      %2481 = vrot.lane.b32.xlu0 %v2301, 96
      %v2482 = vpop.permute.xlu0 %2481
      %2483 = vrot.lane.b32.xlu0 %v2302, 96
      %v2484 = vpop.permute.xlu0 %2483
      %2485 = vrot.lane.b32.xlu0 %v2303, 96
      %v2486 = vpop.permute.xlu0 %2485
      %2487 = vrot.lane.b32.xlu0 %v2304, 96
      %v2488 = vpop.permute.xlu0 %2487
      %2489 = vrot.lane.b32.xlu0 %v2305, 96
      %v2490 = vpop.permute.xlu0 %2489
      %2491 = vrot.lane.b32.xlu0 %v2306, 96
      %v2492 = vpop.permute.xlu0 %2491
      %2493 = vrot.lane.b32.xlu0 %v2307, 96
      %v2494 = vpop.permute.xlu0 %2493
      %2495 = vrot.lane.b32.xlu0 %v2308, 96
      %v2496 = vpop.permute.xlu0 %2495
      %2497 = vrot.lane.b32.xlu0 %v2309, 96
      %v2498 = vpop.permute.xlu0 %2497
      %2499 = vrot.lane.b32.xlu0 %v2310, 96
      %v2500 = vpop.permute.xlu0 %2499
      %2501 = vrot.lane.b32.xlu0 %v2311, 96
      %v2502 = vpop.permute.xlu0 %2501
      %2503 = vrot.lane.b32.xlu0 %v2312, 96
      %v2504 = vpop.permute.xlu0 %2503
      %v2569 = vadd.f32 %v454, %v2378
      %v2570 = vadd.f32 %v457, %v2380
      %v2571 = vadd.f32 %v460, %v2382
      %v2572 = vadd.f32 %v463, %v2384
      %v2573 = vadd.f32 %v466, %v2386
      %v2574 = vadd.f32 %v469, %v2388
      %v2575 = vadd.f32 %v472, %v2390
      %v2576 = vadd.f32 %v475, %v2392
      %v2577 = vadd.f32 %v478, %v2394
      %v2578 = vadd.f32 %v481, %v2396
      %v2579 = vadd.f32 %v484, %v2398
      %v2580 = vadd.f32 %v487, %v2400
      %v2581 = vadd.f32 %v490, %v2402
      %v2582 = vadd.f32 %v493, %v2404
      %v2583 = vadd.f32 %v496, %v2406
      %v2584 = vadd.f32 %v499, %v2408
      %v2585 = vadd.f32 %v502, %v2410
      %v2586 = vadd.f32 %v505, %v2412
      %v2587 = vadd.f32 %v508, %v2414
      %v2588 = vadd.f32 %v511, %v2416
      %v2589 = vadd.f32 %v514, %v2418
      %v2590 = vadd.f32 %v517, %v2420
      %v2591 = vadd.f32 %v520, %v2422
      %v2592 = vadd.f32 %v523, %v2424
      %v2593 = vadd.f32 %v526, %v2426
      %v2594 = vadd.f32 %v529, %v2428
      %v2595 = vadd.f32 %v532, %v2430
      %v2596 = vadd.f32 %v535, %v2432
      %v2597 = vadd.f32 %v538, %v2434
      %v2598 = vadd.f32 %v541, %v2436
      %v2599 = vadd.f32 %v544, %v2438
      %v2600 = vadd.f32 %v547, %v2440
      %v2601 = vadd.f32 %v550, %v2442
      %v2602 = vadd.f32 %v553, %v2444
      %v2603 = vadd.f32 %v556, %v2446
      %v2604 = vadd.f32 %v559, %v2448
      %v2605 = vadd.f32 %v562, %v2450
      %v2606 = vadd.f32 %v565, %v2452
      %v2607 = vadd.f32 %v568, %v2454
      %v2608 = vadd.f32 %v571, %v2456
      %v2609 = vadd.f32 %v574, %v2458
      %v2610 = vadd.f32 %v577, %v2460
      %v2611 = vadd.f32 %v580, %v2462
      %v2612 = vadd.f32 %v583, %v2464
      %v2613 = vadd.f32 %v586, %v2466
      %v2614 = vadd.f32 %v589, %v2468
      %v2615 = vadd.f32 %v592, %v2470
      %v2616 = vadd.f32 %v595, %v2472
      %v2617 = vadd.f32 %v598, %v2474
      %v2618 = vadd.f32 %v601, %v2476
      %v2619 = vadd.f32 %v604, %v2478
      %v2620 = vadd.f32 %v607, %v2480
      %v2621 = vadd.f32 %v610, %v2482
      %v2622 = vadd.f32 %v613, %v2484
      %v2623 = vadd.f32 %v616, %v2486
      %v2624 = vadd.f32 %v619, %v2488
      %v2625 = vadd.f32 %v622, %v2490
      %v2626 = vadd.f32 %v625, %v2492
      %v2627 = vadd.f32 %v628, %v2494
      %v2628 = vadd.f32 %v631, %v2496
      %v2629 = vadd.f32 %v634, %v2498
      %v2630 = vadd.f32 %v637, %v2500
      %v2631 = vadd.f32 %v640, %v2502
      %v2632 = vadd.f32 %v643, %v2504
      %v2633 = vxor.u32 %v2569, 2147483648
      %v2634 = vxor.u32 %v2570, 2147483648
      %v2635 = vxor.u32 %v2571, 2147483648
      %v2636 = vxor.u32 %v2572, 2147483648
      %v2637 = vxor.u32 %v2573, 2147483648
      %v2638 = vxor.u32 %v2574, 2147483648
      %v2639 = vxor.u32 %v2575, 2147483648
      %v2640 = vxor.u32 %v2576, 2147483648
      %v2641 = vxor.u32 %v2577, 2147483648
      %v2642 = vxor.u32 %v2578, 2147483648
      %v2643 = vxor.u32 %v2579, 2147483648
      %v2644 = vxor.u32 %v2580, 2147483648
      %v2645 = vxor.u32 %v2581, 2147483648
      %v2646 = vxor.u32 %v2582, 2147483648
      %v2647 = vxor.u32 %v2583, 2147483648
      %v2648 = vxor.u32 %v2584, 2147483648
      %v2649 = vxor.u32 %v2585, 2147483648
      %v2650 = vxor.u32 %v2586, 2147483648
      %v2651 = vxor.u32 %v2587, 2147483648
      %v2652 = vxor.u32 %v2588, 2147483648
      %v2653 = vxor.u32 %v2589, 2147483648
      %v2654 = vxor.u32 %v2590, 2147483648
      %v2655 = vxor.u32 %v2591, 2147483648
      %v2656 = vxor.u32 %v2592, 2147483648
      %v2657 = vxor.u32 %v2593, 2147483648
      %v2658 = vxor.u32 %v2594, 2147483648
      %v2659 = vxor.u32 %v2595, 2147483648
      %v2660 = vxor.u32 %v2596, 2147483648
      %v2661 = vxor.u32 %v2597, 2147483648
      %v2662 = vxor.u32 %v2598, 2147483648
      %v2663 = vxor.u32 %v2599, 2147483648
      %v2664 = vxor.u32 %v2600, 2147483648
      %v2665 = vxor.u32 %v2601, 2147483648
      %v2666 = vxor.u32 %v2602, 2147483648
      %v2667 = vxor.u32 %v2603, 2147483648
      %v2668 = vxor.u32 %v2604, 2147483648
      %v2669 = vxor.u32 %v2605, 2147483648
      %v2670 = vxor.u32 %v2606, 2147483648
      %v2671 = vxor.u32 %v2607, 2147483648
      %v2672 = vxor.u32 %v2608, 2147483648
      %v2673 = vxor.u32 %v2609, 2147483648
      %v2674 = vxor.u32 %v2610, 2147483648
      %v2675 = vxor.u32 %v2611, 2147483648
      %v2676 = vxor.u32 %v2612, 2147483648
      %v2677 = vxor.u32 %v2613, 2147483648
      %v2678 = vxor.u32 %v2614, 2147483648
      %v2679 = vxor.u32 %v2615, 2147483648
      %v2680 = vxor.u32 %v2616, 2147483648
      %v2681 = vxor.u32 %v2617, 2147483648
      %v2682 = vxor.u32 %v2618, 2147483648
      %v2683 = vxor.u32 %v2619, 2147483648
      %v2684 = vxor.u32 %v2620, 2147483648
      %v2685 = vxor.u32 %v2621, 2147483648
      %v2686 = vxor.u32 %v2622, 2147483648
      %v2687 = vxor.u32 %v2623, 2147483648
      %v2688 = vxor.u32 %v2624, 2147483648
      %v2689 = vxor.u32 %v2625, 2147483648
      %v2690 = vxor.u32 %v2626, 2147483648
      %v2691 = vxor.u32 %v2627, 2147483648
      %v2692 = vxor.u32 %v2628, 2147483648
      %v2693 = vxor.u32 %v2629, 2147483648
      %v2694 = vxor.u32 %v2630, 2147483648
      %v2695 = vxor.u32 %v2631, 2147483648
      %v2696 = vxor.u32 %v2632, 2147483648
      %v2697 = vmul.f32 %v2633, 1.442695
      %v2698 = vpow.pop %v2697
      %v2699 = vmul.f32 %v2634, 1.442695
      %v2700 = vpow.pop %v2699
      %v2701 = vmul.f32 %v2635, 1.442695
      %v2702 = vpow.pop %v2701
      %v2703 = vmul.f32 %v2636, 1.442695
      %v2704 = vpow.pop %v2703
      %v2705 = vmul.f32 %v2637, 1.442695
      %v2706 = vpow.pop %v2705
      %v2707 = vmul.f32 %v2638, 1.442695
      %v2708 = vpow.pop %v2707
      %v2709 = vmul.f32 %v2639, 1.442695
      %v2710 = vpow.pop %v2709
      %v2711 = vmul.f32 %v2640, 1.442695
      %v2712 = vpow.pop %v2711
      %v2713 = vmul.f32 %v2641, 1.442695
      %v2714 = vpow.pop %v2713
      %v2715 = vmul.f32 %v2642, 1.442695
      %v2716 = vpow.pop %v2715
      %v2717 = vmul.f32 %v2643, 1.442695
      %v2718 = vpow.pop %v2717
      %v2719 = vmul.f32 %v2644, 1.442695
      %v2720 = vpow.pop %v2719
      %v2721 = vmul.f32 %v2645, 1.442695
      %v2722 = vpow.pop %v2721
      %v2723 = vmul.f32 %v2646, 1.442695
      %v2724 = vpow.pop %v2723
      %v2725 = vmul.f32 %v2647, 1.442695
      %v2726 = vpow.pop %v2725
      %v2727 = vmul.f32 %v2648, 1.442695
      %v2728 = vpow.pop %v2727
      %v2729 = vmul.f32 %v2649, 1.442695
      %v2730 = vpow.pop %v2729
      %v2731 = vmul.f32 %v2650, 1.442695
      %v2732 = vpow.pop %v2731
      %v2733 = vmul.f32 %v2651, 1.442695
      %v2734 = vpow.pop %v2733
      %v2735 = vmul.f32 %v2652, 1.442695
      %v2736 = vpow.pop %v2735
      %v2737 = vmul.f32 %v2653, 1.442695
      %v2738 = vpow.pop %v2737
      %v2739 = vmul.f32 %v2654, 1.442695
      %v2740 = vpow.pop %v2739
      %v2741 = vmul.f32 %v2655, 1.442695
      %v2742 = vpow.pop %v2741
      %v2743 = vmul.f32 %v2656, 1.442695
      %v2744 = vpow.pop %v2743
      %v2745 = vmul.f32 %v2657, 1.442695
      %v2746 = vpow.pop %v2745
      %v2747 = vmul.f32 %v2658, 1.442695
      %v2748 = vpow.pop %v2747
      %v2749 = vmul.f32 %v2659, 1.442695
      %v2750 = vpow.pop %v2749
      %v2751 = vmul.f32 %v2660, 1.442695
      %v2752 = vpow.pop %v2751
      %v2753 = vmul.f32 %v2661, 1.442695
      %v2754 = vpow.pop %v2753
      %v2755 = vmul.f32 %v2662, 1.442695
      %v2756 = vpow.pop %v2755
      %v2757 = vmul.f32 %v2663, 1.442695
      %v2758 = vpow.pop %v2757
      %v2759 = vmul.f32 %v2664, 1.442695
      %v2760 = vpow.pop %v2759
      %v2761 = vmul.f32 %v2665, 1.442695
      %v2762 = vpow.pop %v2761
      %v2763 = vmul.f32 %v2666, 1.442695
      %v2764 = vpow.pop %v2763
      %v2765 = vmul.f32 %v2667, 1.442695
      %v2766 = vpow.pop %v2765
      %v2767 = vmul.f32 %v2668, 1.442695
      %v2768 = vpow.pop %v2767
      %v2769 = vmul.f32 %v2669, 1.442695
      %v2770 = vpow.pop %v2769
      %v2771 = vmul.f32 %v2670, 1.442695
      %v2772 = vpow.pop %v2771
      %v2773 = vmul.f32 %v2671, 1.442695
      %v2774 = vpow.pop %v2773
      %v2775 = vmul.f32 %v2672, 1.442695
      %v2776 = vpow.pop %v2775
      %v2777 = vmul.f32 %v2673, 1.442695
      %v2778 = vpow.pop %v2777
      %v2779 = vmul.f32 %v2674, 1.442695
      %v2780 = vpow.pop %v2779
      %v2781 = vmul.f32 %v2675, 1.442695
      %v2782 = vpow.pop %v2781
      %v2783 = vmul.f32 %v2676, 1.442695
      %v2784 = vpow.pop %v2783
      %v2785 = vmul.f32 %v2677, 1.442695
      %v2786 = vpow.pop %v2785
      %v2787 = vmul.f32 %v2678, 1.442695
      %v2788 = vpow.pop %v2787
      %v2789 = vmul.f32 %v2679, 1.442695
      %v2790 = vpow.pop %v2789
      %v2791 = vmul.f32 %v2680, 1.442695
      %v2792 = vpow.pop %v2791
      %v2793 = vmul.f32 %v2681, 1.442695
      %v2794 = vpow.pop %v2793
      %v2795 = vmul.f32 %v2682, 1.442695
      %v2796 = vpow.pop %v2795
      %v2797 = vmul.f32 %v2683, 1.442695
      %v2798 = vpow.pop %v2797
      %v2799 = vmul.f32 %v2684, 1.442695
      %v2800 = vpow.pop %v2799
      %v2801 = vmul.f32 %v2685, 1.442695
      %v2802 = vpow.pop %v2801
      %v2803 = vmul.f32 %v2686, 1.442695
      %v2804 = vpow.pop %v2803
      %v2805 = vmul.f32 %v2687, 1.442695
      %v2806 = vpow.pop %v2805
      %v2807 = vmul.f32 %v2688, 1.442695
      %v2808 = vpow.pop %v2807
      %v2809 = vmul.f32 %v2689, 1.442695
      %v2810 = vpow.pop %v2809
      %v2811 = vmul.f32 %v2690, 1.442695
      %v2812 = vpow.pop %v2811
      %v2813 = vmul.f32 %v2691, 1.442695
      %v2814 = vpow.pop %v2813
      %v2815 = vmul.f32 %v2692, 1.442695
      %v2816 = vpow.pop %v2815
      %v2817 = vmul.f32 %v2693, 1.442695
      %v2818 = vpow.pop %v2817
      %v2819 = vmul.f32 %v2694, 1.442695
      %v2820 = vpow.pop %v2819
      %v2821 = vmul.f32 %v2695, 1.442695
      %v2822 = vpow.pop %v2821
      %v2823 = vmul.f32 %v2696, 1.442695
      %v2824 = vpow.pop %v2823
      %v2825 = vadd.f32 %v2698, 1.0
      %v2826 = vadd.f32 %v2700, 1.0
      %v2827 = vadd.f32 %v2702, 1.0
      %v2828 = vadd.f32 %v2704, 1.0
      %v2829 = vadd.f32 %v2706, 1.0
      %v2830 = vadd.f32 %v2708, 1.0
      %v2831 = vadd.f32 %v2710, 1.0
      %v2832 = vadd.f32 %v2712, 1.0
      %v2833 = vadd.f32 %v2714, 1.0
      %v2834 = vadd.f32 %v2716, 1.0
      %v2835 = vadd.f32 %v2718, 1.0
      %v2836 = vadd.f32 %v2720, 1.0
      %v2837 = vadd.f32 %v2722, 1.0
      %v2838 = vadd.f32 %v2724, 1.0
      %v2839 = vadd.f32 %v2726, 1.0
      %v2840 = vadd.f32 %v2728, 1.0
      %v2841 = vadd.f32 %v2730, 1.0
      %v2842 = vadd.f32 %v2732, 1.0
      %v2843 = vadd.f32 %v2734, 1.0
      %v2844 = vadd.f32 %v2736, 1.0
      %v2845 = vadd.f32 %v2738, 1.0
      %v2846 = vadd.f32 %v2740, 1.0
      %v2847 = vadd.f32 %v2742, 1.0
      %v2848 = vadd.f32 %v2744, 1.0
      %v2849 = vadd.f32 %v2746, 1.0
      %v2850 = vadd.f32 %v2748, 1.0
      %v2851 = vadd.f32 %v2750, 1.0
      %v2852 = vadd.f32 %v2752, 1.0
      %v2853 = vadd.f32 %v2754, 1.0
      %v2854 = vadd.f32 %v2756, 1.0
      %v2855 = vadd.f32 %v2758, 1.0
      %v2856 = vadd.f32 %v2760, 1.0
      %v2857 = vadd.f32 %v2762, 1.0
      %v2858 = vadd.f32 %v2764, 1.0
      %v2859 = vadd.f32 %v2766, 1.0
      %v2860 = vadd.f32 %v2768, 1.0
      %v2861 = vadd.f32 %v2770, 1.0
      %v2862 = vadd.f32 %v2772, 1.0
      %v2863 = vadd.f32 %v2774, 1.0
      %v2864 = vadd.f32 %v2776, 1.0
      %v2865 = vadd.f32 %v2778, 1.0
      %v2866 = vadd.f32 %v2780, 1.0
      %v2867 = vadd.f32 %v2782, 1.0
      %v2868 = vadd.f32 %v2784, 1.0
      %v2869 = vadd.f32 %v2786, 1.0
      %v2870 = vadd.f32 %v2788, 1.0
      %v2871 = vadd.f32 %v2790, 1.0
      %v2872 = vadd.f32 %v2792, 1.0
      %v2873 = vadd.f32 %v2794, 1.0
      %v2874 = vadd.f32 %v2796, 1.0
      %v2875 = vadd.f32 %v2798, 1.0
      %v2876 = vadd.f32 %v2800, 1.0
      %v2877 = vadd.f32 %v2802, 1.0
      %v2878 = vadd.f32 %v2804, 1.0
      %v2879 = vadd.f32 %v2806, 1.0
      %v2880 = vadd.f32 %v2808, 1.0
      %v2881 = vadd.f32 %v2810, 1.0
      %v2882 = vadd.f32 %v2812, 1.0
      %v2883 = vadd.f32 %v2814, 1.0
      %v2884 = vadd.f32 %v2816, 1.0
      %v2885 = vadd.f32 %v2818, 1.0
      %v2886 = vadd.f32 %v2820, 1.0
      %v2887 = vadd.f32 %v2822, 1.0
      %v2888 = vadd.f32 %v2824, 1.0
      %v2889 = vrcp.pop %v2825
      %v2890 = vmul.f32 %v2825, %v2889
      %v2891 = vsub.f32 1.0, %v2890
      %v2892 = vmul.f32 %v2889, %v2891
      %v2893 = vadd.f32 %v2889, %v2892
      %vm2894 = vweird.f32 %v2825
      %vm2895 = vweird.f32 %v2889
      %vm2896 = vmor %vm2894, %vm2895
      %v2897 = vsel %vm2896, %v2889, %v2893
      %v2898 = vand.u32 2147483647, %v2825
      %vm2899 = vcmp.eq.f32.partialorder %v2898, 8.507059e+37
      %v2900 = vand.u32 %v2825, 2147483648
      %v2901 = vor.u32 1.1754944e-38, %v2900
      %v2902 = vsel %vm2899, %v2901, %v2897
      %v2903 = vmul.f32 1.0, %v2902
      %v2904 = vrcp.pop %v2826
      %v2905 = vmul.f32 %v2826, %v2904
      %v2906 = vsub.f32 1.0, %v2905
      %v2907 = vmul.f32 %v2904, %v2906
      %v2908 = vadd.f32 %v2904, %v2907
      %vm2909 = vweird.f32 %v2826
      %vm2910 = vweird.f32 %v2904
      %vm2911 = vmor %vm2909, %vm2910
      %v2912 = vsel %vm2911, %v2904, %v2908
      %v2913 = vand.u32 2147483647, %v2826
      %vm2914 = vcmp.eq.f32.partialorder %v2913, 8.507059e+37
      %v2915 = vand.u32 %v2826, 2147483648
      %v2916 = vor.u32 1.1754944e-38, %v2915
      %v2917 = vsel %vm2914, %v2916, %v2912
      %v2918 = vmul.f32 1.0, %v2917
      %v2919 = vrcp.pop %v2827
      %v2920 = vmul.f32 %v2827, %v2919
      %v2921 = vsub.f32 1.0, %v2920
      %v2922 = vmul.f32 %v2919, %v2921
      %v2923 = vadd.f32 %v2919, %v2922
      %vm2924 = vweird.f32 %v2827
      %vm2925 = vweird.f32 %v2919
      %vm2926 = vmor %vm2924, %vm2925
      %v2927 = vsel %vm2926, %v2919, %v2923
      %v2928 = vand.u32 2147483647, %v2827
      %vm2929 = vcmp.eq.f32.partialorder %v2928, 8.507059e+37
      %v2930 = vand.u32 %v2827, 2147483648
      %v2931 = vor.u32 1.1754944e-38, %v2930
      %v2932 = vsel %vm2929, %v2931, %v2927
      %v2933 = vmul.f32 1.0, %v2932
      %v2934 = vrcp.pop %v2828
      %v2935 = vmul.f32 %v2828, %v2934
      %v2936 = vsub.f32 1.0, %v2935
      %v2937 = vmul.f32 %v2934, %v2936
      %v2938 = vadd.f32 %v2934, %v2937
      %vm2939 = vweird.f32 %v2828
      %vm2940 = vweird.f32 %v2934
      %vm2941 = vmor %vm2939, %vm2940
      %v2942 = vsel %vm2941, %v2934, %v2938
      %v2943 = vand.u32 2147483647, %v2828
      %vm2944 = vcmp.eq.f32.partialorder %v2943, 8.507059e+37
      %v2945 = vand.u32 %v2828, 2147483648
      %v2946 = vor.u32 1.1754944e-38, %v2945
      %v2947 = vsel %vm2944, %v2946, %v2942
      %v2948 = vmul.f32 1.0, %v2947
      %v2949 = vrcp.pop %v2829
      %v2950 = vmul.f32 %v2829, %v2949
      %v2951 = vsub.f32 1.0, %v2950
      %v2952 = vmul.f32 %v2949, %v2951
      %v2953 = vadd.f32 %v2949, %v2952
      %vm2954 = vweird.f32 %v2829
      %vm2955 = vweird.f32 %v2949
      %vm2956 = vmor %vm2954, %vm2955
      %v2957 = vsel %vm2956, %v2949, %v2953
      %v2958 = vand.u32 2147483647, %v2829
      %vm2959 = vcmp.eq.f32.partialorder %v2958, 8.507059e+37
      %v2960 = vand.u32 %v2829, 2147483648
      %v2961 = vor.u32 1.1754944e-38, %v2960
      %v2962 = vsel %vm2959, %v2961, %v2957
      %v2963 = vmul.f32 1.0, %v2962
      %v2964 = vrcp.pop %v2830
      %v2965 = vmul.f32 %v2830, %v2964
      %v2966 = vsub.f32 1.0, %v2965
      %v2967 = vmul.f32 %v2964, %v2966
      %v2968 = vadd.f32 %v2964, %v2967
      %vm2969 = vweird.f32 %v2830
      %vm2970 = vweird.f32 %v2964
      %vm2971 = vmor %vm2969, %vm2970
      %v2972 = vsel %vm2971, %v2964, %v2968
      %v2973 = vand.u32 2147483647, %v2830
      %vm2974 = vcmp.eq.f32.partialorder %v2973, 8.507059e+37
      %v2975 = vand.u32 %v2830, 2147483648
      %v2976 = vor.u32 1.1754944e-38, %v2975
      %v2977 = vsel %vm2974, %v2976, %v2972
      %v2978 = vmul.f32 1.0, %v2977
      %v2979 = vrcp.pop %v2831
      %v2980 = vmul.f32 %v2831, %v2979
      %v2981 = vsub.f32 1.0, %v2980
      %v2982 = vmul.f32 %v2979, %v2981
      %v2983 = vadd.f32 %v2979, %v2982
      %vm2984 = vweird.f32 %v2831
      %vm2985 = vweird.f32 %v2979
      %vm2986 = vmor %vm2984, %vm2985
      %v2987 = vsel %vm2986, %v2979, %v2983
      %v2988 = vand.u32 2147483647, %v2831
      %vm2989 = vcmp.eq.f32.partialorder %v2988, 8.507059e+37
      %v2990 = vand.u32 %v2831, 2147483648
      %v2991 = vor.u32 1.1754944e-38, %v2990
      %v2992 = vsel %vm2989, %v2991, %v2987
      %v2993 = vmul.f32 1.0, %v2992
      %v2994 = vrcp.pop %v2832
      %v2995 = vmul.f32 %v2832, %v2994
      %v2996 = vsub.f32 1.0, %v2995
      %v2997 = vmul.f32 %v2994, %v2996
      %v2998 = vadd.f32 %v2994, %v2997
      %vm2999 = vweird.f32 %v2832
      %vm3000 = vweird.f32 %v2994
      %vm3001 = vmor %vm2999, %vm3000
      %v3002 = vsel %vm3001, %v2994, %v2998
      %v3003 = vand.u32 2147483647, %v2832
      %vm3004 = vcmp.eq.f32.partialorder %v3003, 8.507059e+37
      %v3005 = vand.u32 %v2832, 2147483648
      %v3006 = vor.u32 1.1754944e-38, %v3005
      %v3007 = vsel %vm3004, %v3006, %v3002
      %v3008 = vmul.f32 1.0, %v3007
      %v3009 = vrcp.pop %v2833
      %v3010 = vmul.f32 %v2833, %v3009
      %v3011 = vsub.f32 1.0, %v3010
      %v3012 = vmul.f32 %v3009, %v3011
      %v3013 = vadd.f32 %v3009, %v3012
      %vm3014 = vweird.f32 %v2833
      %vm3015 = vweird.f32 %v3009
      %vm3016 = vmor %vm3014, %vm3015
      %v3017 = vsel %vm3016, %v3009, %v3013
      %v3018 = vand.u32 2147483647, %v2833
      %vm3019 = vcmp.eq.f32.partialorder %v3018, 8.507059e+37
      %v3020 = vand.u32 %v2833, 2147483648
      %v3021 = vor.u32 1.1754944e-38, %v3020
      %v3022 = vsel %vm3019, %v3021, %v3017
      %v3023 = vmul.f32 1.0, %v3022
      %v3024 = vrcp.pop %v2834
      %v3025 = vmul.f32 %v2834, %v3024
      %v3026 = vsub.f32 1.0, %v3025
      %v3027 = vmul.f32 %v3024, %v3026
      %v3028 = vadd.f32 %v3024, %v3027
      %vm3029 = vweird.f32 %v2834
      %vm3030 = vweird.f32 %v3024
      %vm3031 = vmor %vm3029, %vm3030
      %v3032 = vsel %vm3031, %v3024, %v3028
      %v3033 = vand.u32 2147483647, %v2834
      %vm3034 = vcmp.eq.f32.partialorder %v3033, 8.507059e+37
      %v3035 = vand.u32 %v2834, 2147483648
      %v3036 = vor.u32 1.1754944e-38, %v3035
      %v3037 = vsel %vm3034, %v3036, %v3032
      %v3038 = vmul.f32 1.0, %v3037
      %v3039 = vrcp.pop %v2835
      %v3040 = vmul.f32 %v2835, %v3039
      %v3041 = vsub.f32 1.0, %v3040
      %v3042 = vmul.f32 %v3039, %v3041
      %v3043 = vadd.f32 %v3039, %v3042
      %vm3044 = vweird.f32 %v2835
      %vm3045 = vweird.f32 %v3039
      %vm3046 = vmor %vm3044, %vm3045
      %v3047 = vsel %vm3046, %v3039, %v3043
      %v3048 = vand.u32 2147483647, %v2835
      %vm3049 = vcmp.eq.f32.partialorder %v3048, 8.507059e+37
      %v3050 = vand.u32 %v2835, 2147483648
      %v3051 = vor.u32 1.1754944e-38, %v3050
      %v3052 = vsel %vm3049, %v3051, %v3047
      %v3053 = vmul.f32 1.0, %v3052
      %v3054 = vrcp.pop %v2836
      %v3055 = vmul.f32 %v2836, %v3054
      %v3056 = vsub.f32 1.0, %v3055
      %v3057 = vmul.f32 %v3054, %v3056
      %v3058 = vadd.f32 %v3054, %v3057
      %vm3059 = vweird.f32 %v2836
      %vm3060 = vweird.f32 %v3054
      %vm3061 = vmor %vm3059, %vm3060
      %v3062 = vsel %vm3061, %v3054, %v3058
      %v3063 = vand.u32 2147483647, %v2836
      %vm3064 = vcmp.eq.f32.partialorder %v3063, 8.507059e+37
      %v3065 = vand.u32 %v2836, 2147483648
      %v3066 = vor.u32 1.1754944e-38, %v3065
      %v3067 = vsel %vm3064, %v3066, %v3062
      %v3068 = vmul.f32 1.0, %v3067
      %v3069 = vrcp.pop %v2837
      %v3070 = vmul.f32 %v2837, %v3069
      %v3071 = vsub.f32 1.0, %v3070
      %v3072 = vmul.f32 %v3069, %v3071
      %v3073 = vadd.f32 %v3069, %v3072
      %vm3074 = vweird.f32 %v2837
      %vm3075 = vweird.f32 %v3069
      %vm3076 = vmor %vm3074, %vm3075
      %v3077 = vsel %vm3076, %v3069, %v3073
      %v3078 = vand.u32 2147483647, %v2837
      %vm3079 = vcmp.eq.f32.partialorder %v3078, 8.507059e+37
      %v3080 = vand.u32 %v2837, 2147483648
      %v3081 = vor.u32 1.1754944e-38, %v3080
      %v3082 = vsel %vm3079, %v3081, %v3077
      %v3083 = vmul.f32 1.0, %v3082
      %v3084 = vrcp.pop %v2838
      %v3085 = vmul.f32 %v2838, %v3084
      %v3086 = vsub.f32 1.0, %v3085
      %v3087 = vmul.f32 %v3084, %v3086
      %v3088 = vadd.f32 %v3084, %v3087
      %vm3089 = vweird.f32 %v2838
      %vm3090 = vweird.f32 %v3084
      %vm3091 = vmor %vm3089, %vm3090
      %v3092 = vsel %vm3091, %v3084, %v3088
      %v3093 = vand.u32 2147483647, %v2838
      %vm3094 = vcmp.eq.f32.partialorder %v3093, 8.507059e+37
      %v3095 = vand.u32 %v2838, 2147483648
      %v3096 = vor.u32 1.1754944e-38, %v3095
      %v3097 = vsel %vm3094, %v3096, %v3092
      %v3098 = vmul.f32 1.0, %v3097
      %v3099 = vrcp.pop %v2839
      %v3100 = vmul.f32 %v2839, %v3099
      %v3101 = vsub.f32 1.0, %v3100
      %v3102 = vmul.f32 %v3099, %v3101
      %v3103 = vadd.f32 %v3099, %v3102
      %vm3104 = vweird.f32 %v2839
      %vm3105 = vweird.f32 %v3099
      %vm3106 = vmor %vm3104, %vm3105
      %v3107 = vsel %vm3106, %v3099, %v3103
      %v3108 = vand.u32 2147483647, %v2839
      %vm3109 = vcmp.eq.f32.partialorder %v3108, 8.507059e+37
      %v3110 = vand.u32 %v2839, 2147483648
      %v3111 = vor.u32 1.1754944e-38, %v3110
      %v3112 = vsel %vm3109, %v3111, %v3107
      %v3113 = vmul.f32 1.0, %v3112
      %v3114 = vrcp.pop %v2840
      %v3115 = vmul.f32 %v2840, %v3114
      %v3116 = vsub.f32 1.0, %v3115
      %v3117 = vmul.f32 %v3114, %v3116
      %v3118 = vadd.f32 %v3114, %v3117
      %vm3119 = vweird.f32 %v2840
      %vm3120 = vweird.f32 %v3114
      %vm3121 = vmor %vm3119, %vm3120
      %v3122 = vsel %vm3121, %v3114, %v3118
      %v3123 = vand.u32 2147483647, %v2840
      %vm3124 = vcmp.eq.f32.partialorder %v3123, 8.507059e+37
      %v3125 = vand.u32 %v2840, 2147483648
      %v3126 = vor.u32 1.1754944e-38, %v3125
      %v3127 = vsel %vm3124, %v3126, %v3122
      %v3128 = vmul.f32 1.0, %v3127
      %v3129 = vrcp.pop %v2841
      %v3130 = vmul.f32 %v2841, %v3129
      %v3131 = vsub.f32 1.0, %v3130
      %v3132 = vmul.f32 %v3129, %v3131
      %v3133 = vadd.f32 %v3129, %v3132
      %vm3134 = vweird.f32 %v2841
      %vm3135 = vweird.f32 %v3129
      %vm3136 = vmor %vm3134, %vm3135
      %v3137 = vsel %vm3136, %v3129, %v3133
      %v3138 = vand.u32 2147483647, %v2841
      %vm3139 = vcmp.eq.f32.partialorder %v3138, 8.507059e+37
      %v3140 = vand.u32 %v2841, 2147483648
      %v3141 = vor.u32 1.1754944e-38, %v3140
      %v3142 = vsel %vm3139, %v3141, %v3137
      %v3143 = vmul.f32 1.0, %v3142
      %v3144 = vrcp.pop %v2842
      %v3145 = vmul.f32 %v2842, %v3144
      %v3146 = vsub.f32 1.0, %v3145
      %v3147 = vmul.f32 %v3144, %v3146
      %v3148 = vadd.f32 %v3144, %v3147
      %vm3149 = vweird.f32 %v2842
      %vm3150 = vweird.f32 %v3144
      %vm3151 = vmor %vm3149, %vm3150
      %v3152 = vsel %vm3151, %v3144, %v3148
      %v3153 = vand.u32 2147483647, %v2842
      %vm3154 = vcmp.eq.f32.partialorder %v3153, 8.507059e+37
      %v3155 = vand.u32 %v2842, 2147483648
      %v3156 = vor.u32 1.1754944e-38, %v3155
      %v3157 = vsel %vm3154, %v3156, %v3152
      %v3158 = vmul.f32 1.0, %v3157
      %v3159 = vrcp.pop %v2843
      %v3160 = vmul.f32 %v2843, %v3159
      %v3161 = vsub.f32 1.0, %v3160
      %v3162 = vmul.f32 %v3159, %v3161
      %v3163 = vadd.f32 %v3159, %v3162
      %vm3164 = vweird.f32 %v2843
      %vm3165 = vweird.f32 %v3159
      %vm3166 = vmor %vm3164, %vm3165
      %v3167 = vsel %vm3166, %v3159, %v3163
      %v3168 = vand.u32 2147483647, %v2843
      %vm3169 = vcmp.eq.f32.partialorder %v3168, 8.507059e+37
      %v3170 = vand.u32 %v2843, 2147483648
      %v3171 = vor.u32 1.1754944e-38, %v3170
      %v3172 = vsel %vm3169, %v3171, %v3167
      %v3173 = vmul.f32 1.0, %v3172
      %v3174 = vrcp.pop %v2844
      %v3175 = vmul.f32 %v2844, %v3174
      %v3176 = vsub.f32 1.0, %v3175
      %v3177 = vmul.f32 %v3174, %v3176
      %v3178 = vadd.f32 %v3174, %v3177
      %vm3179 = vweird.f32 %v2844
      %vm3180 = vweird.f32 %v3174
      %vm3181 = vmor %vm3179, %vm3180
      %v3182 = vsel %vm3181, %v3174, %v3178
      %v3183 = vand.u32 2147483647, %v2844
      %vm3184 = vcmp.eq.f32.partialorder %v3183, 8.507059e+37
      %v3185 = vand.u32 %v2844, 2147483648
      %v3186 = vor.u32 1.1754944e-38, %v3185
      %v3187 = vsel %vm3184, %v3186, %v3182
      %v3188 = vmul.f32 1.0, %v3187
      %v3189 = vrcp.pop %v2845
      %v3190 = vmul.f32 %v2845, %v3189
      %v3191 = vsub.f32 1.0, %v3190
      %v3192 = vmul.f32 %v3189, %v3191
      %v3193 = vadd.f32 %v3189, %v3192
      %vm3194 = vweird.f32 %v2845
      %vm3195 = vweird.f32 %v3189
      %vm3196 = vmor %vm3194, %vm3195
      %v3197 = vsel %vm3196, %v3189, %v3193
      %v3198 = vand.u32 2147483647, %v2845
      %vm3199 = vcmp.eq.f32.partialorder %v3198, 8.507059e+37
      %v3200 = vand.u32 %v2845, 2147483648
      %v3201 = vor.u32 1.1754944e-38, %v3200
      %v3202 = vsel %vm3199, %v3201, %v3197
      %v3203 = vmul.f32 1.0, %v3202
      %v3204 = vrcp.pop %v2846
      %v3205 = vmul.f32 %v2846, %v3204
      %v3206 = vsub.f32 1.0, %v3205
      %v3207 = vmul.f32 %v3204, %v3206
      %v3208 = vadd.f32 %v3204, %v3207
      %vm3209 = vweird.f32 %v2846
      %vm3210 = vweird.f32 %v3204
      %vm3211 = vmor %vm3209, %vm3210
      %v3212 = vsel %vm3211, %v3204, %v3208
      %v3213 = vand.u32 2147483647, %v2846
      %vm3214 = vcmp.eq.f32.partialorder %v3213, 8.507059e+37
      %v3215 = vand.u32 %v2846, 2147483648
      %v3216 = vor.u32 1.1754944e-38, %v3215
      %v3217 = vsel %vm3214, %v3216, %v3212
      %v3218 = vmul.f32 1.0, %v3217
      %v3219 = vrcp.pop %v2847
      %v3220 = vmul.f32 %v2847, %v3219
      %v3221 = vsub.f32 1.0, %v3220
      %v3222 = vmul.f32 %v3219, %v3221
      %v3223 = vadd.f32 %v3219, %v3222
      %vm3224 = vweird.f32 %v2847
      %vm3225 = vweird.f32 %v3219
      %vm3226 = vmor %vm3224, %vm3225
      %v3227 = vsel %vm3226, %v3219, %v3223
      %v3228 = vand.u32 2147483647, %v2847
      %vm3229 = vcmp.eq.f32.partialorder %v3228, 8.507059e+37
      %v3230 = vand.u32 %v2847, 2147483648
      %v3231 = vor.u32 1.1754944e-38, %v3230
      %v3232 = vsel %vm3229, %v3231, %v3227
      %v3233 = vmul.f32 1.0, %v3232
      %v3234 = vrcp.pop %v2848
      %v3235 = vmul.f32 %v2848, %v3234
      %v3236 = vsub.f32 1.0, %v3235
      %v3237 = vmul.f32 %v3234, %v3236
      %v3238 = vadd.f32 %v3234, %v3237
      %vm3239 = vweird.f32 %v2848
      %vm3240 = vweird.f32 %v3234
      %vm3241 = vmor %vm3239, %vm3240
      %v3242 = vsel %vm3241, %v3234, %v3238
      %v3243 = vand.u32 2147483647, %v2848
      %vm3244 = vcmp.eq.f32.partialorder %v3243, 8.507059e+37
      %v3245 = vand.u32 %v2848, 2147483648
      %v3246 = vor.u32 1.1754944e-38, %v3245
      %v3247 = vsel %vm3244, %v3246, %v3242
      %v3248 = vmul.f32 1.0, %v3247
      %v3249 = vrcp.pop %v2849
      %v3250 = vmul.f32 %v2849, %v3249
      %v3251 = vsub.f32 1.0, %v3250
      %v3252 = vmul.f32 %v3249, %v3251
      %v3253 = vadd.f32 %v3249, %v3252
      %vm3254 = vweird.f32 %v2849
      %vm3255 = vweird.f32 %v3249
      %vm3256 = vmor %vm3254, %vm3255
      %v3257 = vsel %vm3256, %v3249, %v3253
      %v3258 = vand.u32 2147483647, %v2849
      %vm3259 = vcmp.eq.f32.partialorder %v3258, 8.507059e+37
      %v3260 = vand.u32 %v2849, 2147483648
      %v3261 = vor.u32 1.1754944e-38, %v3260
      %v3262 = vsel %vm3259, %v3261, %v3257
      %v3263 = vmul.f32 1.0, %v3262
      %v3264 = vrcp.pop %v2850
      %v3265 = vmul.f32 %v2850, %v3264
      %v3266 = vsub.f32 1.0, %v3265
      %v3267 = vmul.f32 %v3264, %v3266
      %v3268 = vadd.f32 %v3264, %v3267
      %vm3269 = vweird.f32 %v2850
      %vm3270 = vweird.f32 %v3264
      %vm3271 = vmor %vm3269, %vm3270
      %v3272 = vsel %vm3271, %v3264, %v3268
      %v3273 = vand.u32 2147483647, %v2850
      %vm3274 = vcmp.eq.f32.partialorder %v3273, 8.507059e+37
      %v3275 = vand.u32 %v2850, 2147483648
      %v3276 = vor.u32 1.1754944e-38, %v3275
      %v3277 = vsel %vm3274, %v3276, %v3272
      %v3278 = vmul.f32 1.0, %v3277
      %v3279 = vrcp.pop %v2851
      %v3280 = vmul.f32 %v2851, %v3279
      %v3281 = vsub.f32 1.0, %v3280
      %v3282 = vmul.f32 %v3279, %v3281
      %v3283 = vadd.f32 %v3279, %v3282
      %vm3284 = vweird.f32 %v2851
      %vm3285 = vweird.f32 %v3279
      %vm3286 = vmor %vm3284, %vm3285
      %v3287 = vsel %vm3286, %v3279, %v3283
      %v3288 = vand.u32 2147483647, %v2851
      %vm3289 = vcmp.eq.f32.partialorder %v3288, 8.507059e+37
      %v3290 = vand.u32 %v2851, 2147483648
      %v3291 = vor.u32 1.1754944e-38, %v3290
      %v3292 = vsel %vm3289, %v3291, %v3287
      %v3293 = vmul.f32 1.0, %v3292
      %v3294 = vrcp.pop %v2852
      %v3295 = vmul.f32 %v2852, %v3294
      %v3296 = vsub.f32 1.0, %v3295
      %v3297 = vmul.f32 %v3294, %v3296
      %v3298 = vadd.f32 %v3294, %v3297
      %vm3299 = vweird.f32 %v2852
      %vm3300 = vweird.f32 %v3294
      %vm3301 = vmor %vm3299, %vm3300
      %v3302 = vsel %vm3301, %v3294, %v3298
      %v3303 = vand.u32 2147483647, %v2852
      %vm3304 = vcmp.eq.f32.partialorder %v3303, 8.507059e+37
      %v3305 = vand.u32 %v2852, 2147483648
      %v3306 = vor.u32 1.1754944e-38, %v3305
      %v3307 = vsel %vm3304, %v3306, %v3302
      %v3308 = vmul.f32 1.0, %v3307
      %v3309 = vrcp.pop %v2853
      %v3310 = vmul.f32 %v2853, %v3309
      %v3311 = vsub.f32 1.0, %v3310
      %v3312 = vmul.f32 %v3309, %v3311
      %v3313 = vadd.f32 %v3309, %v3312
      %vm3314 = vweird.f32 %v2853
      %vm3315 = vweird.f32 %v3309
      %vm3316 = vmor %vm3314, %vm3315
      %v3317 = vsel %vm3316, %v3309, %v3313
      %v3318 = vand.u32 2147483647, %v2853
      %vm3319 = vcmp.eq.f32.partialorder %v3318, 8.507059e+37
      %v3320 = vand.u32 %v2853, 2147483648
      %v3321 = vor.u32 1.1754944e-38, %v3320
      %v3322 = vsel %vm3319, %v3321, %v3317
      %v3323 = vmul.f32 1.0, %v3322
      %v3324 = vrcp.pop %v2854
      %v3325 = vmul.f32 %v2854, %v3324
      %v3326 = vsub.f32 1.0, %v3325
      %v3327 = vmul.f32 %v3324, %v3326
      %v3328 = vadd.f32 %v3324, %v3327
      %vm3329 = vweird.f32 %v2854
      %vm3330 = vweird.f32 %v3324
      %vm3331 = vmor %vm3329, %vm3330
      %v3332 = vsel %vm3331, %v3324, %v3328
      %v3333 = vand.u32 2147483647, %v2854
      %vm3334 = vcmp.eq.f32.partialorder %v3333, 8.507059e+37
      %v3335 = vand.u32 %v2854, 2147483648
      %v3336 = vor.u32 1.1754944e-38, %v3335
      %v3337 = vsel %vm3334, %v3336, %v3332
      %v3338 = vmul.f32 1.0, %v3337
      %v3339 = vrcp.pop %v2855
      %v3340 = vmul.f32 %v2855, %v3339
      %v3341 = vsub.f32 1.0, %v3340
      %v3342 = vmul.f32 %v3339, %v3341
      %v3343 = vadd.f32 %v3339, %v3342
      %vm3344 = vweird.f32 %v2855
      %vm3345 = vweird.f32 %v3339
      %vm3346 = vmor %vm3344, %vm3345
      %v3347 = vsel %vm3346, %v3339, %v3343
      %v3348 = vand.u32 2147483647, %v2855
      %vm3349 = vcmp.eq.f32.partialorder %v3348, 8.507059e+37
      %v3350 = vand.u32 %v2855, 2147483648
      %v3351 = vor.u32 1.1754944e-38, %v3350
      %v3352 = vsel %vm3349, %v3351, %v3347
      %v3353 = vmul.f32 1.0, %v3352
      %v3354 = vrcp.pop %v2856
      %v3355 = vmul.f32 %v2856, %v3354
      %v3356 = vsub.f32 1.0, %v3355
      %v3357 = vmul.f32 %v3354, %v3356
      %v3358 = vadd.f32 %v3354, %v3357
      %vm3359 = vweird.f32 %v2856
      %vm3360 = vweird.f32 %v3354
      %vm3361 = vmor %vm3359, %vm3360
      %v3362 = vsel %vm3361, %v3354, %v3358
      %v3363 = vand.u32 2147483647, %v2856
      %vm3364 = vcmp.eq.f32.partialorder %v3363, 8.507059e+37
      %v3365 = vand.u32 %v2856, 2147483648
      %v3366 = vor.u32 1.1754944e-38, %v3365
      %v3367 = vsel %vm3364, %v3366, %v3362
      %v3368 = vmul.f32 1.0, %v3367
      %v3369 = vrcp.pop %v2857
      %v3370 = vmul.f32 %v2857, %v3369
      %v3371 = vsub.f32 1.0, %v3370
      %v3372 = vmul.f32 %v3369, %v3371
      %v3373 = vadd.f32 %v3369, %v3372
      %vm3374 = vweird.f32 %v2857
      %vm3375 = vweird.f32 %v3369
      %vm3376 = vmor %vm3374, %vm3375
      %v3377 = vsel %vm3376, %v3369, %v3373
      %v3378 = vand.u32 2147483647, %v2857
      %vm3379 = vcmp.eq.f32.partialorder %v3378, 8.507059e+37
      %v3380 = vand.u32 %v2857, 2147483648
      %v3381 = vor.u32 1.1754944e-38, %v3380
      %v3382 = vsel %vm3379, %v3381, %v3377
      %v3383 = vmul.f32 1.0, %v3382
      %v3384 = vrcp.pop %v2858
      %v3385 = vmul.f32 %v2858, %v3384
      %v3386 = vsub.f32 1.0, %v3385
      %v3387 = vmul.f32 %v3384, %v3386
      %v3388 = vadd.f32 %v3384, %v3387
      %vm3389 = vweird.f32 %v2858
      %vm3390 = vweird.f32 %v3384
      %vm3391 = vmor %vm3389, %vm3390
      %v3392 = vsel %vm3391, %v3384, %v3388
      %v3393 = vand.u32 2147483647, %v2858
      %vm3394 = vcmp.eq.f32.partialorder %v3393, 8.507059e+37
      %v3395 = vand.u32 %v2858, 2147483648
      %v3396 = vor.u32 1.1754944e-38, %v3395
      %v3397 = vsel %vm3394, %v3396, %v3392
      %v3398 = vmul.f32 1.0, %v3397
      %v3399 = vrcp.pop %v2859
      %v3400 = vmul.f32 %v2859, %v3399
      %v3401 = vsub.f32 1.0, %v3400
      %v3402 = vmul.f32 %v3399, %v3401
      %v3403 = vadd.f32 %v3399, %v3402
      %vm3404 = vweird.f32 %v2859
      %vm3405 = vweird.f32 %v3399
      %vm3406 = vmor %vm3404, %vm3405
      %v3407 = vsel %vm3406, %v3399, %v3403
      %v3408 = vand.u32 2147483647, %v2859
      %vm3409 = vcmp.eq.f32.partialorder %v3408, 8.507059e+37
      %v3410 = vand.u32 %v2859, 2147483648
      %v3411 = vor.u32 1.1754944e-38, %v3410
      %v3412 = vsel %vm3409, %v3411, %v3407
      %v3413 = vmul.f32 1.0, %v3412
      %v3414 = vrcp.pop %v2860
      %v3415 = vmul.f32 %v2860, %v3414
      %v3416 = vsub.f32 1.0, %v3415
      %v3417 = vmul.f32 %v3414, %v3416
      %v3418 = vadd.f32 %v3414, %v3417
      %vm3419 = vweird.f32 %v2860
      %vm3420 = vweird.f32 %v3414
      %vm3421 = vmor %vm3419, %vm3420
      %v3422 = vsel %vm3421, %v3414, %v3418
      %v3423 = vand.u32 2147483647, %v2860
      %vm3424 = vcmp.eq.f32.partialorder %v3423, 8.507059e+37
      %v3425 = vand.u32 %v2860, 2147483648
      %v3426 = vor.u32 1.1754944e-38, %v3425
      %v3427 = vsel %vm3424, %v3426, %v3422
      %v3428 = vmul.f32 1.0, %v3427
      %v3429 = vrcp.pop %v2861
      %v3430 = vmul.f32 %v2861, %v3429
      %v3431 = vsub.f32 1.0, %v3430
      %v3432 = vmul.f32 %v3429, %v3431
      %v3433 = vadd.f32 %v3429, %v3432
      %vm3434 = vweird.f32 %v2861
      %vm3435 = vweird.f32 %v3429
      %vm3436 = vmor %vm3434, %vm3435
      %v3437 = vsel %vm3436, %v3429, %v3433
      %v3438 = vand.u32 2147483647, %v2861
      %vm3439 = vcmp.eq.f32.partialorder %v3438, 8.507059e+37
      %v3440 = vand.u32 %v2861, 2147483648
      %v3441 = vor.u32 1.1754944e-38, %v3440
      %v3442 = vsel %vm3439, %v3441, %v3437
      %v3443 = vmul.f32 1.0, %v3442
      %v3444 = vrcp.pop %v2862
      %v3445 = vmul.f32 %v2862, %v3444
      %v3446 = vsub.f32 1.0, %v3445
      %v3447 = vmul.f32 %v3444, %v3446
      %v3448 = vadd.f32 %v3444, %v3447
      %vm3449 = vweird.f32 %v2862
      %vm3450 = vweird.f32 %v3444
      %vm3451 = vmor %vm3449, %vm3450
      %v3452 = vsel %vm3451, %v3444, %v3448
      %v3453 = vand.u32 2147483647, %v2862
      %vm3454 = vcmp.eq.f32.partialorder %v3453, 8.507059e+37
      %v3455 = vand.u32 %v2862, 2147483648
      %v3456 = vor.u32 1.1754944e-38, %v3455
      %v3457 = vsel %vm3454, %v3456, %v3452
      %v3458 = vmul.f32 1.0, %v3457
      %v3459 = vrcp.pop %v2863
      %v3460 = vmul.f32 %v2863, %v3459
      %v3461 = vsub.f32 1.0, %v3460
      %v3462 = vmul.f32 %v3459, %v3461
      %v3463 = vadd.f32 %v3459, %v3462
      %vm3464 = vweird.f32 %v2863
      %vm3465 = vweird.f32 %v3459
      %vm3466 = vmor %vm3464, %vm3465
      %v3467 = vsel %vm3466, %v3459, %v3463
      %v3468 = vand.u32 2147483647, %v2863
      %vm3469 = vcmp.eq.f32.partialorder %v3468, 8.507059e+37
      %v3470 = vand.u32 %v2863, 2147483648
      %v3471 = vor.u32 1.1754944e-38, %v3470
      %v3472 = vsel %vm3469, %v3471, %v3467
      %v3473 = vmul.f32 1.0, %v3472
      %v3474 = vrcp.pop %v2864
      %v3475 = vmul.f32 %v2864, %v3474
      %v3476 = vsub.f32 1.0, %v3475
      %v3477 = vmul.f32 %v3474, %v3476
      %v3478 = vadd.f32 %v3474, %v3477
      %vm3479 = vweird.f32 %v2864
      %vm3480 = vweird.f32 %v3474
      %vm3481 = vmor %vm3479, %vm3480
      %v3482 = vsel %vm3481, %v3474, %v3478
      %v3483 = vand.u32 2147483647, %v2864
      %vm3484 = vcmp.eq.f32.partialorder %v3483, 8.507059e+37
      %v3485 = vand.u32 %v2864, 2147483648
      %v3486 = vor.u32 1.1754944e-38, %v3485
      %v3487 = vsel %vm3484, %v3486, %v3482
      %v3488 = vmul.f32 1.0, %v3487
      %v3489 = vrcp.pop %v2865
      %v3490 = vmul.f32 %v2865, %v3489
      %v3491 = vsub.f32 1.0, %v3490
      %v3492 = vmul.f32 %v3489, %v3491
      %v3493 = vadd.f32 %v3489, %v3492
      %vm3494 = vweird.f32 %v2865
      %vm3495 = vweird.f32 %v3489
      %vm3496 = vmor %vm3494, %vm3495
      %v3497 = vsel %vm3496, %v3489, %v3493
      %v3498 = vand.u32 2147483647, %v2865
      %vm3499 = vcmp.eq.f32.partialorder %v3498, 8.507059e+37
      %v3500 = vand.u32 %v2865, 2147483648
      %v3501 = vor.u32 1.1754944e-38, %v3500
      %v3502 = vsel %vm3499, %v3501, %v3497
      %v3503 = vmul.f32 1.0, %v3502
      %v3504 = vrcp.pop %v2866
      %v3505 = vmul.f32 %v2866, %v3504
      %v3506 = vsub.f32 1.0, %v3505
      %v3507 = vmul.f32 %v3504, %v3506
      %v3508 = vadd.f32 %v3504, %v3507
      %vm3509 = vweird.f32 %v2866
      %vm3510 = vweird.f32 %v3504
      %vm3511 = vmor %vm3509, %vm3510
      %v3512 = vsel %vm3511, %v3504, %v3508
      %v3513 = vand.u32 2147483647, %v2866
      %vm3514 = vcmp.eq.f32.partialorder %v3513, 8.507059e+37
      %v3515 = vand.u32 %v2866, 2147483648
      %v3516 = vor.u32 1.1754944e-38, %v3515
      %v3517 = vsel %vm3514, %v3516, %v3512
      %v3518 = vmul.f32 1.0, %v3517
      %v3519 = vrcp.pop %v2867
      %v3520 = vmul.f32 %v2867, %v3519
      %v3521 = vsub.f32 1.0, %v3520
      %v3522 = vmul.f32 %v3519, %v3521
      %v3523 = vadd.f32 %v3519, %v3522
      %vm3524 = vweird.f32 %v2867
      %vm3525 = vweird.f32 %v3519
      %vm3526 = vmor %vm3524, %vm3525
      %v3527 = vsel %vm3526, %v3519, %v3523
      %v3528 = vand.u32 2147483647, %v2867
      %vm3529 = vcmp.eq.f32.partialorder %v3528, 8.507059e+37
      %v3530 = vand.u32 %v2867, 2147483648
      %v3531 = vor.u32 1.1754944e-38, %v3530
      %v3532 = vsel %vm3529, %v3531, %v3527
      %v3533 = vmul.f32 1.0, %v3532
      %v3534 = vrcp.pop %v2868
      %v3535 = vmul.f32 %v2868, %v3534
      %v3536 = vsub.f32 1.0, %v3535
      %v3537 = vmul.f32 %v3534, %v3536
      %v3538 = vadd.f32 %v3534, %v3537
      %vm3539 = vweird.f32 %v2868
      %vm3540 = vweird.f32 %v3534
      %vm3541 = vmor %vm3539, %vm3540
      %v3542 = vsel %vm3541, %v3534, %v3538
      %v3543 = vand.u32 2147483647, %v2868
      %vm3544 = vcmp.eq.f32.partialorder %v3543, 8.507059e+37
      %v3545 = vand.u32 %v2868, 2147483648
      %v3546 = vor.u32 1.1754944e-38, %v3545
      %v3547 = vsel %vm3544, %v3546, %v3542
      %v3548 = vmul.f32 1.0, %v3547
      %v3549 = vrcp.pop %v2869
      %v3550 = vmul.f32 %v2869, %v3549
      %v3551 = vsub.f32 1.0, %v3550
      %v3552 = vmul.f32 %v3549, %v3551
      %v3553 = vadd.f32 %v3549, %v3552
      %vm3554 = vweird.f32 %v2869
      %vm3555 = vweird.f32 %v3549
      %vm3556 = vmor %vm3554, %vm3555
      %v3557 = vsel %vm3556, %v3549, %v3553
      %v3558 = vand.u32 2147483647, %v2869
      %vm3559 = vcmp.eq.f32.partialorder %v3558, 8.507059e+37
      %v3560 = vand.u32 %v2869, 2147483648
      %v3561 = vor.u32 1.1754944e-38, %v3560
      %v3562 = vsel %vm3559, %v3561, %v3557
      %v3563 = vmul.f32 1.0, %v3562
      %v3564 = vrcp.pop %v2870
      %v3565 = vmul.f32 %v2870, %v3564
      %v3566 = vsub.f32 1.0, %v3565
      %v3567 = vmul.f32 %v3564, %v3566
      %v3568 = vadd.f32 %v3564, %v3567
      %vm3569 = vweird.f32 %v2870
      %vm3570 = vweird.f32 %v3564
      %vm3571 = vmor %vm3569, %vm3570
      %v3572 = vsel %vm3571, %v3564, %v3568
      %v3573 = vand.u32 2147483647, %v2870
      %vm3574 = vcmp.eq.f32.partialorder %v3573, 8.507059e+37
      %v3575 = vand.u32 %v2870, 2147483648
      %v3576 = vor.u32 1.1754944e-38, %v3575
      %v3577 = vsel %vm3574, %v3576, %v3572
      %v3578 = vmul.f32 1.0, %v3577
      %v3579 = vrcp.pop %v2871
      %v3580 = vmul.f32 %v2871, %v3579
      %v3581 = vsub.f32 1.0, %v3580
      %v3582 = vmul.f32 %v3579, %v3581
      %v3583 = vadd.f32 %v3579, %v3582
      %vm3584 = vweird.f32 %v2871
      %vm3585 = vweird.f32 %v3579
      %vm3586 = vmor %vm3584, %vm3585
      %v3587 = vsel %vm3586, %v3579, %v3583
      %v3588 = vand.u32 2147483647, %v2871
      %vm3589 = vcmp.eq.f32.partialorder %v3588, 8.507059e+37
      %v3590 = vand.u32 %v2871, 2147483648
      %v3591 = vor.u32 1.1754944e-38, %v3590
      %v3592 = vsel %vm3589, %v3591, %v3587
      %v3593 = vmul.f32 1.0, %v3592
      %v3594 = vrcp.pop %v2872
      %v3595 = vmul.f32 %v2872, %v3594
      %v3596 = vsub.f32 1.0, %v3595
      %v3597 = vmul.f32 %v3594, %v3596
      %v3598 = vadd.f32 %v3594, %v3597
      %vm3599 = vweird.f32 %v2872
      %vm3600 = vweird.f32 %v3594
      %vm3601 = vmor %vm3599, %vm3600
      %v3602 = vsel %vm3601, %v3594, %v3598
      %v3603 = vand.u32 2147483647, %v2872
      %vm3604 = vcmp.eq.f32.partialorder %v3603, 8.507059e+37
      %v3605 = vand.u32 %v2872, 2147483648
      %v3606 = vor.u32 1.1754944e-38, %v3605
      %v3607 = vsel %vm3604, %v3606, %v3602
      %v3608 = vmul.f32 1.0, %v3607
      %v3609 = vrcp.pop %v2873
      %v3610 = vmul.f32 %v2873, %v3609
      %v3611 = vsub.f32 1.0, %v3610
      %v3612 = vmul.f32 %v3609, %v3611
      %v3613 = vadd.f32 %v3609, %v3612
      %vm3614 = vweird.f32 %v2873
      %vm3615 = vweird.f32 %v3609
      %vm3616 = vmor %vm3614, %vm3615
      %v3617 = vsel %vm3616, %v3609, %v3613
      %v3618 = vand.u32 2147483647, %v2873
      %vm3619 = vcmp.eq.f32.partialorder %v3618, 8.507059e+37
      %v3620 = vand.u32 %v2873, 2147483648
      %v3621 = vor.u32 1.1754944e-38, %v3620
      %v3622 = vsel %vm3619, %v3621, %v3617
      %v3623 = vmul.f32 1.0, %v3622
      %v3624 = vrcp.pop %v2874
      %v3625 = vmul.f32 %v2874, %v3624
      %v3626 = vsub.f32 1.0, %v3625
      %v3627 = vmul.f32 %v3624, %v3626
      %v3628 = vadd.f32 %v3624, %v3627
      %vm3629 = vweird.f32 %v2874
      %vm3630 = vweird.f32 %v3624
      %vm3631 = vmor %vm3629, %vm3630
      %v3632 = vsel %vm3631, %v3624, %v3628
      %v3633 = vand.u32 2147483647, %v2874
      %vm3634 = vcmp.eq.f32.partialorder %v3633, 8.507059e+37
      %v3635 = vand.u32 %v2874, 2147483648
      %v3636 = vor.u32 1.1754944e-38, %v3635
      %v3637 = vsel %vm3634, %v3636, %v3632
      %v3638 = vmul.f32 1.0, %v3637
      %v3639 = vrcp.pop %v2875
      %v3640 = vmul.f32 %v2875, %v3639
      %v3641 = vsub.f32 1.0, %v3640
      %v3642 = vmul.f32 %v3639, %v3641
      %v3643 = vadd.f32 %v3639, %v3642
      %vm3644 = vweird.f32 %v2875
      %vm3645 = vweird.f32 %v3639
      %vm3646 = vmor %vm3644, %vm3645
      %v3647 = vsel %vm3646, %v3639, %v3643
      %v3648 = vand.u32 2147483647, %v2875
      %vm3649 = vcmp.eq.f32.partialorder %v3648, 8.507059e+37
      %v3650 = vand.u32 %v2875, 2147483648
      %v3651 = vor.u32 1.1754944e-38, %v3650
      %v3652 = vsel %vm3649, %v3651, %v3647
      %v3653 = vmul.f32 1.0, %v3652
      %v3654 = vrcp.pop %v2876
      %v3655 = vmul.f32 %v2876, %v3654
      %v3656 = vsub.f32 1.0, %v3655
      %v3657 = vmul.f32 %v3654, %v3656
      %v3658 = vadd.f32 %v3654, %v3657
      %vm3659 = vweird.f32 %v2876
      %vm3660 = vweird.f32 %v3654
      %vm3661 = vmor %vm3659, %vm3660
      %v3662 = vsel %vm3661, %v3654, %v3658
      %v3663 = vand.u32 2147483647, %v2876
      %vm3664 = vcmp.eq.f32.partialorder %v3663, 8.507059e+37
      %v3665 = vand.u32 %v2876, 2147483648
      %v3666 = vor.u32 1.1754944e-38, %v3665
      %v3667 = vsel %vm3664, %v3666, %v3662
      %v3668 = vmul.f32 1.0, %v3667
      %v3669 = vrcp.pop %v2877
      %v3670 = vmul.f32 %v2877, %v3669
      %v3671 = vsub.f32 1.0, %v3670
      %v3672 = vmul.f32 %v3669, %v3671
      %v3673 = vadd.f32 %v3669, %v3672
      %vm3674 = vweird.f32 %v2877
      %vm3675 = vweird.f32 %v3669
      %vm3676 = vmor %vm3674, %vm3675
      %v3677 = vsel %vm3676, %v3669, %v3673
      %v3678 = vand.u32 2147483647, %v2877
      %vm3679 = vcmp.eq.f32.partialorder %v3678, 8.507059e+37
      %v3680 = vand.u32 %v2877, 2147483648
      %v3681 = vor.u32 1.1754944e-38, %v3680
      %v3682 = vsel %vm3679, %v3681, %v3677
      %v3683 = vmul.f32 1.0, %v3682
      %v3684 = vrcp.pop %v2878
      %v3685 = vmul.f32 %v2878, %v3684
      %v3686 = vsub.f32 1.0, %v3685
      %v3687 = vmul.f32 %v3684, %v3686
      %v3688 = vadd.f32 %v3684, %v3687
      %vm3689 = vweird.f32 %v2878
      %vm3690 = vweird.f32 %v3684
      %vm3691 = vmor %vm3689, %vm3690
      %v3692 = vsel %vm3691, %v3684, %v3688
      %v3693 = vand.u32 2147483647, %v2878
      %vm3694 = vcmp.eq.f32.partialorder %v3693, 8.507059e+37
      %v3695 = vand.u32 %v2878, 2147483648
      %v3696 = vor.u32 1.1754944e-38, %v3695
      %v3697 = vsel %vm3694, %v3696, %v3692
      %v3698 = vmul.f32 1.0, %v3697
      %v3699 = vrcp.pop %v2879
      %v3700 = vmul.f32 %v2879, %v3699
      %v3701 = vsub.f32 1.0, %v3700
      %v3702 = vmul.f32 %v3699, %v3701
      %v3703 = vadd.f32 %v3699, %v3702
      %vm3704 = vweird.f32 %v2879
      %vm3705 = vweird.f32 %v3699
      %vm3706 = vmor %vm3704, %vm3705
      %v3707 = vsel %vm3706, %v3699, %v3703
      %v3708 = vand.u32 2147483647, %v2879
      %vm3709 = vcmp.eq.f32.partialorder %v3708, 8.507059e+37
      %v3710 = vand.u32 %v2879, 2147483648
      %v3711 = vor.u32 1.1754944e-38, %v3710
      %v3712 = vsel %vm3709, %v3711, %v3707
      %v3713 = vmul.f32 1.0, %v3712
      %v3714 = vrcp.pop %v2880
      %v3715 = vmul.f32 %v2880, %v3714
      %v3716 = vsub.f32 1.0, %v3715
      %v3717 = vmul.f32 %v3714, %v3716
      %v3718 = vadd.f32 %v3714, %v3717
      %vm3719 = vweird.f32 %v2880
      %vm3720 = vweird.f32 %v3714
      %vm3721 = vmor %vm3719, %vm3720
      %v3722 = vsel %vm3721, %v3714, %v3718
      %v3723 = vand.u32 2147483647, %v2880
      %vm3724 = vcmp.eq.f32.partialorder %v3723, 8.507059e+37
      %v3725 = vand.u32 %v2880, 2147483648
      %v3726 = vor.u32 1.1754944e-38, %v3725
      %v3727 = vsel %vm3724, %v3726, %v3722
      %v3728 = vmul.f32 1.0, %v3727
      %v3729 = vrcp.pop %v2881
      %v3730 = vmul.f32 %v2881, %v3729
      %v3731 = vsub.f32 1.0, %v3730
      %v3732 = vmul.f32 %v3729, %v3731
      %v3733 = vadd.f32 %v3729, %v3732
      %vm3734 = vweird.f32 %v2881
      %vm3735 = vweird.f32 %v3729
      %vm3736 = vmor %vm3734, %vm3735
      %v3737 = vsel %vm3736, %v3729, %v3733
      %v3738 = vand.u32 2147483647, %v2881
      %vm3739 = vcmp.eq.f32.partialorder %v3738, 8.507059e+37
      %v3740 = vand.u32 %v2881, 2147483648
      %v3741 = vor.u32 1.1754944e-38, %v3740
      %v3742 = vsel %vm3739, %v3741, %v3737
      %v3743 = vmul.f32 1.0, %v3742
      %v3744 = vrcp.pop %v2882
      %v3745 = vmul.f32 %v2882, %v3744
      %v3746 = vsub.f32 1.0, %v3745
      %v3747 = vmul.f32 %v3744, %v3746
      %v3748 = vadd.f32 %v3744, %v3747
      %vm3749 = vweird.f32 %v2882
      %vm3750 = vweird.f32 %v3744
      %vm3751 = vmor %vm3749, %vm3750
      %v3752 = vsel %vm3751, %v3744, %v3748
      %v3753 = vand.u32 2147483647, %v2882
      %vm3754 = vcmp.eq.f32.partialorder %v3753, 8.507059e+37
      %v3755 = vand.u32 %v2882, 2147483648
      %v3756 = vor.u32 1.1754944e-38, %v3755
      %v3757 = vsel %vm3754, %v3756, %v3752
      %v3758 = vmul.f32 1.0, %v3757
      %v3759 = vrcp.pop %v2883
      %v3760 = vmul.f32 %v2883, %v3759
      %v3761 = vsub.f32 1.0, %v3760
      %v3762 = vmul.f32 %v3759, %v3761
      %v3763 = vadd.f32 %v3759, %v3762
      %vm3764 = vweird.f32 %v2883
      %vm3765 = vweird.f32 %v3759
      %vm3766 = vmor %vm3764, %vm3765
      %v3767 = vsel %vm3766, %v3759, %v3763
      %v3768 = vand.u32 2147483647, %v2883
      %vm3769 = vcmp.eq.f32.partialorder %v3768, 8.507059e+37
      %v3770 = vand.u32 %v2883, 2147483648
      %v3771 = vor.u32 1.1754944e-38, %v3770
      %v3772 = vsel %vm3769, %v3771, %v3767
      %v3773 = vmul.f32 1.0, %v3772
      %v3774 = vrcp.pop %v2884
      %v3775 = vmul.f32 %v2884, %v3774
      %v3776 = vsub.f32 1.0, %v3775
      %v3777 = vmul.f32 %v3774, %v3776
      %v3778 = vadd.f32 %v3774, %v3777
      %vm3779 = vweird.f32 %v2884
      %vm3780 = vweird.f32 %v3774
      %vm3781 = vmor %vm3779, %vm3780
      %v3782 = vsel %vm3781, %v3774, %v3778
      %v3783 = vand.u32 2147483647, %v2884
      %vm3784 = vcmp.eq.f32.partialorder %v3783, 8.507059e+37
      %v3785 = vand.u32 %v2884, 2147483648
      %v3786 = vor.u32 1.1754944e-38, %v3785
      %v3787 = vsel %vm3784, %v3786, %v3782
      %v3788 = vmul.f32 1.0, %v3787
      %v3789 = vrcp.pop %v2885
      %v3790 = vmul.f32 %v2885, %v3789
      %v3791 = vsub.f32 1.0, %v3790
      %v3792 = vmul.f32 %v3789, %v3791
      %v3793 = vadd.f32 %v3789, %v3792
      %vm3794 = vweird.f32 %v2885
      %vm3795 = vweird.f32 %v3789
      %vm3796 = vmor %vm3794, %vm3795
      %v3797 = vsel %vm3796, %v3789, %v3793
      %v3798 = vand.u32 2147483647, %v2885
      %vm3799 = vcmp.eq.f32.partialorder %v3798, 8.507059e+37
      %v3800 = vand.u32 %v2885, 2147483648
      %v3801 = vor.u32 1.1754944e-38, %v3800
      %v3802 = vsel %vm3799, %v3801, %v3797
      %v3803 = vmul.f32 1.0, %v3802
      %v3804 = vrcp.pop %v2886
      %v3805 = vmul.f32 %v2886, %v3804
      %v3806 = vsub.f32 1.0, %v3805
      %v3807 = vmul.f32 %v3804, %v3806
      %v3808 = vadd.f32 %v3804, %v3807
      %vm3809 = vweird.f32 %v2886
      %vm3810 = vweird.f32 %v3804
      %vm3811 = vmor %vm3809, %vm3810
      %v3812 = vsel %vm3811, %v3804, %v3808
      %v3813 = vand.u32 2147483647, %v2886
      %vm3814 = vcmp.eq.f32.partialorder %v3813, 8.507059e+37
      %v3815 = vand.u32 %v2886, 2147483648
      %v3816 = vor.u32 1.1754944e-38, %v3815
      %v3817 = vsel %vm3814, %v3816, %v3812
      %v3818 = vmul.f32 1.0, %v3817
      %v3819 = vrcp.pop %v2887
      %v3820 = vmul.f32 %v2887, %v3819
      %v3821 = vsub.f32 1.0, %v3820
      %v3822 = vmul.f32 %v3819, %v3821
      %v3823 = vadd.f32 %v3819, %v3822
      %vm3824 = vweird.f32 %v2887
      %vm3825 = vweird.f32 %v3819
      %vm3826 = vmor %vm3824, %vm3825
      %v3827 = vsel %vm3826, %v3819, %v3823
      %v3828 = vand.u32 2147483647, %v2887
      %vm3829 = vcmp.eq.f32.partialorder %v3828, 8.507059e+37
      %v3830 = vand.u32 %v2887, 2147483648
      %v3831 = vor.u32 1.1754944e-38, %v3830
      %v3832 = vsel %vm3829, %v3831, %v3827
      %v3833 = vmul.f32 1.0, %v3832
      %v3834 = vrcp.pop %v2888
      %v3835 = vmul.f32 %v2888, %v3834
      %v3836 = vsub.f32 1.0, %v3835
      %v3837 = vmul.f32 %v3834, %v3836
      %v3838 = vadd.f32 %v3834, %v3837
      %vm3839 = vweird.f32 %v2888
      %vm3840 = vweird.f32 %v3834
      %vm3841 = vmor %vm3839, %vm3840
      %v3842 = vsel %vm3841, %v3834, %v3838
      %v3843 = vand.u32 2147483647, %v2888
      %vm3844 = vcmp.eq.f32.partialorder %v3843, 8.507059e+37
      %v3845 = vand.u32 %v2888, 2147483648
      %v3846 = vor.u32 1.1754944e-38, %v3845
      %v3847 = vsel %vm3844, %v3846, %v3842
      %v3848 = vmul.f32 1.0, %v3847
      %v3849 = vtanh.pop %v2182
      %v3850 = vtanh.pop %v2183
      %v3851 = vtanh.pop %v2184
      %v3852 = vtanh.pop %v2185
      %v3853 = vtanh.pop %v2186
      %v3854 = vtanh.pop %v2187
      %v3855 = vtanh.pop %v2188
      %v3856 = vtanh.pop %v2189
      %v3857 = vtanh.pop %v2190
      %v3858 = vtanh.pop %v2191
      %v3859 = vtanh.pop %v2192
      %v3860 = vtanh.pop %v2193
      %v3861 = vtanh.pop %v2194
      %v3862 = vtanh.pop %v2195
      %v3863 = vtanh.pop %v2196
      %v3864 = vtanh.pop %v2197
      %v3865 = vtanh.pop %v2198
      %v3866 = vtanh.pop %v2199
      %v3867 = vtanh.pop %v2200
      %v3868 = vtanh.pop %v2201
      %v3869 = vtanh.pop %v2202
      %v3870 = vtanh.pop %v2203
      %v3871 = vtanh.pop %v2204
      %v3872 = vtanh.pop %v2205
      %v3873 = vtanh.pop %v2206
      %v3874 = vtanh.pop %v2207
      %v3875 = vtanh.pop %v2208
      %v3876 = vtanh.pop %v2209
      %v3877 = vtanh.pop %v2210
      %v3878 = vtanh.pop %v2211
      %v3879 = vtanh.pop %v2212
      %v3880 = vtanh.pop %v2213
      %v3881 = vtanh.pop %v2214
      %v3882 = vtanh.pop %v2215
      %v3883 = vtanh.pop %v2216
      %v3884 = vtanh.pop %v2217
      %v3885 = vtanh.pop %v2218
      %v3886 = vtanh.pop %v2219
      %v3887 = vtanh.pop %v2220
      %v3888 = vtanh.pop %v2221
      %v3889 = vtanh.pop %v2222
      %v3890 = vtanh.pop %v2223
      %v3891 = vtanh.pop %v2224
      %v3892 = vtanh.pop %v2225
      %v3893 = vtanh.pop %v2226
      %v3894 = vtanh.pop %v2227
      %v3895 = vtanh.pop %v2228
      %v3896 = vtanh.pop %v2229
      %v3897 = vtanh.pop %v2230
      %v3898 = vtanh.pop %v2231
      %v3899 = vtanh.pop %v2232
      %v3900 = vtanh.pop %v2233
      %v3901 = vtanh.pop %v2234
      %v3902 = vtanh.pop %v2235
      %v3903 = vtanh.pop %v2236
      %v3904 = vtanh.pop %v2237
      %v3905 = vtanh.pop %v2238
      %v3906 = vtanh.pop %v2239
      %v3907 = vtanh.pop %v2240
      %v3908 = vtanh.pop %v2241
      %v3909 = vtanh.pop %v2242
      %v3910 = vtanh.pop %v2243
      %v3911 = vtanh.pop %v2244
      %v3912 = vtanh.pop %v2245
      %3977 = vrot.lane.b32.xlu0 %v3849, 96
      %v3978 = vpop.permute.xlu0 %3977
      %3979 = vrot.lane.b32.xlu0 %v3850, 96
      %v3980 = vpop.permute.xlu0 %3979
      %3981 = vrot.lane.b32.xlu0 %v3851, 96
      %v3982 = vpop.permute.xlu0 %3981
      %3983 = vrot.lane.b32.xlu0 %v3852, 96
      %v3984 = vpop.permute.xlu0 %3983
      %3985 = vrot.lane.b32.xlu0 %v3853, 96
      %v3986 = vpop.permute.xlu0 %3985
      %3987 = vrot.lane.b32.xlu0 %v3854, 96
      %v3988 = vpop.permute.xlu0 %3987
      %3989 = vrot.lane.b32.xlu0 %v3855, 96
      %v3990 = vpop.permute.xlu0 %3989
      %3991 = vrot.lane.b32.xlu0 %v3856, 96
      %v3992 = vpop.permute.xlu0 %3991
      %3993 = vrot.lane.b32.xlu0 %v3857, 96
      %v3994 = vpop.permute.xlu0 %3993
      %3995 = vrot.lane.b32.xlu0 %v3858, 96
      %v3996 = vpop.permute.xlu0 %3995
      %3997 = vrot.lane.b32.xlu0 %v3859, 96
      %v3998 = vpop.permute.xlu0 %3997
      %3999 = vrot.lane.b32.xlu0 %v3860, 96
      %v4000 = vpop.permute.xlu0 %3999
      %4001 = vrot.lane.b32.xlu0 %v3861, 96
      %v4002 = vpop.permute.xlu0 %4001
      %4003 = vrot.lane.b32.xlu0 %v3862, 96
      %v4004 = vpop.permute.xlu0 %4003
      %4005 = vrot.lane.b32.xlu0 %v3863, 96
      %v4006 = vpop.permute.xlu0 %4005
      %4007 = vrot.lane.b32.xlu0 %v3864, 96
      %v4008 = vpop.permute.xlu0 %4007
      %4009 = vrot.lane.b32.xlu0 %v3865, 96
      %v4010 = vpop.permute.xlu0 %4009
      %4011 = vrot.lane.b32.xlu0 %v3866, 96
      %v4012 = vpop.permute.xlu0 %4011
      %4013 = vrot.lane.b32.xlu0 %v3867, 96
      %v4014 = vpop.permute.xlu0 %4013
      %4015 = vrot.lane.b32.xlu0 %v3868, 96
      %v4016 = vpop.permute.xlu0 %4015
      %4017 = vrot.lane.b32.xlu0 %v3869, 96
      %v4018 = vpop.permute.xlu0 %4017
      %4019 = vrot.lane.b32.xlu0 %v3870, 96
      %v4020 = vpop.permute.xlu0 %4019
      %4021 = vrot.lane.b32.xlu0 %v3871, 96
      %v4022 = vpop.permute.xlu0 %4021
      %4023 = vrot.lane.b32.xlu0 %v3872, 96
      %v4024 = vpop.permute.xlu0 %4023
      %4025 = vrot.lane.b32.xlu0 %v3873, 96
      %v4026 = vpop.permute.xlu0 %4025
      %4027 = vrot.lane.b32.xlu0 %v3874, 96
      %v4028 = vpop.permute.xlu0 %4027
      %4029 = vrot.lane.b32.xlu0 %v3875, 96
      %v4030 = vpop.permute.xlu0 %4029
      %4031 = vrot.lane.b32.xlu0 %v3876, 96
      %v4032 = vpop.permute.xlu0 %4031
      %4033 = vrot.lane.b32.xlu0 %v3877, 96
      %v4034 = vpop.permute.xlu0 %4033
      %4035 = vrot.lane.b32.xlu0 %v3878, 96
      %v4036 = vpop.permute.xlu0 %4035
      %4037 = vrot.lane.b32.xlu0 %v3879, 96
      %v4038 = vpop.permute.xlu0 %4037
      %4039 = vrot.lane.b32.xlu0 %v3880, 96
      %v4040 = vpop.permute.xlu0 %4039
      %4041 = vrot.lane.b32.xlu0 %v3881, 96
      %v4042 = vpop.permute.xlu0 %4041
      %4043 = vrot.lane.b32.xlu0 %v3882, 96
      %v4044 = vpop.permute.xlu0 %4043
      %4045 = vrot.lane.b32.xlu0 %v3883, 96
      %v4046 = vpop.permute.xlu0 %4045
      %4047 = vrot.lane.b32.xlu0 %v3884, 96
      %v4048 = vpop.permute.xlu0 %4047
      %4049 = vrot.lane.b32.xlu0 %v3885, 96
      %v4050 = vpop.permute.xlu0 %4049
      %4051 = vrot.lane.b32.xlu0 %v3886, 96
      %v4052 = vpop.permute.xlu0 %4051
      %4053 = vrot.lane.b32.xlu0 %v3887, 96
      %v4054 = vpop.permute.xlu0 %4053
      %4055 = vrot.lane.b32.xlu0 %v3888, 96
      %v4056 = vpop.permute.xlu0 %4055
      %4057 = vrot.lane.b32.xlu0 %v3889, 96
      %v4058 = vpop.permute.xlu0 %4057
      %4059 = vrot.lane.b32.xlu0 %v3890, 96
      %v4060 = vpop.permute.xlu0 %4059
      %4061 = vrot.lane.b32.xlu0 %v3891, 96
      %v4062 = vpop.permute.xlu0 %4061
      %4063 = vrot.lane.b32.xlu0 %v3892, 96
      %v4064 = vpop.permute.xlu0 %4063
      %4065 = vrot.lane.b32.xlu0 %v3893, 96
      %v4066 = vpop.permute.xlu0 %4065
      %4067 = vrot.lane.b32.xlu0 %v3894, 96
      %v4068 = vpop.permute.xlu0 %4067
      %4069 = vrot.lane.b32.xlu0 %v3895, 96
      %v4070 = vpop.permute.xlu0 %4069
      %4071 = vrot.lane.b32.xlu0 %v3896, 96
      %v4072 = vpop.permute.xlu0 %4071
      %4073 = vrot.lane.b32.xlu0 %v3897, 96
      %v4074 = vpop.permute.xlu0 %4073
      %4075 = vrot.lane.b32.xlu0 %v3898, 96
      %v4076 = vpop.permute.xlu0 %4075
      %4077 = vrot.lane.b32.xlu0 %v3899, 96
      %v4078 = vpop.permute.xlu0 %4077
      %4079 = vrot.lane.b32.xlu0 %v3900, 96
      %v4080 = vpop.permute.xlu0 %4079
      %4081 = vrot.lane.b32.xlu0 %v3901, 96
      %v4082 = vpop.permute.xlu0 %4081
      %4083 = vrot.lane.b32.xlu0 %v3902, 96
      %v4084 = vpop.permute.xlu0 %4083
      %4085 = vrot.lane.b32.xlu0 %v3903, 96
      %v4086 = vpop.permute.xlu0 %4085
      %4087 = vrot.lane.b32.xlu0 %v3904, 96
      %v4088 = vpop.permute.xlu0 %4087
      %4089 = vrot.lane.b32.xlu0 %v3905, 96
      %v4090 = vpop.permute.xlu0 %4089
      %4091 = vrot.lane.b32.xlu0 %v3906, 96
      %v4092 = vpop.permute.xlu0 %4091
      %4093 = vrot.lane.b32.xlu0 %v3907, 96
      %v4094 = vpop.permute.xlu0 %4093
      %4095 = vrot.lane.b32.xlu0 %v3908, 96
      %v4096 = vpop.permute.xlu0 %4095
      %4097 = vrot.lane.b32.xlu0 %v3909, 96
      %v4098 = vpop.permute.xlu0 %4097
      %4099 = vrot.lane.b32.xlu0 %v3910, 96
      %v4100 = vpop.permute.xlu0 %4099
      %4101 = vrot.lane.b32.xlu0 %v3911, 96
      %v4102 = vpop.permute.xlu0 %4101
      %4103 = vrot.lane.b32.xlu0 %v3912, 96
      %v4104 = vpop.permute.xlu0 %4103
      %v4169 = vmul.f32 %v2903, %v3978
      %v4170 = vmul.f32 %v2918, %v3980
      %v4171 = vmul.f32 %v2933, %v3982
      %v4172 = vmul.f32 %v2948, %v3984
      %v4173 = vmul.f32 %v2963, %v3986
      %v4174 = vmul.f32 %v2978, %v3988
      %v4175 = vmul.f32 %v2993, %v3990
      %v4176 = vmul.f32 %v3008, %v3992
      %v4177 = vmul.f32 %v3023, %v3994
      %v4178 = vmul.f32 %v3038, %v3996
      %v4179 = vmul.f32 %v3053, %v3998
      %v4180 = vmul.f32 %v3068, %v4000
      %v4181 = vmul.f32 %v3083, %v4002
      %v4182 = vmul.f32 %v3098, %v4004
      %v4183 = vmul.f32 %v3113, %v4006
      %v4184 = vmul.f32 %v3128, %v4008
      %v4185 = vmul.f32 %v3143, %v4010
      %v4186 = vmul.f32 %v3158, %v4012
      %v4187 = vmul.f32 %v3173, %v4014
      %v4188 = vmul.f32 %v3188, %v4016
      %v4189 = vmul.f32 %v3203, %v4018
      %v4190 = vmul.f32 %v3218, %v4020
      %v4191 = vmul.f32 %v3233, %v4022
      %v4192 = vmul.f32 %v3248, %v4024
      %v4193 = vmul.f32 %v3263, %v4026
      %v4194 = vmul.f32 %v3278, %v4028
      %v4195 = vmul.f32 %v3293, %v4030
      %v4196 = vmul.f32 %v3308, %v4032
      %v4197 = vmul.f32 %v3323, %v4034
      %v4198 = vmul.f32 %v3338, %v4036
      %v4199 = vmul.f32 %v3353, %v4038
      %v4200 = vmul.f32 %v3368, %v4040
      %v4201 = vmul.f32 %v3383, %v4042
      %v4202 = vmul.f32 %v3398, %v4044
      %v4203 = vmul.f32 %v3413, %v4046
      %v4204 = vmul.f32 %v3428, %v4048
      %v4205 = vmul.f32 %v3443, %v4050
      %v4206 = vmul.f32 %v3458, %v4052
      %v4207 = vmul.f32 %v3473, %v4054
      %v4208 = vmul.f32 %v3488, %v4056
      %v4209 = vmul.f32 %v3503, %v4058
      %v4210 = vmul.f32 %v3518, %v4060
      %v4211 = vmul.f32 %v3533, %v4062
      %v4212 = vmul.f32 %v3548, %v4064
      %v4213 = vmul.f32 %v3563, %v4066
      %v4214 = vmul.f32 %v3578, %v4068
      %v4215 = vmul.f32 %v3593, %v4070
      %v4216 = vmul.f32 %v3608, %v4072
      %v4217 = vmul.f32 %v3623, %v4074
      %v4218 = vmul.f32 %v3638, %v4076
      %v4219 = vmul.f32 %v3653, %v4078
      %v4220 = vmul.f32 %v3668, %v4080
      %v4221 = vmul.f32 %v3683, %v4082
      %v4222 = vmul.f32 %v3698, %v4084
      %v4223 = vmul.f32 %v3713, %v4086
      %v4224 = vmul.f32 %v3728, %v4088
      %v4225 = vmul.f32 %v3743, %v4090
      %v4226 = vmul.f32 %v3758, %v4092
      %v4227 = vmul.f32 %v3773, %v4094
      %v4228 = vmul.f32 %v3788, %v4096
      %v4229 = vmul.f32 %v3803, %v4098
      %v4230 = vmul.f32 %v3818, %v4100
      %v4231 = vmul.f32 %v3833, %v4102
      %v4232 = vmul.f32 %v3848, %v4104
      %4233 = vset.pattern.permute.xlu0 64
      %4234 = vperm.xlu0 %4233, %v645
      %v4235 = vpop.permute.xlu0 %4234
      %v4237 = vperm.slane %v4235, 0
      %4238 = vrot.lane.b32.xlu0 %v2247, 96
      %v4239 = vpop.permute.xlu0 %4238
      %4304 = vrot.lane.b32.xlu0 %v4169, 32
      %v4305 = vpop.permute.xlu0 %4304
      %4306 = vrot.lane.b32.xlu0 %v4170, 32
      %v4307 = vpop.permute.xlu0 %4306
      %4308 = vrot.lane.b32.xlu0 %v4171, 32
      %v4309 = vpop.permute.xlu0 %4308
      %4310 = vrot.lane.b32.xlu0 %v4172, 32
      %v4311 = vpop.permute.xlu0 %4310
      %4312 = vrot.lane.b32.xlu0 %v4173, 32
      %v4313 = vpop.permute.xlu0 %4312
      %4314 = vrot.lane.b32.xlu0 %v4174, 32
      %v4315 = vpop.permute.xlu0 %4314
      %4316 = vrot.lane.b32.xlu0 %v4175, 32
      %v4317 = vpop.permute.xlu0 %4316
      %4318 = vrot.lane.b32.xlu0 %v4176, 32
      %v4319 = vpop.permute.xlu0 %4318
      %4320 = vrot.lane.b32.xlu0 %v4177, 32
      %v4321 = vpop.permute.xlu0 %4320
      %4322 = vrot.lane.b32.xlu0 %v4178, 32
      %v4323 = vpop.permute.xlu0 %4322
      %4324 = vrot.lane.b32.xlu0 %v4179, 32
      %v4325 = vpop.permute.xlu0 %4324
      %4326 = vrot.lane.b32.xlu0 %v4180, 32
      %v4327 = vpop.permute.xlu0 %4326
      %4328 = vrot.lane.b32.xlu0 %v4181, 32
      %v4329 = vpop.permute.xlu0 %4328
      %4330 = vrot.lane.b32.xlu0 %v4182, 32
      %v4331 = vpop.permute.xlu0 %4330
      %4332 = vrot.lane.b32.xlu0 %v4183, 32
      %v4333 = vpop.permute.xlu0 %4332
      %4334 = vrot.lane.b32.xlu0 %v4184, 32
      %v4335 = vpop.permute.xlu0 %4334
      %4336 = vrot.lane.b32.xlu0 %v4185, 32
      %v4337 = vpop.permute.xlu0 %4336
      %4338 = vrot.lane.b32.xlu0 %v4186, 32
      %v4339 = vpop.permute.xlu0 %4338
      %4340 = vrot.lane.b32.xlu0 %v4187, 32
      %v4341 = vpop.permute.xlu0 %4340
      %4342 = vrot.lane.b32.xlu0 %v4188, 32
      %v4343 = vpop.permute.xlu0 %4342
      %4344 = vrot.lane.b32.xlu0 %v4189, 32
      %v4345 = vpop.permute.xlu0 %4344
      %4346 = vrot.lane.b32.xlu0 %v4190, 32
      %v4347 = vpop.permute.xlu0 %4346
      %4348 = vrot.lane.b32.xlu0 %v4191, 32
      %v4349 = vpop.permute.xlu0 %4348
      %4350 = vrot.lane.b32.xlu0 %v4192, 32
      %v4351 = vpop.permute.xlu0 %4350
      %4352 = vrot.lane.b32.xlu0 %v4193, 32
      %v4353 = vpop.permute.xlu0 %4352
      %4354 = vrot.lane.b32.xlu0 %v4194, 32
      %v4355 = vpop.permute.xlu0 %4354
      %4356 = vrot.lane.b32.xlu0 %v4195, 32
      %v4357 = vpop.permute.xlu0 %4356
      %4358 = vrot.lane.b32.xlu0 %v4196, 32
      %v4359 = vpop.permute.xlu0 %4358
      %4360 = vrot.lane.b32.xlu0 %v4197, 32
      %v4361 = vpop.permute.xlu0 %4360
      %4362 = vrot.lane.b32.xlu0 %v4198, 32
      %v4363 = vpop.permute.xlu0 %4362
      %4364 = vrot.lane.b32.xlu0 %v4199, 32
      %v4365 = vpop.permute.xlu0 %4364
      %4366 = vrot.lane.b32.xlu0 %v4200, 32
      %v4367 = vpop.permute.xlu0 %4366
      %4368 = vrot.lane.b32.xlu0 %v4201, 32
      %v4369 = vpop.permute.xlu0 %4368
      %4370 = vrot.lane.b32.xlu0 %v4202, 32
      %v4371 = vpop.permute.xlu0 %4370
      %4372 = vrot.lane.b32.xlu0 %v4203, 32
      %v4373 = vpop.permute.xlu0 %4372
      %4374 = vrot.lane.b32.xlu0 %v4204, 32
      %v4375 = vpop.permute.xlu0 %4374
      %4376 = vrot.lane.b32.xlu0 %v4205, 32
      %v4377 = vpop.permute.xlu0 %4376
      %4378 = vrot.lane.b32.xlu0 %v4206, 32
      %v4379 = vpop.permute.xlu0 %4378
      %4380 = vrot.lane.b32.xlu0 %v4207, 32
      %v4381 = vpop.permute.xlu0 %4380
      %4382 = vrot.lane.b32.xlu0 %v4208, 32
      %v4383 = vpop.permute.xlu0 %4382
      %4384 = vrot.lane.b32.xlu0 %v4209, 32
      %v4385 = vpop.permute.xlu0 %4384
      %4386 = vrot.lane.b32.xlu0 %v4210, 32
      %v4387 = vpop.permute.xlu0 %4386
      %4388 = vrot.lane.b32.xlu0 %v4211, 32
      %v4389 = vpop.permute.xlu0 %4388
      %4390 = vrot.lane.b32.xlu0 %v4212, 32
      %v4391 = vpop.permute.xlu0 %4390
      %4392 = vrot.lane.b32.xlu0 %v4213, 32
      %v4393 = vpop.permute.xlu0 %4392
      %4394 = vrot.lane.b32.xlu0 %v4214, 32
      %v4395 = vpop.permute.xlu0 %4394
      %4396 = vrot.lane.b32.xlu0 %v4215, 32
      %v4397 = vpop.permute.xlu0 %4396
      %4398 = vrot.lane.b32.xlu0 %v4216, 32
      %v4399 = vpop.permute.xlu0 %4398
      %4400 = vrot.lane.b32.xlu0 %v4217, 32
      %v4401 = vpop.permute.xlu0 %4400
      %4402 = vrot.lane.b32.xlu0 %v4218, 32
      %v4403 = vpop.permute.xlu0 %4402
      %4404 = vrot.lane.b32.xlu0 %v4219, 32
      %v4405 = vpop.permute.xlu0 %4404
      %4406 = vrot.lane.b32.xlu0 %v4220, 32
      %v4407 = vpop.permute.xlu0 %4406
      %4408 = vrot.lane.b32.xlu0 %v4221, 32
      %v4409 = vpop.permute.xlu0 %4408
      %4410 = vrot.lane.b32.xlu0 %v4222, 32
      %v4411 = vpop.permute.xlu0 %4410
      %4412 = vrot.lane.b32.xlu0 %v4223, 32
      %v4413 = vpop.permute.xlu0 %4412
      %4414 = vrot.lane.b32.xlu0 %v4224, 32
      %v4415 = vpop.permute.xlu0 %4414
      %4416 = vrot.lane.b32.xlu0 %v4225, 32
      %v4417 = vpop.permute.xlu0 %4416
      %4418 = vrot.lane.b32.xlu0 %v4226, 32
      %v4419 = vpop.permute.xlu0 %4418
      %4420 = vrot.lane.b32.xlu0 %v4227, 32
      %v4421 = vpop.permute.xlu0 %4420
      %4422 = vrot.lane.b32.xlu0 %v4228, 32
      %v4423 = vpop.permute.xlu0 %4422
      %4424 = vrot.lane.b32.xlu0 %v4229, 32
      %v4425 = vpop.permute.xlu0 %4424
      %4426 = vrot.lane.b32.xlu0 %v4230, 32
      %v4427 = vpop.permute.xlu0 %4426
      %4428 = vrot.lane.b32.xlu0 %v4231, 32
      %v4429 = vpop.permute.xlu0 %4428
      %4430 = vrot.lane.b32.xlu0 %v4232, 32
      %v4431 = vpop.permute.xlu0 %4430
      %vm4432 = vcmask 261120
      %v4433 = vsel %vm4432, %v4239, 0
      %v4435 = vsel %vm4432, %v4305, 0
      %v4437 = vsel %vm4432, %v4307, 0
      %v4439 = vsel %vm4432, %v4309, 0
      %v4441 = vsel %vm4432, %v4311, 0
      %v4443 = vsel %vm4432, %v4313, 0
      %v4445 = vsel %vm4432, %v4315, 0
      %v4447 = vsel %vm4432, %v4317, 0
      %v4449 = vsel %vm4432, %v4319, 0
      %v4451 = vsel %vm4432, %v4321, 0
      %v4453 = vsel %vm4432, %v4323, 0
      %v4455 = vsel %vm4432, %v4325, 0
      %v4457 = vsel %vm4432, %v4327, 0
      %v4459 = vsel %vm4432, %v4329, 0
      %v4461 = vsel %vm4432, %v4331, 0
      %v4463 = vsel %vm4432, %v4333, 0
      %v4465 = vsel %vm4432, %v4335, 0
      %v4467 = vsel %vm4432, %v4337, 0
      %v4469 = vsel %vm4432, %v4339, 0
      %v4471 = vsel %vm4432, %v4341, 0
      %v4473 = vsel %vm4432, %v4343, 0
      %v4475 = vsel %vm4432, %v4345, 0
      %v4477 = vsel %vm4432, %v4347, 0
      %v4479 = vsel %vm4432, %v4349, 0
      %v4481 = vsel %vm4432, %v4351, 0
      %v4483 = vsel %vm4432, %v4353, 0
      %v4485 = vsel %vm4432, %v4355, 0
      %v4487 = vsel %vm4432, %v4357, 0
      %v4489 = vsel %vm4432, %v4359, 0
      %v4491 = vsel %vm4432, %v4361, 0
      %v4493 = vsel %vm4432, %v4363, 0
      %v4495 = vsel %vm4432, %v4365, 0
      %v4497 = vsel %vm4432, %v4367, 0
      %v4499 = vsel %vm4432, %v4369, 0
      %v4501 = vsel %vm4432, %v4371, 0
      %v4503 = vsel %vm4432, %v4373, 0
      %v4505 = vsel %vm4432, %v4375, 0
      %v4507 = vsel %vm4432, %v4377, 0
      %v4509 = vsel %vm4432, %v4379, 0
      %v4511 = vsel %vm4432, %v4381, 0
      %v4513 = vsel %vm4432, %v4383, 0
      %v4515 = vsel %vm4432, %v4385, 0
      %v4517 = vsel %vm4432, %v4387, 0
      %v4519 = vsel %vm4432, %v4389, 0
      %v4521 = vsel %vm4432, %v4391, 0
      %v4523 = vsel %vm4432, %v4393, 0
      %v4525 = vsel %vm4432, %v4395, 0
      %v4527 = vsel %vm4432, %v4397, 0
      %v4529 = vsel %vm4432, %v4399, 0
      %v4531 = vsel %vm4432, %v4401, 0
      %v4533 = vsel %vm4432, %v4403, 0
      %v4535 = vsel %vm4432, %v4405, 0
      %v4537 = vsel %vm4432, %v4407, 0
      %v4539 = vsel %vm4432, %v4409, 0
      %v4541 = vsel %vm4432, %v4411, 0
      %v4543 = vsel %vm4432, %v4413, 0
      %v4545 = vsel %vm4432, %v4415, 0
      %v4547 = vsel %vm4432, %v4417, 0
      %v4549 = vsel %vm4432, %v4419, 0
      %v4551 = vsel %vm4432, %v4421, 0
      %v4553 = vsel %vm4432, %v4423, 0
      %v4555 = vsel %vm4432, %v4425, 0
      %v4557 = vsel %vm4432, %v4427, 0
      %v4559 = vsel %vm4432, %v4429, 0
      %v4561 = vsel %vm4432, %v4431, 0
      %4563 = vmatpush.xpose.msra.mxu0 %v4465
      %4564 = vmatpush.xpose.msra.mxu0 %v4463
      %4565 = vmatpush.xpose.msra.mxu0 %v4461
      %4566 = vmatpush.xpose.msra.mxu0 %v4459
      %4567 = vmatpush.xpose.msra.mxu0 %v4457
      %4568 = vmatpush.xpose.msra.mxu0 %v4455
      %4569 = vmatpush.xpose.msra.mxu0 %v4453
      %4570 = vmatpush.xpose.msra.mxu0 %v4451
      %4571 = vmatpush.xpose.msra.mxu0 %v4449
      %4572 = vmatpush.xpose.msra.mxu0 %v4447
      %4573 = vmatpush.xpose.msra.mxu0 %v4445
      %4574 = vmatpush.xpose.msra.mxu0 %v4443
      %4575 = vmatpush.xpose.msra.mxu0 %v4441
      %4576 = vmatpush.xpose.msra.mxu0 %v4439
      %4577 = vmatpush.xpose.msra.mxu0 %v4437
      %4578 = vmatpush.xpose.msra.mxu0 %v4435
      %4579 = vmatmul.f32.gmra.mxu0 %v4433
      %v4580 = vpop.f32.mrf.mxu0
      %v4581 = vadd.f32 %v4237, %v4580
      %4582 = vdwg.mxu0
      %4583 = vmatpush.xpose.msra.mxu0 %v4497
      %4584 = vmatpush.xpose.msra.mxu0 %v4495
      %4585 = vmatpush.xpose.msra.mxu0 %v4493
      %4586 = vmatpush.xpose.msra.mxu0 %v4491
      %4587 = vmatpush.xpose.msra.mxu0 %v4489
      %4588 = vmatpush.xpose.msra.mxu0 %v4487
      %4589 = vmatpush.xpose.msra.mxu0 %v4485
      %4590 = vmatpush.xpose.msra.mxu0 %v4483
      %4591 = vmatpush.xpose.msra.mxu0 %v4481
      %4592 = vmatpush.xpose.msra.mxu0 %v4479
      %4593 = vmatpush.xpose.msra.mxu0 %v4477
      %4594 = vmatpush.xpose.msra.mxu0 %v4475
      %4595 = vmatpush.xpose.msra.mxu0 %v4473
      %4596 = vmatpush.xpose.msra.mxu0 %v4471
      %4597 = vmatpush.xpose.msra.mxu0 %v4469
      %4598 = vmatpush.xpose.msra.mxu0 %v4467
      %4599 = vmatmul.f32.gmra.mxu0 %v4433
      %v4600 = vpop.f32.mrf.mxu0
      %v4601 = vadd.f32 %v4237, %v4600
      %4602 = vdwg.mxu0
      %4603 = vmatpush.xpose.msra.mxu0 %v4529
      %4604 = vmatpush.xpose.msra.mxu0 %v4527
      %4605 = vmatpush.xpose.msra.mxu0 %v4525
      %4606 = vmatpush.xpose.msra.mxu0 %v4523
      %4607 = vmatpush.xpose.msra.mxu0 %v4521
      %4608 = vmatpush.xpose.msra.mxu0 %v4519
      %4609 = vmatpush.xpose.msra.mxu0 %v4517
      %4610 = vmatpush.xpose.msra.mxu0 %v4515
      %4611 = vmatpush.xpose.msra.mxu0 %v4513
      %4612 = vmatpush.xpose.msra.mxu0 %v4511
      %4613 = vmatpush.xpose.msra.mxu0 %v4509
      %4614 = vmatpush.xpose.msra.mxu0 %v4507
      %4615 = vmatpush.xpose.msra.mxu0 %v4505
      %4616 = vmatpush.xpose.msra.mxu0 %v4503
      %4617 = vmatpush.xpose.msra.mxu0 %v4501
      %4618 = vmatpush.xpose.msra.mxu0 %v4499
      %4619 = vmatmul.f32.gmra.mxu0 %v4433
      %v4620 = vpop.f32.mrf.mxu0
      %v4621 = vadd.f32 %v4237, %v4620
      %4622 = vdwg.mxu0
      %4623 = vmatpush.xpose.msra.mxu0 %v4561
      %4624 = vmatpush.xpose.msra.mxu0 %v4559
      %4625 = vmatpush.xpose.msra.mxu0 %v4557
      %4626 = vmatpush.xpose.msra.mxu0 %v4555
      %4627 = vmatpush.xpose.msra.mxu0 %v4553
      %4628 = vmatpush.xpose.msra.mxu0 %v4551
      %4629 = vmatpush.xpose.msra.mxu0 %v4549
      %4630 = vmatpush.xpose.msra.mxu0 %v4547
      %4631 = vmatpush.xpose.msra.mxu0 %v4545
      %4632 = vmatpush.xpose.msra.mxu0 %v4543
      %4633 = vmatpush.xpose.msra.mxu0 %v4541
      %4634 = vmatpush.xpose.msra.mxu0 %v4539
      %4635 = vmatpush.xpose.msra.mxu0 %v4537
      %4636 = vmatpush.xpose.msra.mxu0 %v4535
      %4637 = vmatpush.xpose.msra.mxu0 %v4533
      %4638 = vmatpush.xpose.msra.mxu0 %v4531
      %4639 = vmatmul.f32.gmra.mxu0 %v4433
      %v4640 = vpop.f32.mrf.mxu0
      %v4641 = vadd.f32 %v4237, %v4640
      %4642 = vdwg.mxu0
      %v4647 = vrot.slane %v4601, 7
      %v4648 = vrot.slane %v4621, 6
      %v4649 = vrot.slane %v4641, 5
      %v4650 = vsel %vm432, %v4581, %v4647
      %vm4651 = vcmask 1042434
      %v4652 = vsel %vm4651, %v4648, %v4649
      %vm4653 = vcmask 1041408
      %v4654 = vsel %vm4653, %v4650, %v4652
      %v4656 = vlaneseq
      %vm4657 = vcmp.ge.s32.totalorder %v4656, 0
      %vm4658 = vcmp.lt.s32.totalorder %v4656, 512
      %vm4659 = vmand %vm4657, %vm4658
      %4660 = vst.msk [vmem:[%s170] sm:$0xf] %vm4659, %v4654
      %s4661 = smul.u32 4, %s14
      %p4662 = scmp.lt.s32.totalorder %s4661, 15
      %s4663 = scalar_select %p4662, %s4661, 15
      %s4664 = scalar_lea.vmem %s3, %s4663
      // Predicated region
      $region33: #{our_lstm_forward_batched.1} parent=31 // pred_check
        %p4665 = pneg %p100
      $region34: #{our_lstm_forward_batched.1} parent=31 // pred_check_branch
        %4667 = sbr.rel (%p4665) target = $region36
      $region35: #{our_lstm_forward_batched.1} parent=31 // pred_region
        %s4668 = smul.u32 4, %s14
      $region36: #{our_lstm_forward_batched.1} parent=31 // pred_fallthru
        _
    $region32: #{our_lstm_forward_batched.1} parent=5 // pred_fallthru
      _
    %p4669 = scmp.le.s32.totalorder 2, %s9
    // Predicated region
    $region37: #{our_lstm_forward_batched.1} parent=5 // pred_check
      %p4670 = pneg %p4669
    $region38: #{our_lstm_forward_batched.1} parent=5 // pred_check_branch
      %4672 = sbr.rel (%p4670) target = $region40
    $region39: #{our_lstm_forward_batched.1} parent=5 // pred_region
      %s4673 = ssub.s32 %s9, 2
      // Predicated region
      $region41: #{our_lstm_forward_batched.1} parent=39 // pred_check
        %p4674 = pneg %p106
      $region42: #{our_lstm_forward_batched.1} parent=39 // pred_check_branch
        %4676 = sbr.rel (%p4674) target = $region44
      $region43: #{our_lstm_forward_batched.1} parent=39 // pred_region
        %s4677 = smul.u32 4, %s15
        %p4678 = scmp.lt.s32.totalorder %s4677, 15
        %s4679 = scalar_select %p4678, %s4677, 15
        %s4680 = scalar_lea.vmem %s3, %s4679
      $region44: #{our_lstm_forward_batched.1} parent=39 // pred_fallthru
        _
    $region40: #{our_lstm_forward_batched.1} parent=5 // pred_fallthru
      _
  $region6: #{our_lstm_forward_batched.1} parent=0 // loop_footer
    %s13 = sadd.s32 1, %s9
  $region7: #{our_lstm_forward_batched.1} parent=0 // loop_footer_branch
    %8 = sbr.rel target = $region3
  $region8: #{our_lstm_forward_batched.1} parent=0 // loop_exit
    _

</llo_original>
